<compile_context>
chip_gen: v7x
topology: tpu7x:2x2x1
jax: 0.10.0
libtpu: 0.0.40
codegen_flags: <defaults>
</compile_context>

<pallas_src>
import functools

import jax
import jax.numpy as jnp
from jax import lax
from jax.experimental import pallas as pl
from jax.experimental.pallas import tpu as pltpu

BN_EPS = 1e-5
LANE = 128
_MiB = 1024 * 1024


def _round_up(x, m):
    return (x + m - 1) // m * m


def _detect_vmem_capacity_bytes():
    try:
        cap = int(pltpu.get_tpu_info().vmem_capacity_bytes)
        if cap > 0:
            return cap
    except Exception:
        pass
    return 64 * _MiB          # conservative (v7x-sized) fallback


_TPU_VMEM_CAP = _detect_vmem_capacity_bytes()
# Scoped-VMEM limit: generous on 128-MiB chips (v5e/v6e), tighter on 64-MiB v7x.
_VMEM_LIMIT_BYTES = max(32 * _MiB, min(_TPU_VMEM_CAP - 24 * _MiB, 100 * _MiB))
# Target rows (K * tile_g) processed per grid step.
_DEFAULT_TILE_M = 16384 if _TPU_VMEM_CAP >= 100 * _MiB else 8192


# ---------------------------------------------------------------------------
# Pallas kernel: per-layer BN-statistics pass (last pass also max/min pools)
# ---------------------------------------------------------------------------
def _make_stats_kernel(layer_idx, k_group, tile_g, c0p, c_pad, g_true,
                       tiles_per_split, need_mask, is_last):
    """Recompute the bf16 MLP chain up to layer `layer_idx` from the compact
    grouped features and accumulate that layer's pre-BN per-channel sum /
    sum-of-squares.  The last pass additionally writes per-group max/min over
    the K (neighborhood) axis of the pre-BN activation."""

    def kernel(x_ref, w0_ref, w_ref, ss_ref, stats_ref, *rest):
        m = pl.program_id(1)

        @pl.when(m == 0)
        def _init():
            stats_ref[...] = jnp.zeros(stats_ref.shape, stats_ref.dtype)

        rows = k_group * tile_g
        x = x_ref[...].reshape(rows, c0p)                        # bf16 [rows, c0p]
        a = jnp.dot(x, w0_ref[...], preferred_element_type=jnp.float32)
        for l in range(layer_idx):                               # folded BN + ReLU
            ssl = ss_ref[l]                                      # [2, c_pad] f32
            a = jnp.maximum(a * ssl[0:1, :] + ssl[1:2, :], 0.0).astype(jnp.bfloat16)
            a = jnp.dot(a, w_ref[l + 1], preferred_element_type=jnp.float32)
        # a: f32 [rows, c_pad] pre-BN activation of layer `layer_idx`

        a3 = a.reshape(k_group, tile_g, c_pad)
        s_g = jnp.sum(a3, axis=0)                                # [tile_g, c_pad]
        q_g = jnp.sum(a3 * a3, axis=0)
        if need_mask:  # zero padded groups so they do not pollute the statistics
            g0 = (pl.program_id(0) * tiles_per_split + m) * tile_g
            gid = g0 + lax.broadcasted_iota(jnp.int32, (tile_g, c_pad), 0)
            valid = gid < g_true
            s_g = jnp.where(valid, s_g, 0.0)
            q_g = jnp.where(valid, q_g, 0.0)
        # full-sublane (8, c_pad) accumulation -> no partial-sublane RMW.
        stats_ref[0] += jnp.sum(s_g.reshape(tile_g // 8, 8, c_pad), axis=0)
        stats_ref[1] += jnp.sum(q_g.reshape(tile_g // 8, 8, c_pad), axis=0)

        if is_last:
            pooled_ref = rest[0]                                 # (2, tile_g, c_pad)
            pooled_ref[0] = jnp.max(a3, axis=0)
            pooled_ref[1] = jnp.min(a3, axis=0)

    return kernel


# ---------------------------------------------------------------------------
# Parameter packing (lane-dense padded, bf16 weights, f32 gamma/beta)
# ---------------------------------------------------------------------------
def _pack_params(weights, gammas, betas, c0p, c_pad):
    """Conv biases are intentionally omitted: training-mode BN subtracts the batch
    mean of (xW + b), so the bias cancels exactly."""
    num_layers = len(weights)
    cin0, cout0 = weights[0].shape
    w0 = jnp.zeros((c0p, c_pad), jnp.float32).at[:cin0, :cout0].set(weights[0])
    w_stack = jnp.zeros((num_layers, c_pad, c_pad), jnp.float32)
    for j in range(1, num_layers):
        cin, cout = weights[j].shape
        w_stack = w_stack.at[j, :cin, :cout].set(weights[j])
    gb = jnp.zeros((num_layers, 2, c_pad), jnp.float32)
    for j, (g, bta) in enumerate(zip(gammas, betas)):
        cout = g.shape[0]
        gb = gb.at[j, 0, :cout].set(g)
        gb = gb.at[j, 1, :cout].set(bta)
    return w0.astype(jnp.bfloat16), w_stack.astype(jnp.bfloat16), gb


# ---------------------------------------------------------------------------
# MLP + pooling wrapper
# ---------------------------------------------------------------------------
def msg_mlp_pooled(x_kgc, weights, gammas, betas, *, tile_m_target=None):
    """Shared MLP (conv1x1 + training-mode BN + ReLU) then max over K.

    x_kgc: [K, G, C0] grouped local features (any float dtype, compact channels).
    Returns [G, C_last] (f32).
    """
    k_group, g_true, c0 = x_kgc.shape
    num_layers = len(weights)
    c_last = weights[-1].shape[1]
    c0p = _round_up(c0, 16)                                # compact bf16 input width
    c_pad = _round_up(max(w.shape[1] for w in weights), LANE)

    if tile_m_target is None:
        tile_m_target = _DEFAULT_TILE_M

    # tile sizing: tile_g groups (multiple of 16 -> clean bf16 sublane merges).
    tile_g = max(16, (tile_m_target // max(k_group, 1)) // 16 * 16)
    tile_g = min(tile_g, _round_up(g_true, 16))
    num_tiles = pl.cdiv(g_true, tile_g)
    n_splits = 2 if num_tiles >= 2 else 1                  # megacore split (v7x)
    tiles_per_split = pl.cdiv(num_tiles, n_splits)
    num_tiles = n_splits * tiles_per_split
    g_pad = num_tiles * tile_g
    need_mask = g_pad != g_true
    m_true = g_true * k_group                              # rows in the BN batch

    x = x_kgc.astype(jnp.bfloat16)                         # cast BEFORE padding
    x = jnp.pad(x, ((0, 0), (0, g_pad - g_true), (0, c0p - c0)))
    w0, w_stack, gb = _pack_params(weights, gammas, betas, c0p, c_pad)

    tps = tiles_per_split
    x_spec = pl.BlockSpec((k_group, tile_g, c0p), lambda c, m: (0, c * tps + m, 0))
    w0_spec = pl.BlockSpec((c0p, c_pad), lambda c, m: (0, 0))
    w_spec = pl.BlockSpec((num_layers, c_pad, c_pad), lambda c, m: (0, 0, 0))
    ss_spec = pl.BlockSpec((num_layers, 2, c_pad), lambda c, m: (0, 0, 0))
    stats_spec = pl.BlockSpec((2, 8, c_pad), lambda c, m: (c, 0, 0))
    pooled_spec = pl.BlockSpec((2, tile_g, c_pad), lambda c, m: (0, c * tps + m, 0))
    cparams = pltpu.CompilerParams(
        dimension_semantics=("parallel", "arbitrary"),
        vmem_limit_bytes=_VMEM_LIMIT_BYTES)

    ss = jnp.zeros((num_layers, 2, c_pad), jnp.float32)    # folded scale / shift
    pooled = None
    for j in range(num_layers):
        is_last = j == num_layers - 1
        kern = _make_stats_kernel(j, k_group, tile_g, c0p, c_pad, g_true,
                                  tiles_per_split, need_mask, is_last)
        if is_last:
            out_shape = (jax.ShapeDtypeStruct((2 * n_splits, 8, c_pad), jnp.float32),
                         jax.ShapeDtypeStruct((2, g_pad, c_pad), jnp.float32))
            out_specs = (stats_spec, pooled_spec)
        else:
            out_shape = jax.ShapeDtypeStruct((2 * n_splits, 8, c_pad), jnp.float32)
            out_specs = stats_spec
        res = pl.pallas_call(
            kern,
            out_shape=out_shape,
            grid=(n_splits, tiles_per_split),
            in_specs=[x_spec, w0_spec, w_spec, ss_spec],
            out_specs=out_specs,
            compiler_params=cparams,
        )(x, w0, w_stack, ss)
        if is_last:
            stats, pooled = res
        else:
            stats = res

        total = jnp.sum(stats.reshape(n_splits, 2, 8, c_pad), axis=(0, 2))  # [2,C]
        mean = total[0] / m_true
        var = jnp.maximum(total[1] / m_true - mean * mean, 0.0)   # biased variance
        scale = gb[j, 0] * lax.rsqrt(var + BN_EPS)
        shift = gb[j, 1] - mean * scale
        ss = ss.at[j, 0].set(scale).at[j, 1].set(shift)

    # Finish the last layer's BN + ReLU + max-over-K exactly in tiny JAX:
    # relu(s*p + b) is monotone in p with sign(s), so max over K equals
    # relu(s * (max_k p if s>=0 else min_k p) + b).
    scale = ss[num_layers - 1, 0]
    shift = ss[num_layers - 1, 1]
    pooled_pre = jnp.where(scale >= 0, pooled[0], pooled[1])      # [g_pad, c_pad]
    out = jnp.maximum(pooled_pre * scale + shift, 0.0)
    return out[:g_true, :c_last]


# ---------------------------------------------------------------------------
# Plain-JAX glue (data-dependent sampling / grouping; matches the torch helpers)
# ---------------------------------------------------------------------------
def square_distance(src, dst):
    dist = -2.0 * jnp.matmul(src, jnp.transpose(dst, (0, 2, 1)))
    dist = dist + jnp.sum(src ** 2, -1)[:, :, None]
    dist = dist + jnp.sum(dst ** 2, -1)[:, None, :]
    return dist


def index_points(points, idx):
    b = points.shape[0]
    batch = jnp.arange(b).reshape((b,) + (1,) * (idx.ndim - 1))
    return points[batch, idx]


def farthest_point_sample(xyz, npoint, key):
    b, n, _ = xyz.shape
    farthest = jax.random.randint(key, (b,), 0, n, dtype=jnp.int32)
    distance = jnp.full((b, n), 1e10, dtype=jnp.float32)
    centroids = jnp.zeros((b, npoint), dtype=jnp.int32)

    def body(i, carry):
        centroids, distance, farthest = carry
        centroids = centroids.at[:, i].set(farthest)
        centroid = jnp.take_along_axis(xyz, farthest[:, None, None], axis=1)
        dist = jnp.sum((xyz - centroid) ** 2, -1)
        distance = jnp.minimum(distance, dist)
        farthest = jnp.argmax(distance, axis=-1).astype(jnp.int32)
        return centroids, distance, farthest

    centroids, _, _ = lax.fori_loop(0, npoint, body, (centroids, distance, farthest))
    return centroids


def query_ball_point(radius, nsample, xyz, new_xyz):
    b, n, _ = xyz.shape
    s = new_xyz.shape[1]
    sqrdists = square_distance(new_xyz, xyz)                       # [B,S,N]
    idx = jnp.broadcast_to(jnp.arange(n, dtype=jnp.int32), (b, s, n))
    idx = jnp.where(sqrdists > radius ** 2, n, idx)
    # nsample smallest indices == top_k of negated indices: partial selection
    # instead of the reference's full O(N log N) sort.
    neg_top, _ = lax.top_k(-idx, nsample)
    group_idx = -neg_top                                           # ascending
    group_first = group_idx[:, :, 0:1]
    # TODO(synk): if a centroid had zero in-radius neighbors, group_first == N and
    # JAX clamps the gather (torch would index out of range); FPS centroids always
    # contain themselves so this branch is inert in practice.
    group_idx = jnp.where(group_idx == n, group_first, group_idx)
    return group_idx


# ---------------------------------------------------------------------------
# Module forward
# ---------------------------------------------------------------------------
@functools.partial(
    jax.jit,
    static_argnames=("npoint", "radius_list", "nsample_list", "tile_m_target"))
def pointnet_sa_msg_forward(xyz, points, params, fps_key, *,
                            npoint, radius_list, nsample_list, tile_m_target=None):
    """xyz: [B, 3, N]; points: [B, D, N] (PyTorch channel-first convention)."""
    xyz_t = jnp.transpose(xyz, (0, 2, 1))                          # [B,N,3]
    pts_t = None if points is None else jnp.transpose(points, (0, 2, 1))
    b = xyz_t.shape[0]
    s = npoint

    fps_idx = farthest_point_sample(xyz_t, s, fps_key)             # [B,S]
    new_xyz = index_points(xyz_t, fps_idx)                         # [B,S,3]

    new_points_list = []
    for i, radius in enumerate(radius_list):
        k = nsample_list[i]
        group_idx = query_ball_point(radius, k, xyz_t, new_xyz)    # [B,S,K]
        # Gather DIRECTLY into the K-outermost layout the kernel wants so no
        # feature-slab transpose hits HBM.
        idx_kbs = jnp.transpose(group_idx, (2, 0, 1))              # [K,B,S]
        batch = jnp.arange(b, dtype=jnp.int32).reshape(1, b, 1)
        grouped_xyz = xyz_t[batch, idx_kbs] - new_xyz[None, :, :, :]   # [K,B,S,3]
        if pts_t is not None:
            grouped_pts = pts_t[batch, idx_kbs]                    # [K,B,S,D]
            grouped = jnp.concatenate([grouped_pts, grouped_xyz], axis=-1)
        else:
            grouped = grouped_xyz
        c0 = grouped.shape[-1]
        x_kgc = grouped.reshape(k, b * s, c0).astype(jnp.bfloat16)  # compact bf16

        ws, _biases, gs, betas = params[i]     # conv biases cancel under train BN
        pooled = msg_mlp_pooled(x_kgc, ws, gs, betas,
                                tile_m_target=tile_m_target)       # [B*S, C_last]
        c_last = pooled.shape[-1]
        new_points_list.append(
            jnp.transpose(pooled.reshape(b, s, c_last), (0, 2, 1)))  # [B,C',S]

    new_xyz_out = jnp.transpose(new_xyz, (0, 2, 1))                # [B,3,S]
    new_points_concat = jnp.concatenate(new_points_list, axis=1)   # [B,sum C',S]
    return new_xyz_out, new_points_concat


def init_params(in_channel, mlp_list, key):
    """Deterministic synthetic parameters (Conv2d 1x1 weights/biases, BN gamma/beta)."""
    params = []
    for mlp in mlp_list:
        last = in_channel + 3
        ws, bs_, gs, betas = [], [], [], []
        for out_c in mlp:
            key, k1, k2, k3, k4 = jax.random.split(key, 5)
            ws.append(jax.random.normal(k1, (last, out_c), jnp.float32)
                      * (1.0 / (last ** 0.5)))
            bs_.append(0.01 * jax.random.normal(k2, (out_c,), jnp.float32))
            gs.append(1.0 + 0.1 * jax.random.normal(k3, (out_c,), jnp.float32))
            betas.append(0.01 * jax.random.normal(k4, (out_c,), jnp.float32))
            last = out_c
        params.append((ws, bs_, gs, betas))
    return params


if __name__ == "__main__":
    key = jax.random.PRNGKey(0)
    k_xyz, k_pts, k_param, k_fps = jax.random.split(key, 4)

    # Small shapes consistent with the module: B=2, N=64 points, D=4 feature
    # channels, npoint=16 centroids, two MSG scales.
    B, N, D = 2, 64, 4
    npoint = 16
    radius_list = (0.2, 0.4)
    nsample_list = (8, 16)
    mlp_list = [[16, 32], [32, 64]]

    xyz = jax.random.uniform(k_xyz, (B, 3, N), jnp.float32)        # [B, 3, N]
    points = jax.random.normal(k_pts, (B, D, N), jnp.float32)      # [B, D, N]
    params = init_params(D, mlp_list, k_param)

    new_xyz, new_points_concat = pointnet_sa_msg_forward(
        xyz, points, params, k_fps,
        npoint=npoint, radius_list=radius_list, nsample_list=nsample_list)

    jax.block_until_ready((new_xyz, new_points_concat))

    assert new_xyz.shape == (B, 3, npoint)
    assert new_points_concat.shape == (B, sum(m[-1] for m in mlp_list), npoint)
    assert bool(jnp.all(jnp.isfinite(new_points_concat)))
    print("KERNEL_OK")
</pallas_src>

<mosaic_0001>
module attributes {stable_mosaic.version = 11 : i64} {
  func.func @kernel(%arg0: i32, %arg1: i32, %arg2: memref<8x32x16xbf16, #tpu.memory_space<vmem>>, %arg3: memref<16x128xbf16, #tpu.memory_space<vmem>>, %arg4: memref<2x128x128xbf16, #tpu.memory_space<vmem>>, %arg5: memref<2x2x128xf32, #tpu.memory_space<vmem>>, %arg6: memref<2x8x128xf32, #tpu.memory_space<vmem>>) attributes {dimension_semantics = [#tpu.dimension_semantics<parallel>, #tpu.dimension_semantics<arbitrary>], iteration_bounds = array<i64: 1, 1>, scalar_prefetch = 0 : i64, scratch_operands = 0 : i64, tpu.core_type = #tpu.core_type<tc>, window_params = [{transform_indices = @transform_0, window_bounds = array<i64: 8, 32, 16>}, {pipeline_mode = #tpu.pipeline_mode<synchronous>, transform_indices = @transform_1, window_bounds = array<i64: 16, 128>}, {pipeline_mode = #tpu.pipeline_mode<synchronous>, transform_indices = @transform_2, window_bounds = array<i64: 2, 128, 128>}, {pipeline_mode = #tpu.pipeline_mode<synchronous>, transform_indices = @transform_3, window_bounds = array<i64: 2, 2, 128>}, {transform_indices = @transform_4, window_bounds = array<i64: 2, 8, 128>}]} {
    %c0_i32 = arith.constant 0 : i32
    %0 = arith.cmpi eq, %arg1, %c0_i32 : i32
    %1 = arith.extui %0 : i1 to i32
    %c0_i32_0 = arith.constant 0 : i32
    %2 = arith.cmpi ne, %1, %c0_i32_0 : i32
    scf.if %2 {
      %cst_20 = arith.constant 0.000000e+00 : f32
      %27 = vector.broadcast %cst_20 : f32 to vector<2x8x128xf32>
      %c0_21 = arith.constant 0 : index
      %c0_22 = arith.constant 0 : index
      %c0_23 = arith.constant 0 : index
      %28 = vector.load %arg6[%c0_21, %c0_22, %c0_23] : memref<2x8x128xf32, #tpu.memory_space<vmem>>, vector<2x8x128xf32>
      tpu.vector_store %arg6[%c0_21, %c0_22, %c0_23], %27 {strides = array<i32>} : memref<2x8x128xf32, #tpu.memory_space<vmem>>, vector<2x8x128xf32>,
    } else {
    }
    %c0 = arith.constant 0 : index
    %c0_1 = arith.constant 0 : index
    %c0_2 = arith.constant 0 : index
    %3 = vector.load %arg2[%c0, %c0_1, %c0_2] : memref<8x32x16xbf16, #tpu.memory_space<vmem>>, vector<8x32x16xbf16>
    %4 = vector.shape_cast %3 : vector<8x32x16xbf16> to vector<256x16xbf16>
    %c0_3 = arith.constant 0 : index
    %c0_4 = arith.constant 0 : index
    %5 = vector.load %arg3[%c0_3, %c0_4] : memref<16x128xbf16, #tpu.memory_space<vmem>>, vector<16x128xbf16>
    %cst = arith.constant dense<0.000000e+00> : vector<256x128xf32>
    %6 = tpu.matmul %4, %5, %cst {dimension_numbers = #tpu.dot_dimension_numbers<[1], [0], [0], [1], [0, 0, 1, 1], [], []>} : vector<256x16xbf16>, vector<16x128xbf16>, vector<256x128xf32> -> vector<256x128xf32>
    %7 = vector.shape_cast %6 : vector<256x128xf32> to vector<8x32x128xf32>
    %cst_5 = arith.constant dense<0.000000e+00> : vector<32x128xf32>
    %8 = vector.multi_reduction <add>, %7, %cst_5 [0] : vector<8x32x128xf32> to vector<32x128xf32>
    %9 = arith.mulf %7, %7 : vector<8x32x128xf32>
    %cst_6 = arith.constant dense<0.000000e+00> : vector<32x128xf32>
    %10 = vector.multi_reduction <add>, %9, %cst_6 [0] : vector<8x32x128xf32> to vector<32x128xf32>
    %c0_7 = arith.constant 0 : index
    %c0_8 = arith.constant 0 : index
    %c0_9 = arith.constant 0 : index
    %11 = vector.load %arg6[%c0_7, %c0_8, %c0_9] : memref<2x8x128xf32, #tpu.memory_space<vmem>>, vector<1x8x128xf32>
    %12 = vector.shape_cast %11 : vector<1x8x128xf32> to vector<8x128xf32>
    %13 = vector.shape_cast %8 : vector<32x128xf32> to vector<4x8x128xf32>
    %cst_10 = arith.constant dense<0.000000e+00> : vector<8x128xf32>
    %14 = vector.multi_reduction <add>, %13, %cst_10 [0] : vector<4x8x128xf32> to vector<8x128xf32>
    %15 = arith.addf %12, %14 : vector<8x128xf32>
    %c0_11 = arith.constant 0 : index
    %c0_12 = arith.constant 0 : index
    %c0_13 = arith.constant 0 : index
    %16 = vector.load %arg6[%c0_11, %c0_12, %c0_13] : memref<2x8x128xf32, #tpu.memory_space<vmem>>, vector<1x8x128xf32>
    %17 = vector.shape_cast %16 : vector<1x8x128xf32> to vector<8x128xf32>
    %18 = vector.shape_cast %15 : vector<8x128xf32> to vector<1x8x128xf32>
    tpu.vector_store %arg6[%c0_11, %c0_12, %c0_13], %18 {strides = array<i32>} : memref<2x8x128xf32, #tpu.memory_space<vmem>>, vector<1x8x128xf32>,
    %c1 = arith.constant 1 : index
    %c0_14 = arith.constant 0 : index
    %c0_15 = arith.constant 0 : index
    %19 = vector.load %arg6[%c1, %c0_14, %c0_15] : memref<2x8x128xf32, #tpu.memory_space<vmem>>, vector<1x8x128xf32>
    %20 = vector.shape_cast %19 : vector<1x8x128xf32> to vector<8x128xf32>
    %21 = vector.shape_cast %10 : vector<32x128xf32> to vector<4x8x128xf32>
    %cst_16 = arith.constant dense<0.000000e+00> : vector<8x128xf32>
    %22 = vector.multi_reduction <add>, %21, %cst_16 [0] : vector<4x8x128xf32> to vector<8x128xf32>
    %23 = arith.addf %20, %22 : vector<8x128xf32>
    %c1_17 = arith.constant 1 : index
    %c0_18 = arith.constant 0 : index
    %c0_19 = arith.constant 0 : index
    %24 = vector.load %arg6[%c1_17, %c0_18, %c0_19] : memref<2x8x128xf32, #tpu.memory_space<vmem>>, vector<1x8x128xf32>
    %25 = vector.shape_cast %24 : vector<1x8x128xf32> to vector<8x128xf32>
    %26 = vector.shape_cast %23 : vector<8x128xf32> to vector<1x8x128xf32>
    tpu.vector_store %arg6[%c1_17, %c0_18, %c0_19], %26 {strides = array<i32>} : memref<2x8x128xf32, #tpu.memory_space<vmem>>, vector<1x8x128xf32>,
    return
  }
  func.func @transform_0(%arg0: i32, %arg1: i32) -> (i32, i32, i32) {
    %c1_i32 = arith.constant 1 : i32
    %0 = arith.muli %arg0, %c1_i32 : i32
    %1 = arith.addi %0, %arg1 : i32
    %c0_i32 = arith.constant 0 : i32
    %c0_i32_0 = arith.constant 0 : i32
    %c0_i32_1 = arith.constant 0 : i32
    return %c0_i32, %1, %c0_i32_0 : i32, i32, i32
  }
  func.func @transform_1(%arg0: i32, %arg1: i32) -> (i32, i32) {
    %c0_i32 = arith.constant 0 : i32
    %c0_i32_0 = arith.constant 0 : i32
    %c0_i32_1 = arith.constant 0 : i32
    return %c0_i32, %c0_i32_0 : i32, i32
  }
  func.func @transform_2(%arg0: i32, %arg1: i32) -> (i32, i32, i32) {
    %c0_i32 = arith.constant 0 : i32
    %c0_i32_0 = arith.constant 0 : i32
    %c0_i32_1 = arith.constant 0 : i32
    %c0_i32_2 = arith.constant 0 : i32
    return %c0_i32, %c0_i32_0, %c0_i32_1 : i32, i32, i32
  }
  func.func @transform_3(%arg0: i32, %arg1: i32) -> (i32, i32, i32) {
    %c0_i32 = arith.constant 0 : i32
    %c0_i32_0 = arith.constant 0 : i32
    %c0_i32_1 = arith.constant 0 : i32
    %c0_i32_2 = arith.constant 0 : i32
    return %c0_i32, %c0_i32_0, %c0_i32_1 : i32, i32, i32
  }
  func.func @transform_4(%arg0: i32, %arg1: i32) -> (i32, i32, i32) {
    %c0_i32 = arith.constant 0 : i32
    %c0_i32_0 = arith.constant 0 : i32
    %c0_i32_1 = arith.constant 0 : i32
    return %arg0, %c0_i32, %c0_i32_0 : i32, i32, i32
  }
}

module attributes {stable_mosaic.version = 11 : i64} {
  func.func @kernel(%arg0: i32, %arg1: i32, %arg2: memref<8x32x16xbf16, #tpu.memory_space<vmem>>, %arg3: memref<16x128xbf16, #tpu.memory_space<vmem>>, %arg4: memref<2x128x128xbf16, #tpu.memory_space<vmem>>, %arg5: memref<2x2x128xf32, #tpu.memory_space<vmem>>, %arg6: memref<2x8x128xf32, #tpu.memory_space<vmem>>, %arg7: memref<2x32x128xf32, #tpu.memory_space<vmem>>) attributes {dimension_semantics = [#tpu.dimension_semantics<parallel>, #tpu.dimension_semantics<arbitrary>], iteration_bounds = array<i64: 1, 1>, scalar_prefetch = 0 : i64, scratch_operands = 0 : i64, tpu.core_type = #tpu.core_type<tc>, window_params = [{transform_indices = @transform_0, window_bounds = array<i64: 8, 32, 16>}, {pipeline_mode = #tpu.pipeline_mode<synchronous>, transform_indices = @transform_1, window_bounds = array<i64: 16, 128>}, {pipeline_mode = #tpu.pipeline_mode<synchronous>, transform_indices = @transform_2, window_bounds = array<i64: 2, 128, 128>}, {pipeline_mode = #tpu.pipeline_mode<synchronous>, transform_indices = @transform_3, window_bounds = array<i64: 2, 2, 128>}, {transform_indices = @transform_4, window_bounds = array<i64: 2, 8, 128>}, {transform_indices = @transform_5, window_bounds = array<i64: 2, 32, 128>}]} {
    %c0_i32 = arith.constant 0 : i32
    %0 = arith.cmpi eq, %arg1, %c0_i32 : i32
    %1 = arith.extui %0 : i1 to i32
    %c0_i32_0 = arith.constant 0 : i32
    %2 = arith.cmpi ne, %1, %c0_i32_0 : i32
    scf.if %2 {
      %cst_36 = arith.constant 0.000000e+00 : f32
      %49 = vector.broadcast %cst_36 : f32 to vector<2x8x128xf32>
      %c0_37 = arith.constant 0 : index
      %c0_38 = arith.constant 0 : index
      %c0_39 = arith.constant 0 : index
      %50 = vector.load %arg6[%c0_37, %c0_38, %c0_39] : memref<2x8x128xf32, #tpu.memory_space<vmem>>, vector<2x8x128xf32>
      tpu.vector_store %arg6[%c0_37, %c0_38, %c0_39], %49 {strides = array<i32>} : memref<2x8x128xf32, #tpu.memory_space<vmem>>, vector<2x8x128xf32>,
    } else {
    }
    %c0 = arith.constant 0 : index
    %c0_1 = arith.constant 0 : index
    %c0_2 = arith.constant 0 : index
    %3 = vector.load %arg2[%c0, %c0_1, %c0_2] : memref<8x32x16xbf16, #tpu.memory_space<vmem>>, vector<8x32x16xbf16>
    %4 = vector.shape_cast %3 : vector<8x32x16xbf16> to vector<256x16xbf16>
    %c0_3 = arith.constant 0 : index
    %c0_4 = arith.constant 0 : index
    %5 = vector.load %arg3[%c0_3, %c0_4] : memref<16x128xbf16, #tpu.memory_space<vmem>>, vector<16x128xbf16>
    %cst = arith.constant dense<0.000000e+00> : vector<256x128xf32>
    %6 = tpu.matmul %4, %5, %cst {dimension_numbers = #tpu.dot_dimension_numbers<[1], [0], [0], [1], [0, 0, 1, 1], [], []>} : vector<256x16xbf16>, vector<16x128xbf16>, vector<256x128xf32> -> vector<256x128xf32>
    %c0_5 = arith.constant 0 : index
    %c0_6 = arith.constant 0 : index
    %c0_7 = arith.constant 0 : index
    %7 = vector.load %arg5[%c0_5, %c0_6, %c0_7] : memref<2x2x128xf32, #tpu.memory_space<vmem>>, vector<1x2x128xf32>
    %8 = vector.shape_cast %7 : vector<1x2x128xf32> to vector<2x128xf32>
    %9 = vector.extract_strided_slice %8 {offsets = [0, 0], sizes = [1, 128], strides = [1, 1]} : vector<2x128xf32> to vector<1x128xf32>
    %10 = vector.broadcast %9 : vector<1x128xf32> to vector<256x128xf32>
    %11 = arith.mulf %6, %10 : vector<256x128xf32>
    %12 = vector.extract_strided_slice %8 {offsets = [1, 0], sizes = [1, 128], strides = [1, 1]} : vector<2x128xf32> to vector<1x128xf32>
    %13 = vector.broadcast %12 : vector<1x128xf32> to vector<256x128xf32>
    %14 = arith.addf %11, %13 : vector<256x128xf32>
    %cst_8 = arith.constant 0.000000e+00 : f32
    %15 = vector.broadcast %cst_8 : f32 to vector<256x128xf32>
    %16 = arith.maximumf %14, %15 : vector<256x128xf32>
    %17 = arith.truncf %16 : vector<256x128xf32> to vector<256x128xbf16>
    %c1 = arith.constant 1 : index
    %c0_9 = arith.constant 0 : index
    %c0_10 = arith.constant 0 : index
    %18 = vector.load %arg4[%c1, %c0_9, %c0_10] : memref<2x128x128xbf16, #tpu.memory_space<vmem>>, vector<1x128x128xbf16>
    %19 = vector.shape_cast %18 : vector<1x128x128xbf16> to vector<128x128xbf16>
    %cst_11 = arith.constant dense<0.000000e+00> : vector<256x128xf32>
    %20 = tpu.matmul %17, %19, %cst_11 {dimension_numbers = #tpu.dot_dimension_numbers<[1], [0], [0], [1], [0, 0, 1, 1], [], []>} : vector<256x128xbf16>, vector<128x128xbf16>, vector<256x128xf32> -> vector<256x128xf32>
    %21 = vector.shape_cast %20 : vector<256x128xf32> to vector<8x32x128xf32>
    %cst_12 = arith.constant dense<0.000000e+00> : vector<32x128xf32>
    %22 = vector.multi_reduction <add>, %21, %cst_12 [0] : vector<8x32x128xf32> to vector<32x128xf32>
    %23 = arith.mulf %21, %21 : vector<8x32x128xf32>
    %cst_13 = arith.constant dense<0.000000e+00> : vector<32x128xf32>
    %24 = vector.multi_reduction <add>, %23, %cst_13 [0] : vector<8x32x128xf32> to vector<32x128xf32>
    %c0_14 = arith.constant 0 : index
    %c0_15 = arith.constant 0 : index
    %c0_16 = arith.constant 0 : index
    %25 = vector.load %arg6[%c0_14, %c0_15, %c0_16] : memref<2x8x128xf32, #tpu.memory_space<vmem>>, vector<1x8x128xf32>
    %26 = vector.shape_cast %25 : vector<1x8x128xf32> to vector<8x128xf32>
    %27 = vector.shape_cast %22 : vector<32x128xf32> to vector<4x8x128xf32>
    %cst_17 = arith.constant dense<0.000000e+00> : vector<8x128xf32>
    %28 = vector.multi_reduction <add>, %27, %cst_17 [0] : vector<4x8x128xf32> to vector<8x128xf32>
    %29 = arith.addf %26, %28 : vector<8x128xf32>
    %c0_18 = arith.constant 0 : index
    %c0_19 = arith.constant 0 : index
    %c0_20 = arith.constant 0 : index
    %30 = vector.load %arg6[%c0_18, %c0_19, %c0_20] : memref<2x8x128xf32, #tpu.memory_space<vmem>>, vector<1x8x128xf32>
    %31 = vector.shape_cast %30 : vector<1x8x128xf32> to vector<8x128xf32>
    %32 = vector.shape_cast %29 : vector<8x128xf32> to vector<1x8x128xf32>
    tpu.vector_store %arg6[%c0_18, %c0_19, %c0_20], %32 {strides = array<i32>} : memref<2x8x128xf32, #tpu.memory_space<vmem>>, vector<1x8x128xf32>,
    %c1_21 = arith.constant 1 : index
    %c0_22 = arith.constant 0 : index
    %c0_23 = arith.constant 0 : index
    %33 = vector.load %arg6[%c1_21, %c0_22, %c0_23] : memref<2x8x128xf32, #tpu.memory_space<vmem>>, vector<1x8x128xf32>
    %34 = vector.shape_cast %33 : vector<1x8x128xf32> to vector<8x128xf32>
    %35 = vector.shape_cast %24 : vector<32x128xf32> to vector<4x8x128xf32>
    %cst_24 = arith.constant dense<0.000000e+00> : vector<8x128xf32>
    %36 = vector.multi_reduction <add>, %35, %cst_24 [0] : vector<4x8x128xf32> to vector<8x128xf32>
    %37 = arith.addf %34, %36 : vector<8x128xf32>
    %c1_25 = arith.constant 1 : index
    %c0_26 = arith.constant 0 : index
    %c0_27 = arith.constant 0 : index
    %38 = vector.load %arg6[%c1_25, %c0_26, %c0_27] : memref<2x8x128xf32, #tpu.memory_space<vmem>>, vector<1x8x128xf32>
    %39 = vector.shape_cast %38 : vector<1x8x128xf32> to vector<8x128xf32>
    %40 = vector.shape_cast %37 : vector<8x128xf32> to vector<1x8x128xf32>
    tpu.vector_store %arg6[%c1_25, %c0_26, %c0_27], %40 {strides = array<i32>} : memref<2x8x128xf32, #tpu.memory_space<vmem>>, vector<1x8x128xf32>,
    %cst_28 = arith.constant dense<0xFF800000> : vector<32x128xf32>
    %41 = vector.multi_reduction <maximumf>, %21, %cst_28 [0] : vector<8x32x128xf32> to vector<32x128xf32>
    %c0_29 = arith.constant 0 : index
    %c0_30 = arith.constant 0 : index
    %c0_31 = arith.constant 0 : index
    %42 = vector.load %arg7[%c0_29, %c0_30, %c0_31] : memref<2x32x128xf32, #tpu.memory_space<vmem>>, vector<1x32x128xf32>
    %43 = vector.shape_cast %42 : vector<1x32x128xf32> to vector<32x128xf32>
    %44 = vector.shape_cast %41 : vector<32x128xf32> to vector<1x32x128xf32>
    tpu.vector_store %arg7[%c0_29, %c0_30, %c0_31], %44 {strides = array<i32>} : memref<2x32x128xf32, #tpu.memory_space<vmem>>, vector<1x32x128xf32>,
    %cst_32 = arith.constant dense<0x7F800000> : vector<32x128xf32>
    %45 = vector.multi_reduction <minimumf>, %21, %cst_32 [0] : vector<8x32x128xf32> to vector<32x128xf32>
    %c1_33 = arith.constant 1 : index
    %c0_34 = arith.constant 0 : index
    %c0_35 = arith.constant 0 : index
    %46 = vector.load %arg7[%c1_33, %c0_34, %c0_35] : memref<2x32x128xf32, #tpu.memory_space<vmem>>, vector<1x32x128xf32>
    %47 = vector.shape_cast %46 : vector<1x32x128xf32> to vector<32x128xf32>
    %48 = vector.shape_cast %45 : vector<32x128xf32> to vector<1x32x128xf32>
    tpu.vector_store %arg7[%c1_33, %c0_34, %c0_35], %48 {strides = array<i32>} : memref<2x32x128xf32, #tpu.memory_space<vmem>>, vector<1x32x128xf32>,
    return
  }
  func.func @transform_0(%arg0: i32, %arg1: i32) -> (i32, i32, i32) {
    %c1_i32 = arith.constant 1 : i32
    %0 = arith.muli %arg0, %c1_i32 : i32
    %1 = arith.addi %0, %arg1 : i32
    %c0_i32 = arith.constant 0 : i32
    %c0_i32_0 = arith.constant 0 : i32
    %c0_i32_1 = arith.constant 0 : i32
    return %c0_i32, %1, %c0_i32_0 : i32, i32, i32
  }
  func.func @transform_1(%arg0: i32, %arg1: i32) -> (i32, i32) {
    %c0_i32 = arith.constant 0 : i32
    %c0_i32_0 = arith.constant 0 : i32
    %c0_i32_1 = arith.constant 0 : i32
    return %c0_i32, %c0_i32_0 : i32, i32
  }
  func.func @transform_2(%arg0: i32, %arg1: i32) -> (i32, i32, i32) {
    %c0_i32 = arith.constant 0 : i32
    %c0_i32_0 = arith.constant 0 : i32
    %c0_i32_1 = arith.constant 0 : i32
    %c0_i32_2 = arith.constant 0 : i32
    return %c0_i32, %c0_i32_0, %c0_i32_1 : i32, i32, i32
  }
  func.func @transform_3(%arg0: i32, %arg1: i32) -> (i32, i32, i32) {
    %c0_i32 = arith.constant 0 : i32
    %c0_i32_0 = arith.constant 0 : i32
    %c0_i32_1 = arith.constant 0 : i32
    %c0_i32_2 = arith.constant 0 : i32
    return %c0_i32, %c0_i32_0, %c0_i32_1 : i32, i32, i32
  }
  func.func @transform_4(%arg0: i32, %arg1: i32) -> (i32, i32, i32) {
    %c0_i32 = arith.constant 0 : i32
    %c0_i32_0 = arith.constant 0 : i32
    %c0_i32_1 = arith.constant 0 : i32
    return %arg0, %c0_i32, %c0_i32_0 : i32, i32, i32
  }
  func.func @transform_5(%arg0: i32, %arg1: i32) -> (i32, i32, i32) {
    %c1_i32 = arith.constant 1 : i32
    %0 = arith.muli %arg0, %c1_i32 : i32
    %1 = arith.addi %0, %arg1 : i32
    %c0_i32 = arith.constant 0 : i32
    %c0_i32_0 = arith.constant 0 : i32
    %c0_i32_1 = arith.constant 0 : i32
    return %c0_i32, %1, %c0_i32_0 : i32, i32, i32
  }
}

module attributes {stable_mosaic.version = 11 : i64} {
  func.func @kernel(%arg0: i32, %arg1: i32, %arg2: memref<16x32x16xbf16, #tpu.memory_space<vmem>>, %arg3: memref<16x128xbf16, #tpu.memory_space<vmem>>, %arg4: memref<2x128x128xbf16, #tpu.memory_space<vmem>>, %arg5: memref<2x2x128xf32, #tpu.memory_space<vmem>>, %arg6: memref<2x8x128xf32, #tpu.memory_space<vmem>>) attributes {dimension_semantics = [#tpu.dimension_semantics<parallel>, #tpu.dimension_semantics<arbitrary>], iteration_bounds = array<i64: 1, 1>, scalar_prefetch = 0 : i64, scratch_operands = 0 : i64, tpu.core_type = #tpu.core_type<tc>, window_params = [{transform_indices = @transform_0, window_bounds = array<i64: 16, 32, 16>}, {pipeline_mode = #tpu.pipeline_mode<synchronous>, transform_indices = @transform_1, window_bounds = array<i64: 16, 128>}, {pipeline_mode = #tpu.pipeline_mode<synchronous>, transform_indices = @transform_2, window_bounds = array<i64: 2, 128, 128>}, {pipeline_mode = #tpu.pipeline_mode<synchronous>, transform_indices = @transform_3, window_bounds = array<i64: 2, 2, 128>}, {transform_indices = @transform_4, window_bounds = array<i64: 2, 8, 128>}]} {
    %c0_i32 = arith.constant 0 : i32
    %0 = arith.cmpi eq, %arg1, %c0_i32 : i32
    %1 = arith.extui %0 : i1 to i32
    %c0_i32_0 = arith.constant 0 : i32
    %2 = arith.cmpi ne, %1, %c0_i32_0 : i32
    scf.if %2 {
      %cst_20 = arith.constant 0.000000e+00 : f32
      %27 = vector.broadcast %cst_20 : f32 to vector<2x8x128xf32>
      %c0_21 = arith.constant 0 : index
      %c0_22 = arith.constant 0 : index
      %c0_23 = arith.constant 0 : index
      %28 = vector.load %arg6[%c0_21, %c0_22, %c0_23] : memref<2x8x128xf32, #tpu.memory_space<vmem>>, vector<2x8x128xf32>
      tpu.vector_store %arg6[%c0_21, %c0_22, %c0_23], %27 {strides = array<i32>} : memref<2x8x128xf32, #tpu.memory_space<vmem>>, vector<2x8x128xf32>,
    } else {
    }
    %c0 = arith.constant 0 : index
    %c0_1 = arith.constant 0 : index
    %c0_2 = arith.constant 0 : index
    %3 = vector.load %arg2[%c0, %c0_1, %c0_2] : memref<16x32x16xbf16, #tpu.memory_space<vmem>>, vector<16x32x16xbf16>
    %4 = vector.shape_cast %3 : vector<16x32x16xbf16> to vector<512x16xbf16>
    %c0_3 = arith.constant 0 : index
    %c0_4 = arith.constant 0 : index
    %5 = vector.load %arg3[%c0_3, %c0_4] : memref<16x128xbf16, #tpu.memory_space<vmem>>, vector<16x128xbf16>
    %cst = arith.constant dense<0.000000e+00> : vector<512x128xf32>
    %6 = tpu.matmul %4, %5, %cst {dimension_numbers = #tpu.dot_dimension_numbers<[1], [0], [0], [1], [0, 0, 1, 1], [], []>} : vector<512x16xbf16>, vector<16x128xbf16>, vector<512x128xf32> -> vector<512x128xf32>
    %7 = vector.shape_cast %6 : vector<512x128xf32> to vector<16x32x128xf32>
    %cst_5 = arith.constant dense<0.000000e+00> : vector<32x128xf32>
    %8 = vector.multi_reduction <add>, %7, %cst_5 [0] : vector<16x32x128xf32> to vector<32x128xf32>
    %9 = arith.mulf %7, %7 : vector<16x32x128xf32>
    %cst_6 = arith.constant dense<0.000000e+00> : vector<32x128xf32>
    %10 = vector.multi_reduction <add>, %9, %cst_6 [0] : vector<16x32x128xf32> to vector<32x128xf32>
    %c0_7 = arith.constant 0 : index
    %c0_8 = arith.constant 0 : index
    %c0_9 = arith.constant 0 : index
    %11 = vector.load %arg6[%c0_7, %c0_8, %c0_9] : memref<2x8x128xf32, #tpu.memory_space<vmem>>, vector<1x8x128xf32>
    %12 = vector.shape_cast %11 : vector<1x8x128xf32> to vector<8x128xf32>
    %13 = vector.shape_cast %8 : vector<32x128xf32> to vector<4x8x128xf32>
    %cst_10 = arith.constant dense<0.000000e+00> : vector<8x128xf32>
    %14 = vector.multi_reduction <add>, %13, %cst_10 [0] : vector<4x8x128xf32> to vector<8x128xf32>
    %15 = arith.addf %12, %14 : vector<8x128xf32>
    %c0_11 = arith.constant 0 : index
    %c0_12 = arith.constant 0 : index
    %c0_13 = arith.constant 0 : index
    %16 = vector.load %arg6[%c0_11, %c0_12, %c0_13] : memref<2x8x128xf32, #tpu.memory_space<vmem>>, vector<1x8x128xf32>
    %17 = vector.shape_cast %16 : vector<1x8x128xf32> to vector<8x128xf32>
    %18 = vector.shape_cast %15 : vector<8x128xf32> to vector<1x8x128xf32>
    tpu.vector_store %arg6[%c0_11, %c0_12, %c0_13], %18 {strides = array<i32>} : memref<2x8x128xf32, #tpu.memory_space<vmem>>, vector<1x8x128xf32>,
    %c1 = arith.constant 1 : index
    %c0_14 = arith.constant 0 : index
    %c0_15 = arith.constant 0 : index
    %19 = vector.load %arg6[%c1, %c0_14, %c0_15] : memref<2x8x128xf32, #tpu.memory_space<vmem>>, vector<1x8x128xf32>
    %20 = vector.shape_cast %19 : vector<1x8x128xf32> to vector<8x128xf32>
    %21 = vector.shape_cast %10 : vector<32x128xf32> to vector<4x8x128xf32>
    %cst_16 = arith.constant dense<0.000000e+00> : vector<8x128xf32>
    %22 = vector.multi_reduction <add>, %21, %cst_16 [0] : vector<4x8x128xf32> to vector<8x128xf32>
    %23 = arith.addf %20, %22 : vector<8x128xf32>
    %c1_17 = arith.constant 1 : index
    %c0_18 = arith.constant 0 : index
    %c0_19 = arith.constant 0 : index
    %24 = vector.load %arg6[%c1_17, %c0_18, %c0_19] : memref<2x8x128xf32, #tpu.memory_space<vmem>>, vector<1x8x128xf32>
    %25 = vector.shape_cast %24 : vector<1x8x128xf32> to vector<8x128xf32>
    %26 = vector.shape_cast %23 : vector<8x128xf32> to vector<1x8x128xf32>
    tpu.vector_store %arg6[%c1_17, %c0_18, %c0_19], %26 {strides = array<i32>} : memref<2x8x128xf32, #tpu.memory_space<vmem>>, vector<1x8x128xf32>,
    return
  }
  func.func @transform_0(%arg0: i32, %arg1: i32) -> (i32, i32, i32) {
    %c1_i32 = arith.constant 1 : i32
    %0 = arith.muli %arg0, %c1_i32 : i32
    %1 = arith.addi %0, %arg1 : i32
    %c0_i32 = arith.constant 0 : i32
    %c0_i32_0 = arith.constant 0 : i32
    %c0_i32_1 = arith.constant 0 : i32
    return %c0_i32, %1, %c0_i32_0 : i32, i32, i32
  }
  func.func @transform_1(%arg0: i32, %arg1: i32) -> (i32, i32) {
    %c0_i32 = arith.constant 0 : i32
    %c0_i32_0 = arith.constant 0 : i32
    %c0_i32_1 = arith.constant 0 : i32
    return %c0_i32, %c0_i32_0 : i32, i32
  }
  func.func @transform_2(%arg0: i32, %arg1: i32) -> (i32, i32, i32) {
    %c0_i32 = arith.constant 0 : i32
    %c0_i32_0 = arith.constant 0 : i32
    %c0_i32_1 = arith.constant 0 : i32
    %c0_i32_2 = arith.constant 0 : i32
    return %c0_i32, %c0_i32_0, %c0_i32_1 : i32, i32, i32
  }
  func.func @transform_3(%arg0: i32, %arg1: i32) -> (i32, i32, i32) {
    %c0_i32 = arith.constant 0 : i32
    %c0_i32_0 = arith.constant 0 : i32
    %c0_i32_1 = arith.constant 0 : i32
    %c0_i32_2 = arith.constant 0 : i32
    return %c0_i32, %c0_i32_0, %c0_i32_1 : i32, i32, i32
  }
  func.func @transform_4(%arg0: i32, %arg1: i32) -> (i32, i32, i32) {
    %c0_i32 = arith.constant 0 : i32
    %c0_i32_0 = arith.constant 0 : i32
    %c0_i32_1 = arith.constant 0 : i32
    return %arg0, %c0_i32, %c0_i32_0 : i32, i32, i32
  }
}

module attributes {stable_mosaic.version = 11 : i64} {
  func.func @kernel(%arg0: i32, %arg1: i32, %arg2: memref<16x32x16xbf16, #tpu.memory_space<vmem>>, %arg3: memref<16x128xbf16, #tpu.memory_space<vmem>>, %arg4: memref<2x128x128xbf16, #tpu.memory_space<vmem>>, %arg5: memref<2x2x128xf32, #tpu.memory_space<vmem>>, %arg6: memref<2x8x128xf32, #tpu.memory_space<vmem>>, %arg7: memref<2x32x128xf32, #tpu.memory_space<vmem>>) attributes {dimension_semantics = [#tpu.dimension_semantics<parallel>, #tpu.dimension_semantics<arbitrary>], iteration_bounds = array<i64: 1, 1>, scalar_prefetch = 0 : i64, scratch_operands = 0 : i64, tpu.core_type = #tpu.core_type<tc>, window_params = [{transform_indices = @transform_0, window_bounds = array<i64: 16, 32, 16>}, {pipeline_mode = #tpu.pipeline_mode<synchronous>, transform_indices = @transform_1, window_bounds = array<i64: 16, 128>}, {pipeline_mode = #tpu.pipeline_mode<synchronous>, transform_indices = @transform_2, window_bounds = array<i64: 2, 128, 128>}, {pipeline_mode = #tpu.pipeline_mode<synchronous>, transform_indices = @transform_3, window_bounds = array<i64: 2, 2, 128>}, {transform_indices = @transform_4, window_bounds = array<i64: 2, 8, 128>}, {transform_indices = @transform_5, window_bounds = array<i64: 2, 32, 128>}]} {
    %c0_i32 = arith.constant 0 : i32
    %0 = arith.cmpi eq, %arg1, %c0_i32 : i32
    %1 = arith.extui %0 : i1 to i32
    %c0_i32_0 = arith.constant 0 : i32
    %2 = arith.cmpi ne, %1, %c0_i32_0 : i32
    scf.if %2 {
      %cst_36 = arith.constant 0.000000e+00 : f32
      %49 = vector.broadcast %cst_36 : f32 to vector<2x8x128xf32>
      %c0_37 = arith.constant 0 : index
      %c0_38 = arith.constant 0 : index
      %c0_39 = arith.constant 0 : index
      %50 = vector.load %arg6[%c0_37, %c0_38, %c0_39] : memref<2x8x128xf32, #tpu.memory_space<vmem>>, vector<2x8x128xf32>
      tpu.vector_store %arg6[%c0_37, %c0_38, %c0_39], %49 {strides = array<i32>} : memref<2x8x128xf32, #tpu.memory_space<vmem>>, vector<2x8x128xf32>,
    } else {
    }
    %c0 = arith.constant 0 : index
    %c0_1 = arith.constant 0 : index
    %c0_2 = arith.constant 0 : index
    %3 = vector.load %arg2[%c0, %c0_1, %c0_2] : memref<16x32x16xbf16, #tpu.memory_space<vmem>>, vector<16x32x16xbf16>
    %4 = vector.shape_cast %3 : vector<16x32x16xbf16> to vector<512x16xbf16>
    %c0_3 = arith.constant 0 : index
    %c0_4 = arith.constant 0 : index
    %5 = vector.load %arg3[%c0_3, %c0_4] : memref<16x128xbf16, #tpu.memory_space<vmem>>, vector<16x128xbf16>
    %cst = arith.constant dense<0.000000e+00> : vector<512x128xf32>
    %6 = tpu.matmul %4, %5, %cst {dimension_numbers = #tpu.dot_dimension_numbers<[1], [0], [0], [1], [0, 0, 1, 1], [], []>} : vector<512x16xbf16>, vector<16x128xbf16>, vector<512x128xf32> -> vector<512x128xf32>
    %c0_5 = arith.constant 0 : index
    %c0_6 = arith.constant 0 : index
    %c0_7 = arith.constant 0 : index
    %7 = vector.load %arg5[%c0_5, %c0_6, %c0_7] : memref<2x2x128xf32, #tpu.memory_space<vmem>>, vector<1x2x128xf32>
    %8 = vector.shape_cast %7 : vector<1x2x128xf32> to vector<2x128xf32>
    %9 = vector.extract_strided_slice %8 {offsets = [0, 0], sizes = [1, 128], strides = [1, 1]} : vector<2x128xf32> to vector<1x128xf32>
    %10 = vector.broadcast %9 : vector<1x128xf32> to vector<512x128xf32>
    %11 = arith.mulf %6, %10 : vector<512x128xf32>
    %12 = vector.extract_strided_slice %8 {offsets = [1, 0], sizes = [1, 128], strides = [1, 1]} : vector<2x128xf32> to vector<1x128xf32>
    %13 = vector.broadcast %12 : vector<1x128xf32> to vector<512x128xf32>
    %14 = arith.addf %11, %13 : vector<512x128xf32>
    %cst_8 = arith.constant 0.000000e+00 : f32
    %15 = vector.broadcast %cst_8 : f32 to vector<512x128xf32>
    %16 = arith.maximumf %14, %15 : vector<512x128xf32>
    %17 = arith.truncf %16 : vector<512x128xf32> to vector<512x128xbf16>
    %c1 = arith.constant 1 : index
    %c0_9 = arith.constant 0 : index
    %c0_10 = arith.constant 0 : index
    %18 = vector.load %arg4[%c1, %c0_9, %c0_10] : memref<2x128x128xbf16, #tpu.memory_space<vmem>>, vector<1x128x128xbf16>
    %19 = vector.shape_cast %18 : vector<1x128x128xbf16> to vector<128x128xbf16>
    %cst_11 = arith.constant dense<0.000000e+00> : vector<512x128xf32>
    %20 = tpu.matmul %17, %19, %cst_11 {dimension_numbers = #tpu.dot_dimension_numbers<[1], [0], [0], [1], [0, 0, 1, 1], [], []>} : vector<512x128xbf16>, vector<128x128xbf16>, vector<512x128xf32> -> vector<512x128xf32>
    %21 = vector.shape_cast %20 : vector<512x128xf32> to vector<16x32x128xf32>
    %cst_12 = arith.constant dense<0.000000e+00> : vector<32x128xf32>
    %22 = vector.multi_reduction <add>, %21, %cst_12 [0] : vector<16x32x128xf32> to vector<32x128xf32>
    %23 = arith.mulf %21, %21 : vector<16x32x128xf32>
    %cst_13 = arith.constant dense<0.000000e+00> : vector<32x128xf32>
    %24 = vector.multi_reduction <add>, %23, %cst_13 [0] : vector<16x32x128xf32> to vector<32x128xf32>
    %c0_14 = arith.constant 0 : index
    %c0_15 = arith.constant 0 : index
    %c0_16 = arith.constant 0 : index
    %25 = vector.load %arg6[%c0_14, %c0_15, %c0_16] : memref<2x8x128xf32, #tpu.memory_space<vmem>>, vector<1x8x128xf32>
    %26 = vector.shape_cast %25 : vector<1x8x128xf32> to vector<8x128xf32>
    %27 = vector.shape_cast %22 : vector<32x128xf32> to vector<4x8x128xf32>
    %cst_17 = arith.constant dense<0.000000e+00> : vector<8x128xf32>
    %28 = vector.multi_reduction <add>, %27, %cst_17 [0] : vector<4x8x128xf32> to vector<8x128xf32>
    %29 = arith.addf %26, %28 : vector<8x128xf32>
    %c0_18 = arith.constant 0 : index
    %c0_19 = arith.constant 0 : index
    %c0_20 = arith.constant 0 : index
    %30 = vector.load %arg6[%c0_18, %c0_19, %c0_20] : memref<2x8x128xf32, #tpu.memory_space<vmem>>, vector<1x8x128xf32>
    %31 = vector.shape_cast %30 : vector<1x8x128xf32> to vector<8x128xf32>
    %32 = vector.shape_cast %29 : vector<8x128xf32> to vector<1x8x128xf32>
    tpu.vector_store %arg6[%c0_18, %c0_19, %c0_20], %32 {strides = array<i32>} : memref<2x8x128xf32, #tpu.memory_space<vmem>>, vector<1x8x128xf32>,
    %c1_21 = arith.constant 1 : index
    %c0_22 = arith.constant 0 : index
    %c0_23 = arith.constant 0 : index
    %33 = vector.load %arg6[%c1_21, %c0_22, %c0_23] : memref<2x8x128xf32, #tpu.memory_space<vmem>>, vector<1x8x128xf32>
    %34 = vector.shape_cast %33 : vector<1x8x128xf32> to vector<8x128xf32>
    %35 = vector.shape_cast %24 : vector<32x128xf32> to vector<4x8x128xf32>
    %cst_24 = arith.constant dense<0.000000e+00> : vector<8x128xf32>
    %36 = vector.multi_reduction <add>, %35, %cst_24 [0] : vector<4x8x128xf32> to vector<8x128xf32>
    %37 = arith.addf %34, %36 : vector<8x128xf32>
    %c1_25 = arith.constant 1 : index
    %c0_26 = arith.constant 0 : index
    %c0_27 = arith.constant 0 : index
    %38 = vector.load %arg6[%c1_25, %c0_26, %c0_27] : memref<2x8x128xf32, #tpu.memory_space<vmem>>, vector<1x8x128xf32>
    %39 = vector.shape_cast %38 : vector<1x8x128xf32> to vector<8x128xf32>
    %40 = vector.shape_cast %37 : vector<8x128xf32> to vector<1x8x128xf32>
    tpu.vector_store %arg6[%c1_25, %c0_26, %c0_27], %40 {strides = array<i32>} : memref<2x8x128xf32, #tpu.memory_space<vmem>>, vector<1x8x128xf32>,
    %cst_28 = arith.constant dense<0xFF800000> : vector<32x128xf32>
    %41 = vector.multi_reduction <maximumf>, %21, %cst_28 [0] : vector<16x32x128xf32> to vector<32x128xf32>
    %c0_29 = arith.constant 0 : index
    %c0_30 = arith.constant 0 : index
    %c0_31 = arith.constant 0 : index
    %42 = vector.load %arg7[%c0_29, %c0_30, %c0_31] : memref<2x32x128xf32, #tpu.memory_space<vmem>>, vector<1x32x128xf32>
    %43 = vector.shape_cast %42 : vector<1x32x128xf32> to vector<32x128xf32>
    %44 = vector.shape_cast %41 : vector<32x128xf32> to vector<1x32x128xf32>
    tpu.vector_store %arg7[%c0_29, %c0_30, %c0_31], %44 {strides = array<i32>} : memref<2x32x128xf32, #tpu.memory_space<vmem>>, vector<1x32x128xf32>,
    %cst_32 = arith.constant dense<0x7F800000> : vector<32x128xf32>
    %45 = vector.multi_reduction <minimumf>, %21, %cst_32 [0] : vector<16x32x128xf32> to vector<32x128xf32>
    %c1_33 = arith.constant 1 : index
    %c0_34 = arith.constant 0 : index
    %c0_35 = arith.constant 0 : index
    %46 = vector.load %arg7[%c1_33, %c0_34, %c0_35] : memref<2x32x128xf32, #tpu.memory_space<vmem>>, vector<1x32x128xf32>
    %47 = vector.shape_cast %46 : vector<1x32x128xf32> to vector<32x128xf32>
    %48 = vector.shape_cast %45 : vector<32x128xf32> to vector<1x32x128xf32>
    tpu.vector_store %arg7[%c1_33, %c0_34, %c0_35], %48 {strides = array<i32>} : memref<2x32x128xf32, #tpu.memory_space<vmem>>, vector<1x32x128xf32>,
    return
  }
  func.func @transform_0(%arg0: i32, %arg1: i32) -> (i32, i32, i32) {
    %c1_i32 = arith.constant 1 : i32
    %0 = arith.muli %arg0, %c1_i32 : i32
    %1 = arith.addi %0, %arg1 : i32
    %c0_i32 = arith.constant 0 : i32
    %c0_i32_0 = arith.constant 0 : i32
    %c0_i32_1 = arith.constant 0 : i32
    return %c0_i32, %1, %c0_i32_0 : i32, i32, i32
  }
  func.func @transform_1(%arg0: i32, %arg1: i32) -> (i32, i32) {
    %c0_i32 = arith.constant 0 : i32
    %c0_i32_0 = arith.constant 0 : i32
    %c0_i32_1 = arith.constant 0 : i32
    return %c0_i32, %c0_i32_0 : i32, i32
  }
  func.func @transform_2(%arg0: i32, %arg1: i32) -> (i32, i32, i32) {
    %c0_i32 = arith.constant 0 : i32
    %c0_i32_0 = arith.constant 0 : i32
    %c0_i32_1 = arith.constant 0 : i32
    %c0_i32_2 = arith.constant 0 : i32
    return %c0_i32, %c0_i32_0, %c0_i32_1 : i32, i32, i32
  }
  func.func @transform_3(%arg0: i32, %arg1: i32) -> (i32, i32, i32) {
    %c0_i32 = arith.constant 0 : i32
    %c0_i32_0 = arith.constant 0 : i32
    %c0_i32_1 = arith.constant 0 : i32
    %c0_i32_2 = arith.constant 0 : i32
    return %c0_i32, %c0_i32_0, %c0_i32_1 : i32, i32, i32
  }
  func.func @transform_4(%arg0: i32, %arg1: i32) -> (i32, i32, i32) {
    %c0_i32 = arith.constant 0 : i32
    %c0_i32_0 = arith.constant 0 : i32
    %c0_i32_1 = arith.constant 0 : i32
    return %arg0, %c0_i32, %c0_i32_0 : i32, i32, i32
  }
  func.func @transform_5(%arg0: i32, %arg1: i32) -> (i32, i32, i32) {
    %c1_i32 = arith.constant 1 : i32
    %0 = arith.muli %arg0, %c1_i32 : i32
    %1 = arith.addi %0, %arg1 : i32
    %c0_i32 = arith.constant 0 : i32
    %c0_i32_0 = arith.constant 0 : i32
    %c0_i32_1 = arith.constant 0 : i32
    return %c0_i32, %1, %c0_i32_0 : i32, i32, i32
  }
}

</mosaic_0001>

<llo_original>
// kernel: custom-call.12
$region0: #{custom-call.12}
  %s0 = inlined_call_operand.vmem [shape: f32[2,64], index: 0, kind: output, shape index: {}]

// kernel: pointnet_sa_msg_forward.4
$region0: #{pointnet_sa_msg_forward.4}
  #allocation0 [shape = 'u32[]', space=smem, size = 0x4, offset = 0x4, fixed_abs, tag = 'smem constant byte address 0x4 - core index']
  #allocation1 [shape = 'u32[144,128]{1,0:T(1,128)}', space=vmem, size = 0x12000, scoped, tag = 'internal scratch']
  %s0 = inlined_call_operand.vmem [shape: bf16[8,32,16], index: 0, kind: input, shape index: {}]
  %s1 = inlined_call_operand.vmem [shape: bf16[16,128], index: 1, kind: input, shape index: {}]
  %s2 = inlined_call_operand.vmem [shape: bf16[2,128,128], index: 2, kind: input, shape index: {}]
  %s3 = inlined_call_operand.vmem [shape: f32[2,2,128], index: 3, kind: input, shape index: {}]
  %s4 = inlined_call_operand.vmem [shape: f32[2,8,128], index: 4, kind: output, shape index: {}]
  %s5 = sld [smem:[#allocation0]]
  $region30: #{pointnet_sa_msg_forward.4} parent=0
    _
  %s7 = ssub.s32 1, %s5
  %s8 = scalar_select 0, %s7, %s5
  // Predicated region
  $region2: #{pointnet_sa_msg_forward.4} parent=0 // pred_check
    _
  $region3: #{pointnet_sa_msg_forward.4} parent=0 // pred_check_branch
    %10 = sbr.rel (0) target = $region5
  $region4: #{pointnet_sa_msg_forward.4} parent=0 // pred_region
    %s11 = sadd.s32 0, 0
    %s12 = smul.u32 4, %s11
    %p13 = scmp.lt.s32.totalorder %s12, 3
    %s14 = scalar_select %p13, %s12, 3
    %s15 = smul.addr %s14, 4
    %s16 = scalar_lea.vmem %s0, %s15
    %s17 = sadd.s32 0, 0
    %s18 = smul.u32 4, %s17
  $region5: #{pointnet_sa_msg_forward.4} parent=0 // pred_fallthru
    _
  // Predicated region
  $region6: #{pointnet_sa_msg_forward.4} parent=0 // pred_check
    _
  $region7: #{pointnet_sa_msg_forward.4} parent=0 // pred_check_branch
    %20 = sbr.rel (0) target = $region9
  $region8: #{pointnet_sa_msg_forward.4} parent=0 // pred_region
    _
  $region9: #{pointnet_sa_msg_forward.4} parent=0 // pred_fallthru
    _
  // Predicated region
  $region10: #{pointnet_sa_msg_forward.4} parent=0 // pred_check
    _
  $region11: #{pointnet_sa_msg_forward.4} parent=0 // pred_check_branch
    %22 = sbr.rel (0) target = $region13
  $region12: #{pointnet_sa_msg_forward.4} parent=0 // pred_region
    _
  $region13: #{pointnet_sa_msg_forward.4} parent=0 // pred_fallthru
    _
  // Predicated region
  $region14: #{pointnet_sa_msg_forward.4} parent=0 // pred_check
    _
  $region15: #{pointnet_sa_msg_forward.4} parent=0 // pred_check_branch
    %24 = sbr.rel (0) target = $region17
  $region16: #{pointnet_sa_msg_forward.4} parent=0 // pred_region
    _
  $region17: #{pointnet_sa_msg_forward.4} parent=0 // pred_fallthru
    _
  %s25 = sadd.s32 0, 0
  %s26 = smul.u32 4, %s25
  %p27 = scmp.lt.s32.totalorder %s26, 3
  %s28 = scalar_select %p27, %s26, 3
  %s29 = smul.addr %s28, 4
  %s30 = scalar_lea.vmem %s0, %s29
  %s31 = sadd.s32 0, 0
  %s32 = smul.u32 4, %s31
  %p33 = scmp.lt.s32.totalorder %s32, 3
  %s34 = scalar_select %p33, %s32, 3
  %s35 = smul.addr %s34, 4
  %s36 = scalar_lea.vmem %s0, %s35
  %s37 = sadd.s32 0, 0
  %s38 = smul.u32 4, %s37
  %p40 = scmp.eq.s32.totalorder 0, 0
  // Predicated region
  $region18: #{pointnet_sa_msg_forward.4} parent=0 // pred_check
    %p41 = pneg %p40
  $region19: #{pointnet_sa_msg_forward.4} parent=0 // pred_check_branch
    %43 = sbr.rel (%p41) target = $region21
  $region20: #{pointnet_sa_msg_forward.4} parent=0 // pred_region
    %44 = vst [vmem:[%s4] sm:$0xff] 0.0
    %45 = vst [vmem:[%s4 + $0x8] sm:$0xff] 0.0
  $region21: #{pointnet_sa_msg_forward.4} parent=0 // pred_fallthru
    _
  %v46 = vld [vmem:[%s36] sm:$0xf]
  %v47 = vld [vmem:[%s36 + $0x4] sm:$0xf]
  %v48 = vld [vmem:[%s36 + $0x8] sm:$0xf]
  %v49 = vld [vmem:[%s36 + $0xc] sm:$0xf]
  %v50 = vld [vmem:[%s36 + $0x10] sm:$0xf]
  %v51 = vld [vmem:[%s36 + $0x14] sm:$0xf]
  %v52 = vld [vmem:[%s36 + $0x18] sm:$0xf]
  %v53 = vld [vmem:[%s36 + $0x1c] sm:$0xf]
  %v54 = vld [vmem:[%s36 + $0x20] sm:$0xf]
  %v55 = vld [vmem:[%s36 + $0x24] sm:$0xf]
  %v56 = vld [vmem:[%s36 + $0x28] sm:$0xf]
  %v57 = vld [vmem:[%s36 + $0x2c] sm:$0xf]
  %v58 = vld [vmem:[%s36 + $0x30] sm:$0xf]
  %v59 = vld [vmem:[%s36 + $0x34] sm:$0xf]
  %v60 = vld [vmem:[%s36 + $0x38] sm:$0xf]
  %v61 = vld [vmem:[%s36 + $0x3c] sm:$0xf]
  %v62 = vld [vmem:[%s36 + $0x40] sm:$0xf]
  %v63 = vld [vmem:[%s36 + $0x44] sm:$0xf]
  %v64 = vld [vmem:[%s36 + $0x48] sm:$0xf]
  %v65 = vld [vmem:[%s36 + $0x4c] sm:$0xf]
  %v66 = vld [vmem:[%s36 + $0x50] sm:$0xf]
  %v67 = vld [vmem:[%s36 + $0x54] sm:$0xf]
  %v68 = vld [vmem:[%s36 + $0x58] sm:$0xf]
  %v69 = vld [vmem:[%s36 + $0x5c] sm:$0xf]
  %v70 = vld [vmem:[%s36 + $0x60] sm:$0xf]
  %v71 = vld [vmem:[%s36 + $0x64] sm:$0xf]
  %v72 = vld [vmem:[%s36 + $0x68] sm:$0xf]
  %v73 = vld [vmem:[%s36 + $0x6c] sm:$0xf]
  %v74 = vld [vmem:[%s36 + $0x70] sm:$0xf]
  %v75 = vld [vmem:[%s36 + $0x74] sm:$0xf]
  %v76 = vld [vmem:[%s36 + $0x78] sm:$0xf]
  %v77 = vld [vmem:[%s36 + $0x7c] sm:$0xf]
  %v78 = vld [vmem:[%s1] sm:$0xf]
  %v79 = vld [vmem:[%s1 + $0x4] sm:$0xf]
  %v112 = vunpack.c.l.b16 %v46
  %v113 = vunpack.c.l.b16 %v47
  %v114 = vunpack.c.l.b16 %v48
  %v115 = vunpack.c.l.b16 %v49
  %v116 = vunpack.c.l.b16 %v50
  %v117 = vunpack.c.l.b16 %v51
  %v118 = vunpack.c.l.b16 %v52
  %v119 = vunpack.c.l.b16 %v53
  %v120 = vunpack.c.l.b16 %v54
  %v121 = vunpack.c.l.b16 %v55
  %v122 = vunpack.c.l.b16 %v56
  %v123 = vunpack.c.l.b16 %v57
  %v124 = vunpack.c.l.b16 %v58
  %v125 = vunpack.c.l.b16 %v59
  %v126 = vunpack.c.l.b16 %v60
  %v127 = vunpack.c.l.b16 %v61
  %v128 = vunpack.c.l.b16 %v62
  %v129 = vunpack.c.l.b16 %v63
  %v130 = vunpack.c.l.b16 %v64
  %v131 = vunpack.c.l.b16 %v65
  %v132 = vunpack.c.l.b16 %v66
  %v133 = vunpack.c.l.b16 %v67
  %v134 = vunpack.c.l.b16 %v68
  %v135 = vunpack.c.l.b16 %v69
  %v136 = vunpack.c.l.b16 %v70
  %v137 = vunpack.c.l.b16 %v71
  %v138 = vunpack.c.l.b16 %v72
  %v139 = vunpack.c.l.b16 %v73
  %v140 = vunpack.c.l.b16 %v74
  %v141 = vunpack.c.l.b16 %v75
  %v142 = vunpack.c.l.b16 %v76
  %v143 = vunpack.c.l.b16 %v77
  %v144 = vpack.c.b16 %v113, %v112
  %v145 = vpack.c.b16 %v115, %v114
  %v146 = vpack.c.b16 %v117, %v116
  %v147 = vpack.c.b16 %v119, %v118
  %v148 = vpack.c.b16 %v121, %v120
  %v149 = vpack.c.b16 %v123, %v122
  %v150 = vpack.c.b16 %v125, %v124
  %v151 = vpack.c.b16 %v127, %v126
  %v152 = vpack.c.b16 %v129, %v128
  %v153 = vpack.c.b16 %v131, %v130
  %v154 = vpack.c.b16 %v133, %v132
  %v155 = vpack.c.b16 %v135, %v134
  %v156 = vpack.c.b16 %v137, %v136
  %v157 = vpack.c.b16 %v139, %v138
  %v158 = vpack.c.b16 %v141, %v140
  %v159 = vpack.c.b16 %v143, %v142
  %v162 = vunpack.c.l.b16 %v78
  %v163 = vunpack.c.l.b16 %v79
  %v164 = vpack.c.b16 %v163, %v162
  %vm166 = vcmask 130048
  %v168 = vsel %vm166, %v144, 0
  %v171 = vsel %vm166, %v145, 0
  %v174 = vsel %vm166, %v146, 0
  %v177 = vsel %vm166, %v147, 0
  %v180 = vsel %vm166, %v148, 0
  %v183 = vsel %vm166, %v149, 0
  %v186 = vsel %vm166, %v150, 0
  %v189 = vsel %vm166, %v151, 0
  %v192 = vsel %vm166, %v152, 0
  %v195 = vsel %vm166, %v153, 0
  %v198 = vsel %vm166, %v154, 0
  %v201 = vsel %vm166, %v155, 0
  %v204 = vsel %vm166, %v156, 0
  %v207 = vsel %vm166, %v157, 0
  %v210 = vsel %vm166, %v158, 0
  %v213 = vsel %vm166, %v159, 0
  %215 = vmatprep.subr.bf16.mxu0 0
  %216 = vmatpush1.bf16.msra.mxu0 %v164
  %217 = vmatprep.subr.bf16.mxu0 0
  %218 = vmatpush1.bf16.msra.mxu0 0
  %219 = vmatprep.subr.bf16.mxu0 0
  %220 = vmatpush1.bf16.msra.mxu0 0
  %221 = vmatprep.subr.bf16.mxu0 0
  %222 = vmatpush1.bf16.msra.mxu0 0
  %223 = vmatprep.subr.bf16.mxu0 0
  %224 = vmatpush1.bf16.msra.mxu0 0
  %225 = vmatprep.subr.bf16.mxu0 0
  %226 = vmatpush1.bf16.msra.mxu0 0
  %227 = vmatprep.subr.bf16.mxu0 0
  %228 = vmatpush1.bf16.msra.mxu0 0
  %229 = vmatprep.subr.bf16.mxu0 0
  %230 = vmatpush1.bf16.msra.mxu0 0
  %231 = vmatprep.subr.bf16.mxu0 0
  %232 = vmatpush1.bf16.msra.mxu0 0
  %233 = vmatprep.subr.bf16.mxu0 0
  %234 = vmatpush1.bf16.msra.mxu0 0
  %235 = vmatprep.subr.bf16.mxu0 0
  %236 = vmatpush1.bf16.msra.mxu0 0
  %237 = vmatprep.subr.bf16.mxu0 0
  %238 = vmatpush1.bf16.msra.mxu0 0
  %239 = vmatprep.subr.bf16.mxu0 0
  %240 = vmatpush1.bf16.msra.mxu0 0
  %241 = vmatprep.subr.bf16.mxu0 0
  %242 = vmatpush1.bf16.msra.mxu0 0
  %243 = vmatprep.subr.bf16.mxu0 0
  %244 = vmatpush1.bf16.msra.mxu0 0
  %245 = vmatprep.subr.bf16.mxu0 0
  %246 = vmatpush1.bf16.msra.mxu0 0
  %247 = vmatprep.mubr.bf16.mxu0 0
  %248 = vmatmul.mubr.bf16.gmra.mrb[0].mxu0 %v168
  %v249 = vpop.f32.mrb[0].mxu0
  %v250 = vadd.f32 0.0, %v249
  %v251 = vpop.f32.mrb[0].mxu0
  %v252 = vpop.f32.mrb[0].mxu0
  %v253 = vadd.f32 0.0, %v252
  %v254 = vpop.f32.mrb[0].mxu0
  %255 = vmatprep.mubr.bf16.mxu0 0
  %256 = vmatmul.mubr.bf16.gmra.mrb[0].mxu0 %v171
  %v257 = vpop.f32.mrb[0].mxu0
  %v258 = vadd.f32 0.0, %v257
  %v259 = vpop.f32.mrb[0].mxu0
  %v260 = vpop.f32.mrb[0].mxu0
  %v261 = vadd.f32 0.0, %v260
  %v262 = vpop.f32.mrb[0].mxu0
  %263 = vmatprep.mubr.bf16.mxu0 0
  %264 = vmatmul.mubr.bf16.gmra.mrb[0].mxu0 %v174
  %v265 = vpop.f32.mrb[0].mxu0
  %v266 = vadd.f32 0.0, %v265
  %v267 = vpop.f32.mrb[0].mxu0
  %v268 = vpop.f32.mrb[0].mxu0
  %v269 = vadd.f32 0.0, %v268
  %v270 = vpop.f32.mrb[0].mxu0
  %271 = vmatprep.mubr.bf16.mxu0 0
  %272 = vmatmul.mubr.bf16.gmra.mrb[0].mxu0 %v177
  %v273 = vpop.f32.mrb[0].mxu0
  %v274 = vadd.f32 0.0, %v273
  %v275 = vpop.f32.mrb[0].mxu0
  %v276 = vpop.f32.mrb[0].mxu0
  %v277 = vadd.f32 0.0, %v276
  %v278 = vpop.f32.mrb[0].mxu0
  %279 = vmatprep.mubr.bf16.mxu0 0
  %280 = vmatmul.mubr.bf16.gmra.mrb[0].mxu0 %v180
  %v281 = vpop.f32.mrb[0].mxu0
  %v282 = vadd.f32 0.0, %v281
  %v283 = vpop.f32.mrb[0].mxu0
  %v284 = vpop.f32.mrb[0].mxu0
  %v285 = vadd.f32 0.0, %v284
  %v286 = vpop.f32.mrb[0].mxu0
  %287 = vmatprep.mubr.bf16.mxu0 0
  %288 = vmatmul.mubr.bf16.gmra.mrb[0].mxu0 %v183
  %v289 = vpop.f32.mrb[0].mxu0
  %v290 = vadd.f32 0.0, %v289
  %v291 = vpop.f32.mrb[0].mxu0
  %v292 = vpop.f32.mrb[0].mxu0
  %v293 = vadd.f32 0.0, %v292
  %v294 = vpop.f32.mrb[0].mxu0
  %295 = vmatprep.mubr.bf16.mxu0 0
  %296 = vmatmul.mubr.bf16.gmra.mrb[0].mxu0 %v186
  %v297 = vpop.f32.mrb[0].mxu0
  %v298 = vadd.f32 0.0, %v297
  %v299 = vpop.f32.mrb[0].mxu0
  %v300 = vpop.f32.mrb[0].mxu0
  %v301 = vadd.f32 0.0, %v300
  %v302 = vpop.f32.mrb[0].mxu0
  %303 = vmatprep.mubr.bf16.mxu0 0
  %304 = vmatmul.mubr.bf16.gmra.mrb[0].mxu0 %v189
  %v305 = vpop.f32.mrb[0].mxu0
  %v306 = vadd.f32 0.0, %v305
  %v307 = vpop.f32.mrb[0].mxu0
  %v308 = vpop.f32.mrb[0].mxu0
  %v309 = vadd.f32 0.0, %v308
  %v310 = vpop.f32.mrb[0].mxu0
  %311 = vmatprep.mubr.bf16.mxu0 0
  %312 = vmatmul.mubr.bf16.gmra.mrb[0].mxu0 %v192
  %v313 = vpop.f32.mrb[0].mxu0
  %v314 = vadd.f32 0.0, %v313
  %v315 = vpop.f32.mrb[0].mxu0
  %v316 = vpop.f32.mrb[0].mxu0
  %v317 = vadd.f32 0.0, %v316
  %v318 = vpop.f32.mrb[0].mxu0
  %319 = vmatprep.mubr.bf16.mxu0 0
  %320 = vmatmul.mubr.bf16.gmra.mrb[0].mxu0 %v195
  %v321 = vpop.f32.mrb[0].mxu0
  %v322 = vadd.f32 0.0, %v321
  %v323 = vpop.f32.mrb[0].mxu0
  %v324 = vpop.f32.mrb[0].mxu0
  %v325 = vadd.f32 0.0, %v324
  %v326 = vpop.f32.mrb[0].mxu0
  %327 = vmatprep.mubr.bf16.mxu0 0
  %328 = vmatmul.mubr.bf16.gmra.mrb[0].mxu0 %v198
  %v329 = vpop.f32.mrb[0].mxu0
  %v330 = vadd.f32 0.0, %v329
  %v331 = vpop.f32.mrb[0].mxu0
  %v332 = vpop.f32.mrb[0].mxu0
  %v333 = vadd.f32 0.0, %v332
  %v334 = vpop.f32.mrb[0].mxu0
  %335 = vmatprep.mubr.bf16.mxu0 0
  %336 = vmatmul.mubr.bf16.gmra.mrb[0].mxu0 %v201
  %v337 = vpop.f32.mrb[0].mxu0
  %v338 = vadd.f32 0.0, %v337
  %v339 = vpop.f32.mrb[0].mxu0
  %v340 = vpop.f32.mrb[0].mxu0
  %v341 = vadd.f32 0.0, %v340
  %v342 = vpop.f32.mrb[0].mxu0
  %343 = vmatprep.mubr.bf16.mxu0 0
  %344 = vmatmul.mubr.bf16.gmra.mrb[0].mxu0 %v204
  %v345 = vpop.f32.mrb[0].mxu0
  %v346 = vadd.f32 0.0, %v345
  %v347 = vpop.f32.mrb[0].mxu0
  %v348 = vpop.f32.mrb[0].mxu0
  %v349 = vadd.f32 0.0, %v348
  %v350 = vpop.f32.mrb[0].mxu0
  %351 = vmatprep.mubr.bf16.mxu0 0
  %352 = vmatmul.mubr.bf16.gmra.mrb[0].mxu0 %v207
  %v353 = vpop.f32.mrb[0].mxu0
  %v354 = vadd.f32 0.0, %v353
  %v355 = vpop.f32.mrb[0].mxu0
  %v356 = vpop.f32.mrb[0].mxu0
  %v357 = vadd.f32 0.0, %v356
  %v358 = vpop.f32.mrb[0].mxu0
  %359 = vmatprep.mubr.bf16.mxu0 0
  %360 = vmatmul.mubr.bf16.gmra.mrb[0].mxu0 %v210
  %v361 = vpop.f32.mrb[0].mxu0
  %v362 = vadd.f32 0.0, %v361
  %v363 = vpop.f32.mrb[0].mxu0
  %v364 = vpop.f32.mrb[0].mxu0
  %v365 = vadd.f32 0.0, %v364
  %v366 = vpop.f32.mrb[0].mxu0
  %367 = vmatprep.mubr.bf16.mxu0 0
  %368 = vmatmul.mubr.bf16.gmra.mrb[0].mxu0 %v213
  %v369 = vpop.f32.mrb[0].mxu0
  %v370 = vadd.f32 0.0, %v369
  %v371 = vpop.f32.mrb[0].mxu0
  %v372 = vpop.f32.mrb[0].mxu0
  %v373 = vadd.f32 0.0, %v372
  %v374 = vpop.f32.mrb[0].mxu0
  %375 = vdwg.mxu0
  %v376 = vadd.f32 %v250, %v266
  %v377 = vadd.f32 %v376, %v282
  %v378 = vadd.f32 %v377, %v298
  %v379 = vadd.f32 %v378, %v314
  %v380 = vadd.f32 %v379, %v330
  %v381 = vadd.f32 %v380, %v346
  %v382 = vadd.f32 %v381, %v362
  %v383 = vadd.f32 %v253, %v269
  %v384 = vadd.f32 %v383, %v285
  %v385 = vadd.f32 %v384, %v301
  %v386 = vadd.f32 %v385, %v317
  %v387 = vadd.f32 %v386, %v333
  %v388 = vadd.f32 %v387, %v349
  %v389 = vadd.f32 %v388, %v365
  %v390 = vadd.f32 %v258, %v274
  %v391 = vadd.f32 %v390, %v290
  %v392 = vadd.f32 %v391, %v306
  %v393 = vadd.f32 %v392, %v322
  %v394 = vadd.f32 %v393, %v338
  %v395 = vadd.f32 %v394, %v354
  %v396 = vadd.f32 %v395, %v370
  %v397 = vadd.f32 %v261, %v277
  %v398 = vadd.f32 %v397, %v293
  %v399 = vadd.f32 %v398, %v309
  %v400 = vadd.f32 %v399, %v325
  %v401 = vadd.f32 %v400, %v341
  %v402 = vadd.f32 %v401, %v357
  %v403 = vadd.f32 %v402, %v373
  %v404 = vmul.f32 %v250, %v250
  %v405 = vmul.f32 %v253, %v253
  %v406 = vmul.f32 %v258, %v258
  %v407 = vmul.f32 %v261, %v261
  %v408 = vmul.f32 %v266, %v266
  %v409 = vmul.f32 %v269, %v269
  %v410 = vmul.f32 %v274, %v274
  %v411 = vmul.f32 %v277, %v277
  %v412 = vmul.f32 %v282, %v282
  %v413 = vmul.f32 %v285, %v285
  %v414 = vmul.f32 %v290, %v290
  %v415 = vmul.f32 %v293, %v293
  %v416 = vmul.f32 %v298, %v298
  %v417 = vmul.f32 %v301, %v301
  %v418 = vmul.f32 %v306, %v306
  %v419 = vmul.f32 %v309, %v309
  %v420 = vmul.f32 %v314, %v314
  %v421 = vmul.f32 %v317, %v317
  %v422 = vmul.f32 %v322, %v322
  %v423 = vmul.f32 %v325, %v325
  %v424 = vmul.f32 %v330, %v330
  %v425 = vmul.f32 %v333, %v333
  %v426 = vmul.f32 %v338, %v338
  %v427 = vmul.f32 %v341, %v341
  %v428 = vmul.f32 %v346, %v346
  %v429 = vmul.f32 %v349, %v349
  %v430 = vmul.f32 %v354, %v354
  %v431 = vmul.f32 %v357, %v357
  %v432 = vmul.f32 %v362, %v362
  %v433 = vmul.f32 %v365, %v365
  %v434 = vmul.f32 %v370, %v370
  %v435 = vmul.f32 %v373, %v373
  %v436 = vadd.f32 %v404, %v408
  %v437 = vadd.f32 %v436, %v412
  %v438 = vadd.f32 %v437, %v416
  %v439 = vadd.f32 %v438, %v420
  %v440 = vadd.f32 %v439, %v424
  %v441 = vadd.f32 %v440, %v428
  %v442 = vadd.f32 %v441, %v432
  %v443 = vadd.f32 %v405, %v409
  %v444 = vadd.f32 %v443, %v413
  %v445 = vadd.f32 %v444, %v417
  %v446 = vadd.f32 %v445, %v421
  %v447 = vadd.f32 %v446, %v425
  %v448 = vadd.f32 %v447, %v429
  %v449 = vadd.f32 %v448, %v433
  %v450 = vadd.f32 %v406, %v410
  %v451 = vadd.f32 %v450, %v414
  %v452 = vadd.f32 %v451, %v418
  %v453 = vadd.f32 %v452, %v422
  %v454 = vadd.f32 %v453, %v426
  %v455 = vadd.f32 %v454, %v430
  %v456 = vadd.f32 %v455, %v434
  %v457 = vadd.f32 %v407, %v411
  %v458 = vadd.f32 %v457, %v415
  %v459 = vadd.f32 %v458, %v419
  %v460 = vadd.f32 %v459, %v423
  %v461 = vadd.f32 %v460, %v427
  %v462 = vadd.f32 %v461, %v431
  %v463 = vadd.f32 %v462, %v435
  %v464 = vld [vmem:[%s4] sm:$0xff]
  %v465 = vadd.f32 %v382, %v389
  %v466 = vadd.f32 %v465, %v396
  %v467 = vadd.f32 %v466, %v403
  %v468 = vadd.f32 %v464, %v467
  %469 = vst [vmem:[%s4] sm:$0xff] %v468
  %s470 = scalar_lea.vmem %s4, 8
  %v471 = vld [vmem:[%s470] sm:$0xff]
  %v472 = vadd.f32 %v442, %v449
  %v473 = vadd.f32 %v472, %v456
  %v474 = vadd.f32 %v473, %v463
  %v475 = vadd.f32 %v471, %v474
  %476 = vst [vmem:[%s470] sm:$0xff] %v475
  // Predicated region
  $region22: #{pointnet_sa_msg_forward.4} parent=0 // pred_check
    _
  $region23: #{pointnet_sa_msg_forward.4} parent=0 // pred_check_branch
    %478 = sbr.rel (0) target = $region25
  $region24: #{pointnet_sa_msg_forward.4} parent=0 // pred_region
    _
  $region25: #{pointnet_sa_msg_forward.4} parent=0 // pred_fallthru
    _
  // Predicated region
  $region26: #{pointnet_sa_msg_forward.4} parent=0 // pred_check
    _
  $region27: #{pointnet_sa_msg_forward.4} parent=0 // pred_check_branch
    %480 = sbr.rel (0) target = $region29
  $region28: #{pointnet_sa_msg_forward.4} parent=0 // pred_region
    _
  $region29: #{pointnet_sa_msg_forward.4} parent=0 // pred_fallthru
    _

// kernel: pointnet_sa_msg_forward.5
$region0: #{pointnet_sa_msg_forward.5}
  #allocation0 [shape = 'u32[]', space=smem, size = 0x4, offset = 0x4, fixed_abs, tag = 'smem constant byte address 0x4 - core index']
  #allocation1 [shape = 'u32[144,128]{1,0:T(1,128)}', space=vmem, size = 0x12000, scoped, tag = 'internal scratch']
  %s0 = inlined_call_operand.vmem [shape: bf16[8,32,16], index: 0, kind: input, shape index: {}]
  %s1 = inlined_call_operand.vmem [shape: bf16[16,128], index: 1, kind: input, shape index: {}]
  %s2 = inlined_call_operand.vmem [shape: bf16[2,128,128], index: 2, kind: input, shape index: {}]
  %s3 = inlined_call_operand.vmem [shape: f32[2,2,128], index: 3, kind: input, shape index: {}]
  %s4 = inlined_call_operand.vmem [shape: f32[2,8,128], index: 4, kind: output, shape index: {0}]
  %s5 = inlined_call_operand.vmem [shape: f32[2,32,128], index: 5, kind: output, shape index: {1}]
  %6 = xla_tuple %s4, %s5
  %s7 = sld [smem:[#allocation0]]
  $region38: #{pointnet_sa_msg_forward.5} parent=0
    _
  %s9 = ssub.s32 1, %s7
  %s10 = scalar_select 0, %s9, %s7
  // Predicated region
  $region2: #{pointnet_sa_msg_forward.5} parent=0 // pred_check
    _
  $region3: #{pointnet_sa_msg_forward.5} parent=0 // pred_check_branch
    %12 = sbr.rel (0) target = $region5
  $region4: #{pointnet_sa_msg_forward.5} parent=0 // pred_region
    %s13 = sadd.s32 0, 0
    %s14 = smul.u32 4, %s13
    %p15 = scmp.lt.s32.totalorder %s14, 3
    %s16 = scalar_select %p15, %s14, 3
    %s17 = smul.addr %s16, 4
    %s18 = scalar_lea.vmem %s0, %s17
    %s19 = sadd.s32 0, 0
    %s20 = smul.u32 4, %s19
  $region5: #{pointnet_sa_msg_forward.5} parent=0 // pred_fallthru
    _
  // Predicated region
  $region6: #{pointnet_sa_msg_forward.5} parent=0 // pred_check
    _
  $region7: #{pointnet_sa_msg_forward.5} parent=0 // pred_check_branch
    %22 = sbr.rel (0) target = $region9
  $region8: #{pointnet_sa_msg_forward.5} parent=0 // pred_region
    _
  $region9: #{pointnet_sa_msg_forward.5} parent=0 // pred_fallthru
    _
  // Predicated region
  $region10: #{pointnet_sa_msg_forward.5} parent=0 // pred_check
    _
  $region11: #{pointnet_sa_msg_forward.5} parent=0 // pred_check_branch
    %24 = sbr.rel (0) target = $region13
  $region12: #{pointnet_sa_msg_forward.5} parent=0 // pred_region
    _
  $region13: #{pointnet_sa_msg_forward.5} parent=0 // pred_fallthru
    _
  // Predicated region
  $region14: #{pointnet_sa_msg_forward.5} parent=0 // pred_check
    _
  $region15: #{pointnet_sa_msg_forward.5} parent=0 // pred_check_branch
    %26 = sbr.rel (0) target = $region17
  $region16: #{pointnet_sa_msg_forward.5} parent=0 // pred_region
    _
  $region17: #{pointnet_sa_msg_forward.5} parent=0 // pred_fallthru
    _
  %s27 = sadd.s32 0, 0
  %s28 = smul.u32 4, %s27
  %p29 = scmp.lt.s32.totalorder %s28, 3
  %s30 = scalar_select %p29, %s28, 3
  %s31 = smul.addr %s30, 4
  %s32 = scalar_lea.vmem %s0, %s31
  %s33 = sadd.s32 0, 0
  %s34 = smul.u32 4, %s33
  %p35 = scmp.lt.s32.totalorder %s34, 3
  %s36 = scalar_select %p35, %s34, 3
  %s37 = smul.addr %s36, 8
  %s38 = scalar_lea.vmem %s5, %s37
  %s39 = sadd.s32 0, 0
  %s40 = smul.u32 4, %s39
  %p41 = scmp.lt.s32.totalorder %s40, 3
  %s42 = scalar_select %p41, %s40, 3
  %s43 = smul.addr %s42, 4
  %s44 = scalar_lea.vmem %s0, %s43
  %s45 = sadd.s32 0, 0
  %s46 = smul.u32 4, %s45
  %s47 = sadd.s32 0, 0
  %s48 = smul.u32 4, %s47
  %p49 = scmp.lt.s32.totalorder %s48, 3
  %s50 = scalar_select %p49, %s48, 3
  %s51 = smul.addr %s50, 8
  %s52 = scalar_lea.vmem %s5, %s51
  %s53 = sadd.s32 0, 0
  %s54 = smul.u32 4, %s53
  %p56 = scmp.eq.s32.totalorder 0, 0
  // Predicated region
  $region18: #{pointnet_sa_msg_forward.5} parent=0 // pred_check
    %p57 = pneg %p56
  $region19: #{pointnet_sa_msg_forward.5} parent=0 // pred_check_branch
    %59 = sbr.rel (%p57) target = $region21
  $region20: #{pointnet_sa_msg_forward.5} parent=0 // pred_region
    %60 = vst [vmem:[%s4] sm:$0xff] 0.0
    %61 = vst [vmem:[%s4 + $0x8] sm:$0xff] 0.0
  $region21: #{pointnet_sa_msg_forward.5} parent=0 // pred_fallthru
    _
  %v62 = vld [vmem:[%s44] sm:$0xf]
  %v63 = vld [vmem:[%s44 + $0x4] sm:$0xf]
  %v64 = vld [vmem:[%s44 + $0x8] sm:$0xf]
  %v65 = vld [vmem:[%s44 + $0xc] sm:$0xf]
  %v66 = vld [vmem:[%s44 + $0x10] sm:$0xf]
  %v67 = vld [vmem:[%s44 + $0x14] sm:$0xf]
  %v68 = vld [vmem:[%s44 + $0x18] sm:$0xf]
  %v69 = vld [vmem:[%s44 + $0x1c] sm:$0xf]
  %v70 = vld [vmem:[%s44 + $0x20] sm:$0xf]
  %v71 = vld [vmem:[%s44 + $0x24] sm:$0xf]
  %v72 = vld [vmem:[%s44 + $0x28] sm:$0xf]
  %v73 = vld [vmem:[%s44 + $0x2c] sm:$0xf]
  %v74 = vld [vmem:[%s44 + $0x30] sm:$0xf]
  %v75 = vld [vmem:[%s44 + $0x34] sm:$0xf]
  %v76 = vld [vmem:[%s44 + $0x38] sm:$0xf]
  %v77 = vld [vmem:[%s44 + $0x3c] sm:$0xf]
  %v78 = vld [vmem:[%s44 + $0x40] sm:$0xf]
  %v79 = vld [vmem:[%s44 + $0x44] sm:$0xf]
  %v80 = vld [vmem:[%s44 + $0x48] sm:$0xf]
  %v81 = vld [vmem:[%s44 + $0x4c] sm:$0xf]
  %v82 = vld [vmem:[%s44 + $0x50] sm:$0xf]
  %v83 = vld [vmem:[%s44 + $0x54] sm:$0xf]
  %v84 = vld [vmem:[%s44 + $0x58] sm:$0xf]
  %v85 = vld [vmem:[%s44 + $0x5c] sm:$0xf]
  %v86 = vld [vmem:[%s44 + $0x60] sm:$0xf]
  %v87 = vld [vmem:[%s44 + $0x64] sm:$0xf]
  %v88 = vld [vmem:[%s44 + $0x68] sm:$0xf]
  %v89 = vld [vmem:[%s44 + $0x6c] sm:$0xf]
  %v90 = vld [vmem:[%s44 + $0x70] sm:$0xf]
  %v91 = vld [vmem:[%s44 + $0x74] sm:$0xf]
  %v92 = vld [vmem:[%s44 + $0x78] sm:$0xf]
  %v93 = vld [vmem:[%s44 + $0x7c] sm:$0xf]
  %v94 = vld [vmem:[%s1] sm:$0xf]
  %v95 = vld [vmem:[%s1 + $0x4] sm:$0xf]
  %v128 = vunpack.c.l.b16 %v62
  %v129 = vunpack.c.l.b16 %v63
  %v130 = vunpack.c.l.b16 %v64
  %v131 = vunpack.c.l.b16 %v65
  %v132 = vunpack.c.l.b16 %v66
  %v133 = vunpack.c.l.b16 %v67
  %v134 = vunpack.c.l.b16 %v68
  %v135 = vunpack.c.l.b16 %v69
  %v136 = vunpack.c.l.b16 %v70
  %v137 = vunpack.c.l.b16 %v71
  %v138 = vunpack.c.l.b16 %v72
  %v139 = vunpack.c.l.b16 %v73
  %v140 = vunpack.c.l.b16 %v74
  %v141 = vunpack.c.l.b16 %v75
  %v142 = vunpack.c.l.b16 %v76
  %v143 = vunpack.c.l.b16 %v77
  %v144 = vunpack.c.l.b16 %v78
  %v145 = vunpack.c.l.b16 %v79
  %v146 = vunpack.c.l.b16 %v80
  %v147 = vunpack.c.l.b16 %v81
  %v148 = vunpack.c.l.b16 %v82
  %v149 = vunpack.c.l.b16 %v83
  %v150 = vunpack.c.l.b16 %v84
  %v151 = vunpack.c.l.b16 %v85
  %v152 = vunpack.c.l.b16 %v86
  %v153 = vunpack.c.l.b16 %v87
  %v154 = vunpack.c.l.b16 %v88
  %v155 = vunpack.c.l.b16 %v89
  %v156 = vunpack.c.l.b16 %v90
  %v157 = vunpack.c.l.b16 %v91
  %v158 = vunpack.c.l.b16 %v92
  %v159 = vunpack.c.l.b16 %v93
  %v160 = vpack.c.b16 %v129, %v128
  %v161 = vpack.c.b16 %v131, %v130
  %v162 = vpack.c.b16 %v133, %v132
  %v163 = vpack.c.b16 %v135, %v134
  %v164 = vpack.c.b16 %v137, %v136
  %v165 = vpack.c.b16 %v139, %v138
  %v166 = vpack.c.b16 %v141, %v140
  %v167 = vpack.c.b16 %v143, %v142
  %v168 = vpack.c.b16 %v145, %v144
  %v169 = vpack.c.b16 %v147, %v146
  %v170 = vpack.c.b16 %v149, %v148
  %v171 = vpack.c.b16 %v151, %v150
  %v172 = vpack.c.b16 %v153, %v152
  %v173 = vpack.c.b16 %v155, %v154
  %v174 = vpack.c.b16 %v157, %v156
  %v175 = vpack.c.b16 %v159, %v158
  %v178 = vunpack.c.l.b16 %v94
  %v179 = vunpack.c.l.b16 %v95
  %v180 = vpack.c.b16 %v179, %v178
  %vm182 = vcmask 130048
  %v184 = vsel %vm182, %v160, 0
  %v187 = vsel %vm182, %v161, 0
  %v190 = vsel %vm182, %v162, 0
  %v193 = vsel %vm182, %v163, 0
  %v196 = vsel %vm182, %v164, 0
  %v199 = vsel %vm182, %v165, 0
  %v202 = vsel %vm182, %v166, 0
  %v205 = vsel %vm182, %v167, 0
  %v208 = vsel %vm182, %v168, 0
  %v211 = vsel %vm182, %v169, 0
  %v214 = vsel %vm182, %v170, 0
  %v217 = vsel %vm182, %v171, 0
  %v220 = vsel %vm182, %v172, 0
  %v223 = vsel %vm182, %v173, 0
  %v226 = vsel %vm182, %v174, 0
  %v229 = vsel %vm182, %v175, 0
  %231 = vmatprep.subr.bf16.mxu0 0
  %232 = vmatpush1.bf16.msra.mxu0 %v180
  %233 = vmatprep.subr.bf16.mxu0 0
  %234 = vmatpush1.bf16.msra.mxu0 0
  %235 = vmatprep.subr.bf16.mxu0 0
  %236 = vmatpush1.bf16.msra.mxu0 0
  %237 = vmatprep.subr.bf16.mxu0 0
  %238 = vmatpush1.bf16.msra.mxu0 0
  %239 = vmatprep.subr.bf16.mxu0 0
  %240 = vmatpush1.bf16.msra.mxu0 0
  %241 = vmatprep.subr.bf16.mxu0 0
  %242 = vmatpush1.bf16.msra.mxu0 0
  %243 = vmatprep.subr.bf16.mxu0 0
  %244 = vmatpush1.bf16.msra.mxu0 0
  %245 = vmatprep.subr.bf16.mxu0 0
  %246 = vmatpush1.bf16.msra.mxu0 0
  %247 = vmatprep.subr.bf16.mxu0 0
  %248 = vmatpush1.bf16.msra.mxu0 0
  %249 = vmatprep.subr.bf16.mxu0 0
  %250 = vmatpush1.bf16.msra.mxu0 0
  %251 = vmatprep.subr.bf16.mxu0 0
  %252 = vmatpush1.bf16.msra.mxu0 0
  %253 = vmatprep.subr.bf16.mxu0 0
  %254 = vmatpush1.bf16.msra.mxu0 0
  %255 = vmatprep.subr.bf16.mxu0 0
  %256 = vmatpush1.bf16.msra.mxu0 0
  %257 = vmatprep.subr.bf16.mxu0 0
  %258 = vmatpush1.bf16.msra.mxu0 0
  %259 = vmatprep.subr.bf16.mxu0 0
  %260 = vmatpush1.bf16.msra.mxu0 0
  %261 = vmatprep.subr.bf16.mxu0 0
  %262 = vmatpush1.bf16.msra.mxu0 0
  %263 = vmatprep.mubr.bf16.mxu0 0
  %264 = vmatmul.mubr.bf16.gmra.mrb[0].mxu0 %v184
  %v265 = vpop.f32.mrb[0].mxu0
  %v266 = vadd.f32 0.0, %v265
  %v267 = vpop.f32.mrb[0].mxu0
  %v268 = vpop.f32.mrb[0].mxu0
  %v269 = vadd.f32 0.0, %v268
  %v270 = vpop.f32.mrb[0].mxu0
  %271 = vmatprep.mubr.bf16.mxu0 0
  %272 = vmatmul.mubr.bf16.gmra.mrb[0].mxu0 %v187
  %v273 = vpop.f32.mrb[0].mxu0
  %v274 = vadd.f32 0.0, %v273
  %v275 = vpop.f32.mrb[0].mxu0
  %v276 = vpop.f32.mrb[0].mxu0
  %v277 = vadd.f32 0.0, %v276
  %v278 = vpop.f32.mrb[0].mxu0
  %279 = vmatprep.mubr.bf16.mxu0 0
  %280 = vmatmul.mubr.bf16.gmra.mrb[0].mxu0 %v190
  %v281 = vpop.f32.mrb[0].mxu0
  %v282 = vadd.f32 0.0, %v281
  %v283 = vpop.f32.mrb[0].mxu0
  %v284 = vpop.f32.mrb[0].mxu0
  %v285 = vadd.f32 0.0, %v284
  %v286 = vpop.f32.mrb[0].mxu0
  %287 = vmatprep.mubr.bf16.mxu0 0
  %288 = vmatmul.mubr.bf16.gmra.mrb[0].mxu0 %v193
  %v289 = vpop.f32.mrb[0].mxu0
  %v290 = vadd.f32 0.0, %v289
  %v291 = vpop.f32.mrb[0].mxu0
  %v292 = vpop.f32.mrb[0].mxu0
  %v293 = vadd.f32 0.0, %v292
  %v294 = vpop.f32.mrb[0].mxu0
  %295 = vmatprep.mubr.bf16.mxu0 0
  %296 = vmatmul.mubr.bf16.gmra.mrb[0].mxu0 %v196
  %v297 = vpop.f32.mrb[0].mxu0
  %v298 = vadd.f32 0.0, %v297
  %v299 = vpop.f32.mrb[0].mxu0
  %v300 = vpop.f32.mrb[0].mxu0
  %v301 = vadd.f32 0.0, %v300
  %v302 = vpop.f32.mrb[0].mxu0
  %303 = vmatprep.mubr.bf16.mxu0 0
  %304 = vmatmul.mubr.bf16.gmra.mrb[0].mxu0 %v199
  %v305 = vpop.f32.mrb[0].mxu0
  %v306 = vadd.f32 0.0, %v305
  %v307 = vpop.f32.mrb[0].mxu0
  %v308 = vpop.f32.mrb[0].mxu0
  %v309 = vadd.f32 0.0, %v308
  %v310 = vpop.f32.mrb[0].mxu0
  %311 = vmatprep.mubr.bf16.mxu0 0
  %312 = vmatmul.mubr.bf16.gmra.mrb[0].mxu0 %v202
  %v313 = vpop.f32.mrb[0].mxu0
  %v314 = vadd.f32 0.0, %v313
  %v315 = vpop.f32.mrb[0].mxu0
  %v316 = vpop.f32.mrb[0].mxu0
  %v317 = vadd.f32 0.0, %v316
  %v318 = vpop.f32.mrb[0].mxu0
  %319 = vmatprep.mubr.bf16.mxu0 0
  %320 = vmatmul.mubr.bf16.gmra.mrb[0].mxu0 %v205
  %v321 = vpop.f32.mrb[0].mxu0
  %v322 = vadd.f32 0.0, %v321
  %v323 = vpop.f32.mrb[0].mxu0
  %v324 = vpop.f32.mrb[0].mxu0
  %v325 = vadd.f32 0.0, %v324
  %v326 = vpop.f32.mrb[0].mxu0
  %327 = vmatprep.mubr.bf16.mxu0 0
  %328 = vmatmul.mubr.bf16.gmra.mrb[0].mxu0 %v208
  %v329 = vpop.f32.mrb[0].mxu0
  %v330 = vadd.f32 0.0, %v329
  %v331 = vpop.f32.mrb[0].mxu0
  %v332 = vpop.f32.mrb[0].mxu0
  %v333 = vadd.f32 0.0, %v332
  %v334 = vpop.f32.mrb[0].mxu0
  %335 = vmatprep.mubr.bf16.mxu0 0
  %336 = vmatmul.mubr.bf16.gmra.mrb[0].mxu0 %v211
  %v337 = vpop.f32.mrb[0].mxu0
  %v338 = vadd.f32 0.0, %v337
  %v339 = vpop.f32.mrb[0].mxu0
  %v340 = vpop.f32.mrb[0].mxu0
  %v341 = vadd.f32 0.0, %v340
  %v342 = vpop.f32.mrb[0].mxu0
  %343 = vmatprep.mubr.bf16.mxu0 0
  %344 = vmatmul.mubr.bf16.gmra.mrb[0].mxu0 %v214
  %v345 = vpop.f32.mrb[0].mxu0
  %v346 = vadd.f32 0.0, %v345
  %v347 = vpop.f32.mrb[0].mxu0
  %v348 = vpop.f32.mrb[0].mxu0
  %v349 = vadd.f32 0.0, %v348
  %v350 = vpop.f32.mrb[0].mxu0
  %351 = vmatprep.mubr.bf16.mxu0 0
  %352 = vmatmul.mubr.bf16.gmra.mrb[0].mxu0 %v217
  %v353 = vpop.f32.mrb[0].mxu0
  %v354 = vadd.f32 0.0, %v353
  %v355 = vpop.f32.mrb[0].mxu0
  %v356 = vpop.f32.mrb[0].mxu0
  %v357 = vadd.f32 0.0, %v356
  %v358 = vpop.f32.mrb[0].mxu0
  %359 = vmatprep.mubr.bf16.mxu0 0
  %360 = vmatmul.mubr.bf16.gmra.mrb[0].mxu0 %v220
  %v361 = vpop.f32.mrb[0].mxu0
  %v362 = vadd.f32 0.0, %v361
  %v363 = vpop.f32.mrb[0].mxu0
  %v364 = vpop.f32.mrb[0].mxu0
  %v365 = vadd.f32 0.0, %v364
  %v366 = vpop.f32.mrb[0].mxu0
  %367 = vmatprep.mubr.bf16.mxu0 0
  %368 = vmatmul.mubr.bf16.gmra.mrb[0].mxu0 %v223
  %v369 = vpop.f32.mrb[0].mxu0
  %v370 = vadd.f32 0.0, %v369
  %v371 = vpop.f32.mrb[0].mxu0
  %v372 = vpop.f32.mrb[0].mxu0
  %v373 = vadd.f32 0.0, %v372
  %v374 = vpop.f32.mrb[0].mxu0
  %375 = vmatprep.mubr.bf16.mxu0 0
  %376 = vmatmul.mubr.bf16.gmra.mrb[0].mxu0 %v226
  %v377 = vpop.f32.mrb[0].mxu0
  %v378 = vadd.f32 0.0, %v377
  %v379 = vpop.f32.mrb[0].mxu0
  %v380 = vpop.f32.mrb[0].mxu0
  %v381 = vadd.f32 0.0, %v380
  %v382 = vpop.f32.mrb[0].mxu0
  %383 = vmatprep.mubr.bf16.mxu0 0
  %384 = vmatmul.mubr.bf16.gmra.mrb[0].mxu0 %v229
  %v385 = vpop.f32.mrb[0].mxu0
  %v386 = vadd.f32 0.0, %v385
  %v387 = vpop.f32.mrb[0].mxu0
  %v388 = vpop.f32.mrb[0].mxu0
  %v389 = vadd.f32 0.0, %v388
  %v390 = vpop.f32.mrb[0].mxu0
  %391 = vdwg.mxu0
  %v392 = vld [vmem:[%s3] sm:$0x3]
  %v393 = vlaneseq
  %v394 = vshrl.u32 %v393, 7
  %v395 = vsub.s32 0, %v394
  %v396 = vrot.slane %v392, %v395
  %v397 = vmul.f32 %v266, %v396
  %v398 = vmul.f32 %v269, %v396
  %v399 = vmul.f32 %v274, %v396
  %v400 = vmul.f32 %v277, %v396
  %v401 = vmul.f32 %v282, %v396
  %v402 = vmul.f32 %v285, %v396
  %v403 = vmul.f32 %v290, %v396
  %v404 = vmul.f32 %v293, %v396
  %v405 = vmul.f32 %v298, %v396
  %v406 = vmul.f32 %v301, %v396
  %v407 = vmul.f32 %v306, %v396
  %v408 = vmul.f32 %v309, %v396
  %v409 = vmul.f32 %v314, %v396
  %v410 = vmul.f32 %v317, %v396
  %v411 = vmul.f32 %v322, %v396
  %v412 = vmul.f32 %v325, %v396
  %v413 = vmul.f32 %v330, %v396
  %v414 = vmul.f32 %v333, %v396
  %v415 = vmul.f32 %v338, %v396
  %v416 = vmul.f32 %v341, %v396
  %v417 = vmul.f32 %v346, %v396
  %v418 = vmul.f32 %v349, %v396
  %v419 = vmul.f32 %v354, %v396
  %v420 = vmul.f32 %v357, %v396
  %v421 = vmul.f32 %v362, %v396
  %v422 = vmul.f32 %v365, %v396
  %v423 = vmul.f32 %v370, %v396
  %v424 = vmul.f32 %v373, %v396
  %v425 = vmul.f32 %v378, %v396
  %v426 = vmul.f32 %v381, %v396
  %v427 = vmul.f32 %v386, %v396
  %v428 = vmul.f32 %v389, %v396
  %v429 = vlaneseq
  %v430 = vshrl.u32 %v429, 7
  %v431 = vsub.s32 1, %v430
  %v432 = vrot.slane %v392, %v431
  %v433 = vadd.f32 %v397, %v432
  %v434 = vadd.f32 %v398, %v432
  %v435 = vadd.f32 %v399, %v432
  %v436 = vadd.f32 %v400, %v432
  %v437 = vadd.f32 %v401, %v432
  %v438 = vadd.f32 %v402, %v432
  %v439 = vadd.f32 %v403, %v432
  %v440 = vadd.f32 %v404, %v432
  %v441 = vadd.f32 %v405, %v432
  %v442 = vadd.f32 %v406, %v432
  %v443 = vadd.f32 %v407, %v432
  %v444 = vadd.f32 %v408, %v432
  %v445 = vadd.f32 %v409, %v432
  %v446 = vadd.f32 %v410, %v432
  %v447 = vadd.f32 %v411, %v432
  %v448 = vadd.f32 %v412, %v432
  %v449 = vadd.f32 %v413, %v432
  %v450 = vadd.f32 %v414, %v432
  %v451 = vadd.f32 %v415, %v432
  %v452 = vadd.f32 %v416, %v432
  %v453 = vadd.f32 %v417, %v432
  %v454 = vadd.f32 %v418, %v432
  %v455 = vadd.f32 %v419, %v432
  %v456 = vadd.f32 %v420, %v432
  %v457 = vadd.f32 %v421, %v432
  %v458 = vadd.f32 %v422, %v432
  %v459 = vadd.f32 %v423, %v432
  %v460 = vadd.f32 %v424, %v432
  %v461 = vadd.f32 %v425, %v432
  %v462 = vadd.f32 %v426, %v432
  %v463 = vadd.f32 %v427, %v432
  %v464 = vadd.f32 %v428, %v432
  %v465 = vmax.f32 %v433, 0.0
  %v466 = vmax.f32 %v434, 0.0
  %v467 = vmax.f32 %v435, 0.0
  %v468 = vmax.f32 %v436, 0.0
  %v469 = vmax.f32 %v437, 0.0
  %v470 = vmax.f32 %v438, 0.0
  %v471 = vmax.f32 %v439, 0.0
  %v472 = vmax.f32 %v440, 0.0
  %v473 = vmax.f32 %v441, 0.0
  %v474 = vmax.f32 %v442, 0.0
  %v475 = vmax.f32 %v443, 0.0
  %v476 = vmax.f32 %v444, 0.0
  %v477 = vmax.f32 %v445, 0.0
  %v478 = vmax.f32 %v446, 0.0
  %v479 = vmax.f32 %v447, 0.0
  %v480 = vmax.f32 %v448, 0.0
  %v481 = vmax.f32 %v449, 0.0
  %v482 = vmax.f32 %v450, 0.0
  %v483 = vmax.f32 %v451, 0.0
  %v484 = vmax.f32 %v452, 0.0
  %v485 = vmax.f32 %v453, 0.0
  %v486 = vmax.f32 %v454, 0.0
  %v487 = vmax.f32 %v455, 0.0
  %v488 = vmax.f32 %v456, 0.0
  %v489 = vmax.f32 %v457, 0.0
  %v490 = vmax.f32 %v458, 0.0
  %v491 = vmax.f32 %v459, 0.0
  %v492 = vmax.f32 %v460, 0.0
  %v493 = vmax.f32 %v461, 0.0
  %v494 = vmax.f32 %v462, 0.0
  %v495 = vmax.f32 %v463, 0.0
  %v496 = vmax.f32 %v464, 0.0
  %v497 = vpack.c.bf16 %v466, %v465
  %v498 = vpack.c.bf16 %v468, %v467
  %v499 = vpack.c.bf16 %v470, %v469
  %v500 = vpack.c.bf16 %v472, %v471
  %v501 = vpack.c.bf16 %v474, %v473
  %v502 = vpack.c.bf16 %v476, %v475
  %v503 = vpack.c.bf16 %v478, %v477
  %v504 = vpack.c.bf16 %v480, %v479
  %v505 = vpack.c.bf16 %v482, %v481
  %v506 = vpack.c.bf16 %v484, %v483
  %v507 = vpack.c.bf16 %v486, %v485
  %v508 = vpack.c.bf16 %v488, %v487
  %v509 = vpack.c.bf16 %v490, %v489
  %v510 = vpack.c.bf16 %v492, %v491
  %v511 = vpack.c.bf16 %v494, %v493
  %v512 = vpack.c.bf16 %v496, %v495
  %s513 = scalar_lea.vmem %s2, 64
  %v514 = vld [vmem:[%s513] sm:$0xf]
  %v515 = vld [vmem:[%s513 + $0x4] sm:$0xf]
  %v516 = vld [vmem:[%s513 + $0x8] sm:$0xf]
  %v517 = vld [vmem:[%s513 + $0xc] sm:$0xf]
  %v518 = vld [vmem:[%s513 + $0x10] sm:$0xf]
  %v519 = vld [vmem:[%s513 + $0x14] sm:$0xf]
  %v520 = vld [vmem:[%s513 + $0x18] sm:$0xf]
  %v521 = vld [vmem:[%s513 + $0x1c] sm:$0xf]
  %v522 = vld [vmem:[%s513 + $0x20] sm:$0xf]
  %v523 = vld [vmem:[%s513 + $0x24] sm:$0xf]
  %v524 = vld [vmem:[%s513 + $0x28] sm:$0xf]
  %v525 = vld [vmem:[%s513 + $0x2c] sm:$0xf]
  %v526 = vld [vmem:[%s513 + $0x30] sm:$0xf]
  %v527 = vld [vmem:[%s513 + $0x34] sm:$0xf]
  %v528 = vld [vmem:[%s513 + $0x38] sm:$0xf]
  %v529 = vld [vmem:[%s513 + $0x3c] sm:$0xf]
  %v546 = vunpack.c.l.b16 %v514
  %v547 = vunpack.c.l.b16 %v515
  %v548 = vunpack.c.l.b16 %v516
  %v549 = vunpack.c.l.b16 %v517
  %v550 = vunpack.c.l.b16 %v518
  %v551 = vunpack.c.l.b16 %v519
  %v552 = vunpack.c.l.b16 %v520
  %v553 = vunpack.c.l.b16 %v521
  %v554 = vunpack.c.l.b16 %v522
  %v555 = vunpack.c.l.b16 %v523
  %v556 = vunpack.c.l.b16 %v524
  %v557 = vunpack.c.l.b16 %v525
  %v558 = vunpack.c.l.b16 %v526
  %v559 = vunpack.c.l.b16 %v527
  %v560 = vunpack.c.l.b16 %v528
  %v561 = vunpack.c.l.b16 %v529
  %v562 = vpack.c.b16 %v547, %v546
  %v563 = vpack.c.b16 %v549, %v548
  %v564 = vpack.c.b16 %v551, %v550
  %v565 = vpack.c.b16 %v553, %v552
  %v566 = vpack.c.b16 %v555, %v554
  %v567 = vpack.c.b16 %v557, %v556
  %v568 = vpack.c.b16 %v559, %v558
  %v569 = vpack.c.b16 %v561, %v560
  %578 = vmatprep.subr.bf16.mxu0 0
  %579 = vmatpush1.bf16.msra.mxu0 %v562
  %580 = vmatprep.subr.bf16.mxu0 0
  %581 = vmatpush1.bf16.msra.mxu0 %v563
  %582 = vmatprep.subr.bf16.mxu0 0
  %583 = vmatpush1.bf16.msra.mxu0 %v564
  %584 = vmatprep.subr.bf16.mxu0 0
  %585 = vmatpush1.bf16.msra.mxu0 %v565
  %586 = vmatprep.subr.bf16.mxu0 0
  %587 = vmatpush1.bf16.msra.mxu0 %v566
  %588 = vmatprep.subr.bf16.mxu0 0
  %589 = vmatpush1.bf16.msra.mxu0 %v567
  %590 = vmatprep.subr.bf16.mxu0 0
  %591 = vmatpush1.bf16.msra.mxu0 %v568
  %592 = vmatprep.subr.bf16.mxu0 0
  %593 = vmatpush1.bf16.msra.mxu0 %v569
  %594 = vmatprep.subr.bf16.mxu0 0
  %595 = vmatpush1.bf16.msra.mxu0 0
  %596 = vmatprep.subr.bf16.mxu0 0
  %597 = vmatpush1.bf16.msra.mxu0 0
  %598 = vmatprep.subr.bf16.mxu0 0
  %599 = vmatpush1.bf16.msra.mxu0 0
  %600 = vmatprep.subr.bf16.mxu0 0
  %601 = vmatpush1.bf16.msra.mxu0 0
  %602 = vmatprep.subr.bf16.mxu0 0
  %603 = vmatpush1.bf16.msra.mxu0 0
  %604 = vmatprep.subr.bf16.mxu0 0
  %605 = vmatpush1.bf16.msra.mxu0 0
  %606 = vmatprep.subr.bf16.mxu0 0
  %607 = vmatpush1.bf16.msra.mxu0 0
  %608 = vmatprep.subr.bf16.mxu0 0
  %609 = vmatpush1.bf16.msra.mxu0 0
  %610 = vmatprep.mubr.bf16.mxu0 0
  %611 = vmatmul.mubr.bf16.gmra.mrb[0].mxu0 %v497
  %v612 = vpop.f32.mrb[0].mxu0
  %v613 = vadd.f32 0.0, %v612
  %v614 = vpop.f32.mrb[0].mxu0
  %v615 = vpop.f32.mrb[0].mxu0
  %v616 = vadd.f32 0.0, %v615
  %v617 = vpop.f32.mrb[0].mxu0
  %618 = vmatprep.mubr.bf16.mxu0 0
  %619 = vmatmul.mubr.bf16.gmra.mrb[0].mxu0 %v498
  %v620 = vpop.f32.mrb[0].mxu0
  %v621 = vadd.f32 0.0, %v620
  %v622 = vpop.f32.mrb[0].mxu0
  %v623 = vpop.f32.mrb[0].mxu0
  %v624 = vadd.f32 0.0, %v623
  %v625 = vpop.f32.mrb[0].mxu0
  %626 = vmatprep.mubr.bf16.mxu0 0
  %627 = vmatmul.mubr.bf16.gmra.mrb[0].mxu0 %v499
  %v628 = vpop.f32.mrb[0].mxu0
  %v629 = vadd.f32 0.0, %v628
  %v630 = vpop.f32.mrb[0].mxu0
  %v631 = vpop.f32.mrb[0].mxu0
  %v632 = vadd.f32 0.0, %v631
  %v633 = vpop.f32.mrb[0].mxu0
  %634 = vmatprep.mubr.bf16.mxu0 0
  %635 = vmatmul.mubr.bf16.gmra.mrb[0].mxu0 %v500
  %v636 = vpop.f32.mrb[0].mxu0
  %v637 = vadd.f32 0.0, %v636
  %v638 = vpop.f32.mrb[0].mxu0
  %v639 = vpop.f32.mrb[0].mxu0
  %v640 = vadd.f32 0.0, %v639
  %v641 = vpop.f32.mrb[0].mxu0
  %642 = vmatprep.mubr.bf16.mxu0 0
  %643 = vmatmul.mubr.bf16.gmra.mrb[0].mxu0 %v501
  %v644 = vpop.f32.mrb[0].mxu0
  %v645 = vadd.f32 0.0, %v644
  %v646 = vpop.f32.mrb[0].mxu0
  %v647 = vpop.f32.mrb[0].mxu0
  %v648 = vadd.f32 0.0, %v647
  %v649 = vpop.f32.mrb[0].mxu0
  %650 = vmatprep.mubr.bf16.mxu0 0
  %651 = vmatmul.mubr.bf16.gmra.mrb[0].mxu0 %v502
  %v652 = vpop.f32.mrb[0].mxu0
  %v653 = vadd.f32 0.0, %v652
  %v654 = vpop.f32.mrb[0].mxu0
  %v655 = vpop.f32.mrb[0].mxu0
  %v656 = vadd.f32 0.0, %v655
  %v657 = vpop.f32.mrb[0].mxu0
  %658 = vmatprep.mubr.bf16.mxu0 0
  %659 = vmatmul.mubr.bf16.gmra.mrb[0].mxu0 %v503
  %v660 = vpop.f32.mrb[0].mxu0
  %v661 = vadd.f32 0.0, %v660
  %v662 = vpop.f32.mrb[0].mxu0
  %v663 = vpop.f32.mrb[0].mxu0
  %v664 = vadd.f32 0.0, %v663
  %v665 = vpop.f32.mrb[0].mxu0
  %666 = vmatprep.mubr.bf16.mxu0 0
  %667 = vmatmul.mubr.bf16.gmra.mrb[0].mxu0 %v504
  %v668 = vpop.f32.mrb[0].mxu0
  %v669 = vadd.f32 0.0, %v668
  %v670 = vpop.f32.mrb[0].mxu0
  %v671 = vpop.f32.mrb[0].mxu0
  %v672 = vadd.f32 0.0, %v671
  %v673 = vpop.f32.mrb[0].mxu0
  %674 = vmatprep.mubr.bf16.mxu0 0
  %675 = vmatmul.mubr.bf16.gmra.mrb[0].mxu0 %v505
  %v676 = vpop.f32.mrb[0].mxu0
  %v677 = vadd.f32 0.0, %v676
  %v678 = vpop.f32.mrb[0].mxu0
  %v679 = vpop.f32.mrb[0].mxu0
  %v680 = vadd.f32 0.0, %v679
  %v681 = vpop.f32.mrb[0].mxu0
  %682 = vmatprep.mubr.bf16.mxu0 0
  %683 = vmatmul.mubr.bf16.gmra.mrb[0].mxu0 %v506
  %v684 = vpop.f32.mrb[0].mxu0
  %v685 = vadd.f32 0.0, %v684
  %v686 = vpop.f32.mrb[0].mxu0
  %v687 = vpop.f32.mrb[0].mxu0
  %v688 = vadd.f32 0.0, %v687
  %v689 = vpop.f32.mrb[0].mxu0
  %690 = vmatprep.mubr.bf16.mxu0 0
  %691 = vmatmul.mubr.bf16.gmra.mrb[0].mxu0 %v507
  %v692 = vpop.f32.mrb[0].mxu0
  %v693 = vadd.f32 0.0, %v692
  %v694 = vpop.f32.mrb[0].mxu0
  %v695 = vpop.f32.mrb[0].mxu0
  %v696 = vadd.f32 0.0, %v695
  %v697 = vpop.f32.mrb[0].mxu0
  %698 = vmatprep.mubr.bf16.mxu0 0
  %699 = vmatmul.mubr.bf16.gmra.mrb[0].mxu0 %v508
  %v700 = vpop.f32.mrb[0].mxu0
  %v701 = vadd.f32 0.0, %v700
  %v702 = vpop.f32.mrb[0].mxu0
  %v703 = vpop.f32.mrb[0].mxu0
  %v704 = vadd.f32 0.0, %v703
  %v705 = vpop.f32.mrb[0].mxu0
  %706 = vmatprep.mubr.bf16.mxu0 0
  %707 = vmatmul.mubr.bf16.gmra.mrb[0].mxu0 %v509
  %v708 = vpop.f32.mrb[0].mxu0
  %v709 = vadd.f32 0.0, %v708
  %v710 = vpop.f32.mrb[0].mxu0
  %v711 = vpop.f32.mrb[0].mxu0
  %v712 = vadd.f32 0.0, %v711
  %v713 = vpop.f32.mrb[0].mxu0
  %714 = vmatprep.mubr.bf16.mxu0 0
  %715 = vmatmul.mubr.bf16.gmra.mrb[0].mxu0 %v510
  %v716 = vpop.f32.mrb[0].mxu0
  %v717 = vadd.f32 0.0, %v716
  %v718 = vpop.f32.mrb[0].mxu0
  %v719 = vpop.f32.mrb[0].mxu0
  %v720 = vadd.f32 0.0, %v719
  %v721 = vpop.f32.mrb[0].mxu0
  %722 = vmatprep.mubr.bf16.mxu0 0
  %723 = vmatmul.mubr.bf16.gmra.mrb[0].mxu0 %v511
  %v724 = vpop.f32.mrb[0].mxu0
  %v725 = vadd.f32 0.0, %v724
  %v726 = vpop.f32.mrb[0].mxu0
  %v727 = vpop.f32.mrb[0].mxu0
  %v728 = vadd.f32 0.0, %v727
  %v729 = vpop.f32.mrb[0].mxu0
  %730 = vmatprep.mubr.bf16.mxu0 0
  %731 = vmatmul.mubr.bf16.gmra.mrb[0].mxu0 %v512
  %v732 = vpop.f32.mrb[0].mxu0
  %v733 = vadd.f32 0.0, %v732
  %v734 = vpop.f32.mrb[0].mxu0
  %v735 = vpop.f32.mrb[0].mxu0
  %v736 = vadd.f32 0.0, %v735
  %v737 = vpop.f32.mrb[0].mxu0
  %738 = vdwg.mxu0
  %v739 = vadd.f32 %v613, %v629
  %v740 = vadd.f32 %v739, %v645
  %v741 = vadd.f32 %v740, %v661
  %v742 = vadd.f32 %v741, %v677
  %v743 = vadd.f32 %v742, %v693
  %v744 = vadd.f32 %v743, %v709
  %v745 = vadd.f32 %v744, %v725
  %v746 = vadd.f32 %v616, %v632
  %v747 = vadd.f32 %v746, %v648
  %v748 = vadd.f32 %v747, %v664
  %v749 = vadd.f32 %v748, %v680
  %v750 = vadd.f32 %v749, %v696
  %v751 = vadd.f32 %v750, %v712
  %v752 = vadd.f32 %v751, %v728
  %v753 = vadd.f32 %v621, %v637
  %v754 = vadd.f32 %v753, %v653
  %v755 = vadd.f32 %v754, %v669
  %v756 = vadd.f32 %v755, %v685
  %v757 = vadd.f32 %v756, %v701
  %v758 = vadd.f32 %v757, %v717
  %v759 = vadd.f32 %v758, %v733
  %v760 = vadd.f32 %v624, %v640
  %v761 = vadd.f32 %v760, %v656
  %v762 = vadd.f32 %v761, %v672
  %v763 = vadd.f32 %v762, %v688
  %v764 = vadd.f32 %v763, %v704
  %v765 = vadd.f32 %v764, %v720
  %v766 = vadd.f32 %v765, %v736
  %v767 = vmul.f32 %v613, %v613
  %v768 = vmul.f32 %v616, %v616
  %v769 = vmul.f32 %v621, %v621
  %v770 = vmul.f32 %v624, %v624
  %v771 = vmul.f32 %v629, %v629
  %v772 = vmul.f32 %v632, %v632
  %v773 = vmul.f32 %v637, %v637
  %v774 = vmul.f32 %v640, %v640
  %v775 = vmul.f32 %v645, %v645
  %v776 = vmul.f32 %v648, %v648
  %v777 = vmul.f32 %v653, %v653
  %v778 = vmul.f32 %v656, %v656
  %v779 = vmul.f32 %v661, %v661
  %v780 = vmul.f32 %v664, %v664
  %v781 = vmul.f32 %v669, %v669
  %v782 = vmul.f32 %v672, %v672
  %v783 = vmul.f32 %v677, %v677
  %v784 = vmul.f32 %v680, %v680
  %v785 = vmul.f32 %v685, %v685
  %v786 = vmul.f32 %v688, %v688
  %v787 = vmul.f32 %v693, %v693
  %v788 = vmul.f32 %v696, %v696
  %v789 = vmul.f32 %v701, %v701
  %v790 = vmul.f32 %v704, %v704
  %v791 = vmul.f32 %v709, %v709
  %v792 = vmul.f32 %v712, %v712
  %v793 = vmul.f32 %v717, %v717
  %v794 = vmul.f32 %v720, %v720
  %v795 = vmul.f32 %v725, %v725
  %v796 = vmul.f32 %v728, %v728
  %v797 = vmul.f32 %v733, %v733
  %v798 = vmul.f32 %v736, %v736
  %v799 = vadd.f32 %v767, %v771
  %v800 = vadd.f32 %v799, %v775
  %v801 = vadd.f32 %v800, %v779
  %v802 = vadd.f32 %v801, %v783
  %v803 = vadd.f32 %v802, %v787
  %v804 = vadd.f32 %v803, %v791
  %v805 = vadd.f32 %v804, %v795
  %v806 = vadd.f32 %v768, %v772
  %v807 = vadd.f32 %v806, %v776
  %v808 = vadd.f32 %v807, %v780
  %v809 = vadd.f32 %v808, %v784
  %v810 = vadd.f32 %v809, %v788
  %v811 = vadd.f32 %v810, %v792
  %v812 = vadd.f32 %v811, %v796
  %v813 = vadd.f32 %v769, %v773
  %v814 = vadd.f32 %v813, %v777
  %v815 = vadd.f32 %v814, %v781
  %v816 = vadd.f32 %v815, %v785
  %v817 = vadd.f32 %v816, %v789
  %v818 = vadd.f32 %v817, %v793
  %v819 = vadd.f32 %v818, %v797
  %v820 = vadd.f32 %v770, %v774
  %v821 = vadd.f32 %v820, %v778
  %v822 = vadd.f32 %v821, %v782
  %v823 = vadd.f32 %v822, %v786
  %v824 = vadd.f32 %v823, %v790
  %v825 = vadd.f32 %v824, %v794
  %v826 = vadd.f32 %v825, %v798
  %v827 = vld [vmem:[%s4] sm:$0xff]
  %v828 = vadd.f32 %v745, %v752
  %v829 = vadd.f32 %v828, %v759
  %v830 = vadd.f32 %v829, %v766
  %v831 = vadd.f32 %v827, %v830
  %832 = vst [vmem:[%s4] sm:$0xff] %v831
  %s833 = scalar_lea.vmem %s4, 8
  %v834 = vld [vmem:[%s833] sm:$0xff]
  %v835 = vadd.f32 %v805, %v812
  %v836 = vadd.f32 %v835, %v819
  %v837 = vadd.f32 %v836, %v826
  %v838 = vadd.f32 %v834, %v837
  %839 = vst [vmem:[%s833] sm:$0xff] %v838
  %v840 = vmax.f32 %v613, %v629
  %v841 = vmax.f32 %v840, %v645
  %v842 = vmax.f32 %v841, %v661
  %v843 = vmax.f32 %v842, %v677
  %v844 = vmax.f32 %v843, %v693
  %v845 = vmax.f32 %v844, %v709
  %v846 = vmax.f32 %v845, %v725
  %v847 = vmax.f32 %v616, %v632
  %v848 = vmax.f32 %v847, %v648
  %v849 = vmax.f32 %v848, %v664
  %v850 = vmax.f32 %v849, %v680
  %v851 = vmax.f32 %v850, %v696
  %v852 = vmax.f32 %v851, %v712
  %v853 = vmax.f32 %v852, %v728
  %v854 = vmax.f32 %v621, %v637
  %v855 = vmax.f32 %v854, %v653
  %v856 = vmax.f32 %v855, %v669
  %v857 = vmax.f32 %v856, %v685
  %v858 = vmax.f32 %v857, %v701
  %v859 = vmax.f32 %v858, %v717
  %v860 = vmax.f32 %v859, %v733
  %v861 = vmax.f32 %v624, %v640
  %v862 = vmax.f32 %v861, %v656
  %v863 = vmax.f32 %v862, %v672
  %v864 = vmax.f32 %v863, %v688
  %v865 = vmax.f32 %v864, %v704
  %v866 = vmax.f32 %v865, %v720
  %v867 = vmax.f32 %v866, %v736
  %868 = vst [vmem:[%s52] sm:$0xff] %v846
  %869 = vst [vmem:[%s52 + $0x8] sm:$0xff] %v853
  %870 = vst [vmem:[%s52 + $0x10] sm:$0xff] %v860
  %871 = vst [vmem:[%s52 + $0x18] sm:$0xff] %v867
  %v872 = vmin.f32 %v613, %v629
  %v873 = vmin.f32 %v872, %v645
  %v874 = vmin.f32 %v873, %v661
  %v875 = vmin.f32 %v874, %v677
  %v876 = vmin.f32 %v875, %v693
  %v877 = vmin.f32 %v876, %v709
  %v878 = vmin.f32 %v877, %v725
  %v879 = vmin.f32 %v616, %v632
  %v880 = vmin.f32 %v879, %v648
  %v881 = vmin.f32 %v880, %v664
  %v882 = vmin.f32 %v881, %v680
  %v883 = vmin.f32 %v882, %v696
  %v884 = vmin.f32 %v883, %v712
  %v885 = vmin.f32 %v884, %v728
  %v886 = vmin.f32 %v621, %v637
  %v887 = vmin.f32 %v886, %v653
  %v888 = vmin.f32 %v887, %v669
  %v889 = vmin.f32 %v888, %v685
  %v890 = vmin.f32 %v889, %v701
  %v891 = vmin.f32 %v890, %v717
  %v892 = vmin.f32 %v891, %v733
  %v893 = vmin.f32 %v624, %v640
  %v894 = vmin.f32 %v893, %v656
  %v895 = vmin.f32 %v894, %v672
  %v896 = vmin.f32 %v895, %v688
  %v897 = vmin.f32 %v896, %v704
  %v898 = vmin.f32 %v897, %v720
  %v899 = vmin.f32 %v898, %v736
  %s900 = scalar_lea.vmem %s52, 32
  %901 = vst [vmem:[%s900] sm:$0xff] %v878
  %902 = vst [vmem:[%s900 + $0x8] sm:$0xff] %v885
  %903 = vst [vmem:[%s900 + $0x10] sm:$0xff] %v892
  %904 = vst [vmem:[%s900 + $0x18] sm:$0xff] %v899
  %s905 = sadd.s32 0, 0
  %s906 = smul.u32 4, %s905
  %p907 = scmp.lt.s32.totalorder %s906, 3
  %s908 = scalar_select %p907, %s906, 3
  %s909 = smul.addr %s908, 8
  %s910 = scalar_lea.vmem %s5, %s909
  // Predicated region
  $region22: #{pointnet_sa_msg_forward.5} parent=0 // pred_check
    _
  $region23: #{pointnet_sa_msg_forward.5} parent=0 // pred_check_branch
    %912 = sbr.rel (0) target = $region25
  $region24: #{pointnet_sa_msg_forward.5} parent=0 // pred_region
    _
  $region25: #{pointnet_sa_msg_forward.5} parent=0 // pred_fallthru
    _
  // Predicated region
  $region26: #{pointnet_sa_msg_forward.5} parent=0 // pred_check
    _
  $region27: #{pointnet_sa_msg_forward.5} parent=0 // pred_check_branch
    %914 = sbr.rel (0) target = $region29
  $region28: #{pointnet_sa_msg_forward.5} parent=0 // pred_region
    %s915 = sadd.s32 0, 0
    %s916 = smul.u32 4, %s915
  $region29: #{pointnet_sa_msg_forward.5} parent=0 // pred_fallthru
    _
  // Predicated region
  $region30: #{pointnet_sa_msg_forward.5} parent=0 // pred_check
    _
  $region31: #{pointnet_sa_msg_forward.5} parent=0 // pred_check_branch
    %918 = sbr.rel (0) target = $region33
  $region32: #{pointnet_sa_msg_forward.5} parent=0 // pred_region
    _
  $region33: #{pointnet_sa_msg_forward.5} parent=0 // pred_fallthru
    _
  // Predicated region
  $region34: #{pointnet_sa_msg_forward.5} parent=0 // pred_check
    _
  $region35: #{pointnet_sa_msg_forward.5} parent=0 // pred_check_branch
    %920 = sbr.rel (0) target = $region37
  $region36: #{pointnet_sa_msg_forward.5} parent=0 // pred_region
    %s921 = sadd.s32 0, 0
    %s922 = smul.u32 4, %s921
    %p923 = scmp.lt.s32.totalorder %s922, 3
    %s924 = scalar_select %p923, %s922, 3
    %s925 = smul.addr %s924, 8
    %s926 = scalar_lea.vmem %s5, %s925
  $region37: #{pointnet_sa_msg_forward.5} parent=0 // pred_fallthru
    _

// kernel: pointnet_sa_msg_forward.6
$region0: #{pointnet_sa_msg_forward.6}
  #allocation0 [shape = 'u32[]', space=smem, size = 0x4, offset = 0x4, fixed_abs, tag = 'smem constant byte address 0x4 - core index']
  #allocation1 [shape = 'u32[144,128]{1,0:T(1,128)}', space=vmem, size = 0x12000, scoped, tag = 'internal scratch']
  %s0 = inlined_call_operand.vmem [shape: bf16[16,32,16], index: 0, kind: input, shape index: {}]
  %s1 = inlined_call_operand.vmem [shape: bf16[16,128], index: 1, kind: input, shape index: {}]
  %s2 = inlined_call_operand.vmem [shape: bf16[2,128,128], index: 2, kind: input, shape index: {}]
  %s3 = inlined_call_operand.vmem [shape: f32[2,2,128], index: 3, kind: input, shape index: {}]
  %s4 = inlined_call_operand.vmem [shape: f32[2,8,128], index: 4, kind: output, shape index: {}]
  %s5 = sld [smem:[#allocation0]]
  $region30: #{pointnet_sa_msg_forward.6} parent=0
    _
  %s7 = ssub.s32 1, %s5
  %s8 = scalar_select 0, %s7, %s5
  // Predicated region
  $region2: #{pointnet_sa_msg_forward.6} parent=0 // pred_check
    _
  $region3: #{pointnet_sa_msg_forward.6} parent=0 // pred_check_branch
    %10 = sbr.rel (0) target = $region5
  $region4: #{pointnet_sa_msg_forward.6} parent=0 // pred_region
    %s11 = sadd.s32 0, 0
    %s12 = smul.u32 4, %s11
    %p13 = scmp.lt.s32.totalorder %s12, 3
    %s14 = scalar_select %p13, %s12, 3
    %s15 = smul.addr %s14, 4
    %s16 = scalar_lea.vmem %s0, %s15
    %s17 = sadd.s32 0, 0
    %s18 = smul.u32 4, %s17
  $region5: #{pointnet_sa_msg_forward.6} parent=0 // pred_fallthru
    _
  // Predicated region
  $region6: #{pointnet_sa_msg_forward.6} parent=0 // pred_check
    _
  $region7: #{pointnet_sa_msg_forward.6} parent=0 // pred_check_branch
    %20 = sbr.rel (0) target = $region9
  $region8: #{pointnet_sa_msg_forward.6} parent=0 // pred_region
    _
  $region9: #{pointnet_sa_msg_forward.6} parent=0 // pred_fallthru
    _
  // Predicated region
  $region10: #{pointnet_sa_msg_forward.6} parent=0 // pred_check
    _
  $region11: #{pointnet_sa_msg_forward.6} parent=0 // pred_check_branch
    %22 = sbr.rel (0) target = $region13
  $region12: #{pointnet_sa_msg_forward.6} parent=0 // pred_region
    _
  $region13: #{pointnet_sa_msg_forward.6} parent=0 // pred_fallthru
    _
  // Predicated region
  $region14: #{pointnet_sa_msg_forward.6} parent=0 // pred_check
    _
  $region15: #{pointnet_sa_msg_forward.6} parent=0 // pred_check_branch
    %24 = sbr.rel (0) target = $region17
  $region16: #{pointnet_sa_msg_forward.6} parent=0 // pred_region
    _
  $region17: #{pointnet_sa_msg_forward.6} parent=0 // pred_fallthru
    _
  %s25 = sadd.s32 0, 0
  %s26 = smul.u32 4, %s25
  %p27 = scmp.lt.s32.totalorder %s26, 3
  %s28 = scalar_select %p27, %s26, 3
  %s29 = smul.addr %s28, 4
  %s30 = scalar_lea.vmem %s0, %s29
  %s31 = sadd.s32 0, 0
  %s32 = smul.u32 4, %s31
  %p33 = scmp.lt.s32.totalorder %s32, 3
  %s34 = scalar_select %p33, %s32, 3
  %s35 = smul.addr %s34, 4
  %s36 = scalar_lea.vmem %s0, %s35
  %s37 = sadd.s32 0, 0
  %s38 = smul.u32 4, %s37
  %p40 = scmp.eq.s32.totalorder 0, 0
  // Predicated region
  $region18: #{pointnet_sa_msg_forward.6} parent=0 // pred_check
    %p41 = pneg %p40
  $region19: #{pointnet_sa_msg_forward.6} parent=0 // pred_check_branch
    %43 = sbr.rel (%p41) target = $region21
  $region20: #{pointnet_sa_msg_forward.6} parent=0 // pred_region
    %44 = vst [vmem:[%s4] sm:$0xff] 0.0
    %45 = vst [vmem:[%s4 + $0x8] sm:$0xff] 0.0
  $region21: #{pointnet_sa_msg_forward.6} parent=0 // pred_fallthru
    _
  %v46 = vld [vmem:[%s36] sm:$0xf]
  %v47 = vld [vmem:[%s36 + $0x4] sm:$0xf]
  %v48 = vld [vmem:[%s36 + $0x8] sm:$0xf]
  %v49 = vld [vmem:[%s36 + $0xc] sm:$0xf]
  %v50 = vld [vmem:[%s36 + $0x10] sm:$0xf]
  %v51 = vld [vmem:[%s36 + $0x14] sm:$0xf]
  %v52 = vld [vmem:[%s36 + $0x18] sm:$0xf]
  %v53 = vld [vmem:[%s36 + $0x1c] sm:$0xf]
  %v54 = vld [vmem:[%s36 + $0x20] sm:$0xf]
  %v55 = vld [vmem:[%s36 + $0x24] sm:$0xf]
  %v56 = vld [vmem:[%s36 + $0x28] sm:$0xf]
  %v57 = vld [vmem:[%s36 + $0x2c] sm:$0xf]
  %v58 = vld [vmem:[%s36 + $0x30] sm:$0xf]
  %v59 = vld [vmem:[%s36 + $0x34] sm:$0xf]
  %v60 = vld [vmem:[%s36 + $0x38] sm:$0xf]
  %v61 = vld [vmem:[%s36 + $0x3c] sm:$0xf]
  %v62 = vld [vmem:[%s36 + $0x40] sm:$0xf]
  %v63 = vld [vmem:[%s36 + $0x44] sm:$0xf]
  %v64 = vld [vmem:[%s36 + $0x48] sm:$0xf]
  %v65 = vld [vmem:[%s36 + $0x4c] sm:$0xf]
  %v66 = vld [vmem:[%s36 + $0x50] sm:$0xf]
  %v67 = vld [vmem:[%s36 + $0x54] sm:$0xf]
  %v68 = vld [vmem:[%s36 + $0x58] sm:$0xf]
  %v69 = vld [vmem:[%s36 + $0x5c] sm:$0xf]
  %v70 = vld [vmem:[%s36 + $0x60] sm:$0xf]
  %v71 = vld [vmem:[%s36 + $0x64] sm:$0xf]
  %v72 = vld [vmem:[%s36 + $0x68] sm:$0xf]
  %v73 = vld [vmem:[%s36 + $0x6c] sm:$0xf]
  %v74 = vld [vmem:[%s36 + $0x70] sm:$0xf]
  %v75 = vld [vmem:[%s36 + $0x74] sm:$0xf]
  %v76 = vld [vmem:[%s36 + $0x78] sm:$0xf]
  %v77 = vld [vmem:[%s36 + $0x7c] sm:$0xf]
  %v78 = vld [vmem:[%s36 + $0x80] sm:$0xf]
  %v79 = vld [vmem:[%s36 + $0x84] sm:$0xf]
  %v80 = vld [vmem:[%s36 + $0x88] sm:$0xf]
  %v81 = vld [vmem:[%s36 + $0x8c] sm:$0xf]
  %v82 = vld [vmem:[%s36 + $0x90] sm:$0xf]
  %v83 = vld [vmem:[%s36 + $0x94] sm:$0xf]
  %v84 = vld [vmem:[%s36 + $0x98] sm:$0xf]
  %v85 = vld [vmem:[%s36 + $0x9c] sm:$0xf]
  %v86 = vld [vmem:[%s36 + $0xa0] sm:$0xf]
  %v87 = vld [vmem:[%s36 + $0xa4] sm:$0xf]
  %v88 = vld [vmem:[%s36 + $0xa8] sm:$0xf]
  %v89 = vld [vmem:[%s36 + $0xac] sm:$0xf]
  %v90 = vld [vmem:[%s36 + $0xb0] sm:$0xf]
  %v91 = vld [vmem:[%s36 + $0xb4] sm:$0xf]
  %v92 = vld [vmem:[%s36 + $0xb8] sm:$0xf]
  %v93 = vld [vmem:[%s36 + $0xbc] sm:$0xf]
  %v94 = vld [vmem:[%s36 + $0xc0] sm:$0xf]
  %v95 = vld [vmem:[%s36 + $0xc4] sm:$0xf]
  %v96 = vld [vmem:[%s36 + $0xc8] sm:$0xf]
  %v97 = vld [vmem:[%s36 + $0xcc] sm:$0xf]
  %v98 = vld [vmem:[%s36 + $0xd0] sm:$0xf]
  %v99 = vld [vmem:[%s36 + $0xd4] sm:$0xf]
  %v100 = vld [vmem:[%s36 + $0xd8] sm:$0xf]
  %v101 = vld [vmem:[%s36 + $0xdc] sm:$0xf]
  %v102 = vld [vmem:[%s36 + $0xe0] sm:$0xf]
  %v103 = vld [vmem:[%s36 + $0xe4] sm:$0xf]
  %v104 = vld [vmem:[%s36 + $0xe8] sm:$0xf]
  %v105 = vld [vmem:[%s36 + $0xec] sm:$0xf]
  %v106 = vld [vmem:[%s36 + $0xf0] sm:$0xf]
  %v107 = vld [vmem:[%s36 + $0xf4] sm:$0xf]
  %v108 = vld [vmem:[%s36 + $0xf8] sm:$0xf]
  %v109 = vld [vmem:[%s36 + $0xfc] sm:$0xf]
  %v110 = vld [vmem:[%s1] sm:$0xf]
  %v111 = vld [vmem:[%s1 + $0x4] sm:$0xf]
  %v176 = vunpack.c.l.b16 %v46
  %v177 = vunpack.c.l.b16 %v47
  %v178 = vunpack.c.l.b16 %v48
  %v179 = vunpack.c.l.b16 %v49
  %v180 = vunpack.c.l.b16 %v50
  %v181 = vunpack.c.l.b16 %v51
  %v182 = vunpack.c.l.b16 %v52
  %v183 = vunpack.c.l.b16 %v53
  %v184 = vunpack.c.l.b16 %v54
  %v185 = vunpack.c.l.b16 %v55
  %v186 = vunpack.c.l.b16 %v56
  %v187 = vunpack.c.l.b16 %v57
  %v188 = vunpack.c.l.b16 %v58
  %v189 = vunpack.c.l.b16 %v59
  %v190 = vunpack.c.l.b16 %v60
  %v191 = vunpack.c.l.b16 %v61
  %v192 = vunpack.c.l.b16 %v62
  %v193 = vunpack.c.l.b16 %v63
  %v194 = vunpack.c.l.b16 %v64
  %v195 = vunpack.c.l.b16 %v65
  %v196 = vunpack.c.l.b16 %v66
  %v197 = vunpack.c.l.b16 %v67
  %v198 = vunpack.c.l.b16 %v68
  %v199 = vunpack.c.l.b16 %v69
  %v200 = vunpack.c.l.b16 %v70
  %v201 = vunpack.c.l.b16 %v71
  %v202 = vunpack.c.l.b16 %v72
  %v203 = vunpack.c.l.b16 %v73
  %v204 = vunpack.c.l.b16 %v74
  %v205 = vunpack.c.l.b16 %v75
  %v206 = vunpack.c.l.b16 %v76
  %v207 = vunpack.c.l.b16 %v77
  %v208 = vunpack.c.l.b16 %v78
  %v209 = vunpack.c.l.b16 %v79
  %v210 = vunpack.c.l.b16 %v80
  %v211 = vunpack.c.l.b16 %v81
  %v212 = vunpack.c.l.b16 %v82
  %v213 = vunpack.c.l.b16 %v83
  %v214 = vunpack.c.l.b16 %v84
  %v215 = vunpack.c.l.b16 %v85
  %v216 = vunpack.c.l.b16 %v86
  %v217 = vunpack.c.l.b16 %v87
  %v218 = vunpack.c.l.b16 %v88
  %v219 = vunpack.c.l.b16 %v89
  %v220 = vunpack.c.l.b16 %v90
  %v221 = vunpack.c.l.b16 %v91
  %v222 = vunpack.c.l.b16 %v92
  %v223 = vunpack.c.l.b16 %v93
  %v224 = vunpack.c.l.b16 %v94
  %v225 = vunpack.c.l.b16 %v95
  %v226 = vunpack.c.l.b16 %v96
  %v227 = vunpack.c.l.b16 %v97
  %v228 = vunpack.c.l.b16 %v98
  %v229 = vunpack.c.l.b16 %v99
  %v230 = vunpack.c.l.b16 %v100
  %v231 = vunpack.c.l.b16 %v101
  %v232 = vunpack.c.l.b16 %v102
  %v233 = vunpack.c.l.b16 %v103
  %v234 = vunpack.c.l.b16 %v104
  %v235 = vunpack.c.l.b16 %v105
  %v236 = vunpack.c.l.b16 %v106
  %v237 = vunpack.c.l.b16 %v107
  %v238 = vunpack.c.l.b16 %v108
  %v239 = vunpack.c.l.b16 %v109
  %v240 = vpack.c.b16 %v177, %v176
  %v241 = vpack.c.b16 %v179, %v178
  %v242 = vpack.c.b16 %v181, %v180
  %v243 = vpack.c.b16 %v183, %v182
  %v244 = vpack.c.b16 %v185, %v184
  %v245 = vpack.c.b16 %v187, %v186
  %v246 = vpack.c.b16 %v189, %v188
  %v247 = vpack.c.b16 %v191, %v190
  %v248 = vpack.c.b16 %v193, %v192
  %v249 = vpack.c.b16 %v195, %v194
  %v250 = vpack.c.b16 %v197, %v196
  %v251 = vpack.c.b16 %v199, %v198
  %v252 = vpack.c.b16 %v201, %v200
  %v253 = vpack.c.b16 %v203, %v202
  %v254 = vpack.c.b16 %v205, %v204
  %v255 = vpack.c.b16 %v207, %v206
  %v256 = vpack.c.b16 %v209, %v208
  %v257 = vpack.c.b16 %v211, %v210
  %v258 = vpack.c.b16 %v213, %v212
  %v259 = vpack.c.b16 %v215, %v214
  %v260 = vpack.c.b16 %v217, %v216
  %v261 = vpack.c.b16 %v219, %v218
  %v262 = vpack.c.b16 %v221, %v220
  %v263 = vpack.c.b16 %v223, %v222
  %v264 = vpack.c.b16 %v225, %v224
  %v265 = vpack.c.b16 %v227, %v226
  %v266 = vpack.c.b16 %v229, %v228
  %v267 = vpack.c.b16 %v231, %v230
  %v268 = vpack.c.b16 %v233, %v232
  %v269 = vpack.c.b16 %v235, %v234
  %v270 = vpack.c.b16 %v237, %v236
  %v271 = vpack.c.b16 %v239, %v238
  %v274 = vunpack.c.l.b16 %v110
  %v275 = vunpack.c.l.b16 %v111
  %v276 = vpack.c.b16 %v275, %v274
  %vm278 = vcmask 130048
  %v280 = vsel %vm278, %v240, 0
  %v283 = vsel %vm278, %v241, 0
  %v286 = vsel %vm278, %v242, 0
  %v289 = vsel %vm278, %v243, 0
  %v292 = vsel %vm278, %v244, 0
  %v295 = vsel %vm278, %v245, 0
  %v298 = vsel %vm278, %v246, 0
  %v301 = vsel %vm278, %v247, 0
  %v304 = vsel %vm278, %v248, 0
  %v307 = vsel %vm278, %v249, 0
  %v310 = vsel %vm278, %v250, 0
  %v313 = vsel %vm278, %v251, 0
  %v316 = vsel %vm278, %v252, 0
  %v319 = vsel %vm278, %v253, 0
  %v322 = vsel %vm278, %v254, 0
  %v325 = vsel %vm278, %v255, 0
  %v328 = vsel %vm278, %v256, 0
  %v331 = vsel %vm278, %v257, 0
  %v334 = vsel %vm278, %v258, 0
  %v337 = vsel %vm278, %v259, 0
  %v340 = vsel %vm278, %v260, 0
  %v343 = vsel %vm278, %v261, 0
  %v346 = vsel %vm278, %v262, 0
  %v349 = vsel %vm278, %v263, 0
  %v352 = vsel %vm278, %v264, 0
  %v355 = vsel %vm278, %v265, 0
  %v358 = vsel %vm278, %v266, 0
  %v361 = vsel %vm278, %v267, 0
  %v364 = vsel %vm278, %v268, 0
  %v367 = vsel %vm278, %v269, 0
  %v370 = vsel %vm278, %v270, 0
  %v373 = vsel %vm278, %v271, 0
  %375 = vmatprep.subr.bf16.mxu0 0
  %376 = vmatpush1.bf16.msra.mxu0 %v276
  %377 = vmatprep.subr.bf16.mxu0 0
  %378 = vmatpush1.bf16.msra.mxu0 0
  %379 = vmatprep.subr.bf16.mxu0 0
  %380 = vmatpush1.bf16.msra.mxu0 0
  %381 = vmatprep.subr.bf16.mxu0 0
  %382 = vmatpush1.bf16.msra.mxu0 0
  %383 = vmatprep.subr.bf16.mxu0 0
  %384 = vmatpush1.bf16.msra.mxu0 0
  %385 = vmatprep.subr.bf16.mxu0 0
  %386 = vmatpush1.bf16.msra.mxu0 0
  %387 = vmatprep.subr.bf16.mxu0 0
  %388 = vmatpush1.bf16.msra.mxu0 0
  %389 = vmatprep.subr.bf16.mxu0 0
  %390 = vmatpush1.bf16.msra.mxu0 0
  %391 = vmatprep.subr.bf16.mxu0 0
  %392 = vmatpush1.bf16.msra.mxu0 0
  %393 = vmatprep.subr.bf16.mxu0 0
  %394 = vmatpush1.bf16.msra.mxu0 0
  %395 = vmatprep.subr.bf16.mxu0 0
  %396 = vmatpush1.bf16.msra.mxu0 0
  %397 = vmatprep.subr.bf16.mxu0 0
  %398 = vmatpush1.bf16.msra.mxu0 0
  %399 = vmatprep.subr.bf16.mxu0 0
  %400 = vmatpush1.bf16.msra.mxu0 0
  %401 = vmatprep.subr.bf16.mxu0 0
  %402 = vmatpush1.bf16.msra.mxu0 0
  %403 = vmatprep.subr.bf16.mxu0 0
  %404 = vmatpush1.bf16.msra.mxu0 0
  %405 = vmatprep.subr.bf16.mxu0 0
  %406 = vmatpush1.bf16.msra.mxu0 0
  %407 = vmatprep.mubr.bf16.mxu0 0
  %408 = vmatmul.mubr.bf16.gmra.mrb[0].mxu0 %v280
  %v409 = vpop.f32.mrb[0].mxu0
  %v410 = vadd.f32 0.0, %v409
  %v411 = vpop.f32.mrb[0].mxu0
  %v412 = vpop.f32.mrb[0].mxu0
  %v413 = vadd.f32 0.0, %v412
  %v414 = vpop.f32.mrb[0].mxu0
  %415 = vmatprep.mubr.bf16.mxu0 0
  %416 = vmatmul.mubr.bf16.gmra.mrb[0].mxu0 %v283
  %v417 = vpop.f32.mrb[0].mxu0
  %v418 = vadd.f32 0.0, %v417
  %v419 = vpop.f32.mrb[0].mxu0
  %v420 = vpop.f32.mrb[0].mxu0
  %v421 = vadd.f32 0.0, %v420
  %v422 = vpop.f32.mrb[0].mxu0
  %423 = vmatprep.mubr.bf16.mxu0 0
  %424 = vmatmul.mubr.bf16.gmra.mrb[0].mxu0 %v286
  %v425 = vpop.f32.mrb[0].mxu0
  %v426 = vadd.f32 0.0, %v425
  %v427 = vpop.f32.mrb[0].mxu0
  %v428 = vpop.f32.mrb[0].mxu0
  %v429 = vadd.f32 0.0, %v428
  %v430 = vpop.f32.mrb[0].mxu0
  %431 = vmatprep.mubr.bf16.mxu0 0
  %432 = vmatmul.mubr.bf16.gmra.mrb[0].mxu0 %v289
  %v433 = vpop.f32.mrb[0].mxu0
  %v434 = vadd.f32 0.0, %v433
  %v435 = vpop.f32.mrb[0].mxu0
  %v436 = vpop.f32.mrb[0].mxu0
  %v437 = vadd.f32 0.0, %v436
  %v438 = vpop.f32.mrb[0].mxu0
  %439 = vmatprep.mubr.bf16.mxu0 0
  %440 = vmatmul.mubr.bf16.gmra.mrb[0].mxu0 %v292
  %v441 = vpop.f32.mrb[0].mxu0
  %v442 = vadd.f32 0.0, %v441
  %v443 = vpop.f32.mrb[0].mxu0
  %v444 = vpop.f32.mrb[0].mxu0
  %v445 = vadd.f32 0.0, %v444
  %v446 = vpop.f32.mrb[0].mxu0
  %447 = vmatprep.mubr.bf16.mxu0 0
  %448 = vmatmul.mubr.bf16.gmra.mrb[0].mxu0 %v295
  %v449 = vpop.f32.mrb[0].mxu0
  %v450 = vadd.f32 0.0, %v449
  %v451 = vpop.f32.mrb[0].mxu0
  %v452 = vpop.f32.mrb[0].mxu0
  %v453 = vadd.f32 0.0, %v452
  %v454 = vpop.f32.mrb[0].mxu0
  %455 = vmatprep.mubr.bf16.mxu0 0
  %456 = vmatmul.mubr.bf16.gmra.mrb[0].mxu0 %v298
  %v457 = vpop.f32.mrb[0].mxu0
  %v458 = vadd.f32 0.0, %v457
  %v459 = vpop.f32.mrb[0].mxu0
  %v460 = vpop.f32.mrb[0].mxu0
  %v461 = vadd.f32 0.0, %v460
  %v462 = vpop.f32.mrb[0].mxu0
  %463 = vmatprep.mubr.bf16.mxu0 0
  %464 = vmatmul.mubr.bf16.gmra.mrb[0].mxu0 %v301
  %v465 = vpop.f32.mrb[0].mxu0
  %v466 = vadd.f32 0.0, %v465
  %v467 = vpop.f32.mrb[0].mxu0
  %v468 = vpop.f32.mrb[0].mxu0
  %v469 = vadd.f32 0.0, %v468
  %v470 = vpop.f32.mrb[0].mxu0
  %471 = vmatprep.mubr.bf16.mxu0 0
  %472 = vmatmul.mubr.bf16.gmra.mrb[0].mxu0 %v304
  %v473 = vpop.f32.mrb[0].mxu0
  %v474 = vadd.f32 0.0, %v473
  %v475 = vpop.f32.mrb[0].mxu0
  %v476 = vpop.f32.mrb[0].mxu0
  %v477 = vadd.f32 0.0, %v476
  %v478 = vpop.f32.mrb[0].mxu0
  %479 = vmatprep.mubr.bf16.mxu0 0
  %480 = vmatmul.mubr.bf16.gmra.mrb[0].mxu0 %v307
  %v481 = vpop.f32.mrb[0].mxu0
  %v482 = vadd.f32 0.0, %v481
  %v483 = vpop.f32.mrb[0].mxu0
  %v484 = vpop.f32.mrb[0].mxu0
  %v485 = vadd.f32 0.0, %v484
  %v486 = vpop.f32.mrb[0].mxu0
  %487 = vmatprep.mubr.bf16.mxu0 0
  %488 = vmatmul.mubr.bf16.gmra.mrb[0].mxu0 %v310
  %v489 = vpop.f32.mrb[0].mxu0
  %v490 = vadd.f32 0.0, %v489
  %v491 = vpop.f32.mrb[0].mxu0
  %v492 = vpop.f32.mrb[0].mxu0
  %v493 = vadd.f32 0.0, %v492
  %v494 = vpop.f32.mrb[0].mxu0
  %495 = vmatprep.mubr.bf16.mxu0 0
  %496 = vmatmul.mubr.bf16.gmra.mrb[0].mxu0 %v313
  %v497 = vpop.f32.mrb[0].mxu0
  %v498 = vadd.f32 0.0, %v497
  %v499 = vpop.f32.mrb[0].mxu0
  %v500 = vpop.f32.mrb[0].mxu0
  %v501 = vadd.f32 0.0, %v500
  %v502 = vpop.f32.mrb[0].mxu0
  %503 = vmatprep.mubr.bf16.mxu0 0
  %504 = vmatmul.mubr.bf16.gmra.mrb[0].mxu0 %v316
  %v505 = vpop.f32.mrb[0].mxu0
  %v506 = vadd.f32 0.0, %v505
  %v507 = vpop.f32.mrb[0].mxu0
  %v508 = vpop.f32.mrb[0].mxu0
  %v509 = vadd.f32 0.0, %v508
  %v510 = vpop.f32.mrb[0].mxu0
  %511 = vmatprep.mubr.bf16.mxu0 0
  %512 = vmatmul.mubr.bf16.gmra.mrb[0].mxu0 %v319
  %v513 = vpop.f32.mrb[0].mxu0
  %v514 = vadd.f32 0.0, %v513
  %v515 = vpop.f32.mrb[0].mxu0
  %v516 = vpop.f32.mrb[0].mxu0
  %v517 = vadd.f32 0.0, %v516
  %v518 = vpop.f32.mrb[0].mxu0
  %519 = vmatprep.mubr.bf16.mxu0 0
  %520 = vmatmul.mubr.bf16.gmra.mrb[0].mxu0 %v322
  %v521 = vpop.f32.mrb[0].mxu0
  %v522 = vadd.f32 0.0, %v521
  %v523 = vpop.f32.mrb[0].mxu0
  %v524 = vpop.f32.mrb[0].mxu0
  %v525 = vadd.f32 0.0, %v524
  %v526 = vpop.f32.mrb[0].mxu0
  %527 = vmatprep.mubr.bf16.mxu0 0
  %528 = vmatmul.mubr.bf16.gmra.mrb[0].mxu0 %v325
  %v529 = vpop.f32.mrb[0].mxu0
  %v530 = vadd.f32 0.0, %v529
  %v531 = vpop.f32.mrb[0].mxu0
  %v532 = vpop.f32.mrb[0].mxu0
  %v533 = vadd.f32 0.0, %v532
  %v534 = vpop.f32.mrb[0].mxu0
  %535 = vmatprep.mubr.bf16.mxu0 0
  %536 = vmatmul.mubr.bf16.gmra.mrb[0].mxu0 %v328
  %v537 = vpop.f32.mrb[0].mxu0
  %v538 = vadd.f32 0.0, %v537
  %v539 = vpop.f32.mrb[0].mxu0
  %v540 = vpop.f32.mrb[0].mxu0
  %v541 = vadd.f32 0.0, %v540
  %v542 = vpop.f32.mrb[0].mxu0
  %543 = vmatprep.mubr.bf16.mxu0 0
  %544 = vmatmul.mubr.bf16.gmra.mrb[0].mxu0 %v331
  %v545 = vpop.f32.mrb[0].mxu0
  %v546 = vadd.f32 0.0, %v545
  %v547 = vpop.f32.mrb[0].mxu0
  %v548 = vpop.f32.mrb[0].mxu0
  %v549 = vadd.f32 0.0, %v548
  %v550 = vpop.f32.mrb[0].mxu0
  %551 = vmatprep.mubr.bf16.mxu0 0
  %552 = vmatmul.mubr.bf16.gmra.mrb[0].mxu0 %v334
  %v553 = vpop.f32.mrb[0].mxu0
  %v554 = vadd.f32 0.0, %v553
  %v555 = vpop.f32.mrb[0].mxu0
  %v556 = vpop.f32.mrb[0].mxu0
  %v557 = vadd.f32 0.0, %v556
  %v558 = vpop.f32.mrb[0].mxu0
  %559 = vmatprep.mubr.bf16.mxu0 0
  %560 = vmatmul.mubr.bf16.gmra.mrb[0].mxu0 %v337
  %v561 = vpop.f32.mrb[0].mxu0
  %v562 = vadd.f32 0.0, %v561
  %v563 = vpop.f32.mrb[0].mxu0
  %v564 = vpop.f32.mrb[0].mxu0
  %v565 = vadd.f32 0.0, %v564
  %v566 = vpop.f32.mrb[0].mxu0
  %567 = vmatprep.mubr.bf16.mxu0 0
  %568 = vmatmul.mubr.bf16.gmra.mrb[0].mxu0 %v340
  %v569 = vpop.f32.mrb[0].mxu0
  %v570 = vadd.f32 0.0, %v569
  %v571 = vpop.f32.mrb[0].mxu0
  %v572 = vpop.f32.mrb[0].mxu0
  %v573 = vadd.f32 0.0, %v572
  %v574 = vpop.f32.mrb[0].mxu0
  %575 = vmatprep.mubr.bf16.mxu0 0
  %576 = vmatmul.mubr.bf16.gmra.mrb[0].mxu0 %v343
  %v577 = vpop.f32.mrb[0].mxu0
  %v578 = vadd.f32 0.0, %v577
  %v579 = vpop.f32.mrb[0].mxu0
  %v580 = vpop.f32.mrb[0].mxu0
  %v581 = vadd.f32 0.0, %v580
  %v582 = vpop.f32.mrb[0].mxu0
  %583 = vmatprep.mubr.bf16.mxu0 0
  %584 = vmatmul.mubr.bf16.gmra.mrb[0].mxu0 %v346
  %v585 = vpop.f32.mrb[0].mxu0
  %v586 = vadd.f32 0.0, %v585
  %v587 = vpop.f32.mrb[0].mxu0
  %v588 = vpop.f32.mrb[0].mxu0
  %v589 = vadd.f32 0.0, %v588
  %v590 = vpop.f32.mrb[0].mxu0
  %591 = vmatprep.mubr.bf16.mxu0 0
  %592 = vmatmul.mubr.bf16.gmra.mrb[0].mxu0 %v349
  %v593 = vpop.f32.mrb[0].mxu0
  %v594 = vadd.f32 0.0, %v593
  %v595 = vpop.f32.mrb[0].mxu0
  %v596 = vpop.f32.mrb[0].mxu0
  %v597 = vadd.f32 0.0, %v596
  %v598 = vpop.f32.mrb[0].mxu0
  %599 = vmatprep.mubr.bf16.mxu0 0
  %600 = vmatmul.mubr.bf16.gmra.mrb[0].mxu0 %v352
  %v601 = vpop.f32.mrb[0].mxu0
  %v602 = vadd.f32 0.0, %v601
  %v603 = vpop.f32.mrb[0].mxu0
  %v604 = vpop.f32.mrb[0].mxu0
  %v605 = vadd.f32 0.0, %v604
  %v606 = vpop.f32.mrb[0].mxu0
  %607 = vmatprep.mubr.bf16.mxu0 0
  %608 = vmatmul.mubr.bf16.gmra.mrb[0].mxu0 %v355
  %v609 = vpop.f32.mrb[0].mxu0
  %v610 = vadd.f32 0.0, %v609
  %v611 = vpop.f32.mrb[0].mxu0
  %v612 = vpop.f32.mrb[0].mxu0
  %v613 = vadd.f32 0.0, %v612
  %v614 = vpop.f32.mrb[0].mxu0
  %615 = vmatprep.mubr.bf16.mxu0 0
  %616 = vmatmul.mubr.bf16.gmra.mrb[0].mxu0 %v358
  %v617 = vpop.f32.mrb[0].mxu0
  %v618 = vadd.f32 0.0, %v617
  %v619 = vpop.f32.mrb[0].mxu0
  %v620 = vpop.f32.mrb[0].mxu0
  %v621 = vadd.f32 0.0, %v620
  %v622 = vpop.f32.mrb[0].mxu0
  %623 = vmatprep.mubr.bf16.mxu0 0
  %624 = vmatmul.mubr.bf16.gmra.mrb[0].mxu0 %v361
  %v625 = vpop.f32.mrb[0].mxu0
  %v626 = vadd.f32 0.0, %v625
  %v627 = vpop.f32.mrb[0].mxu0
  %v628 = vpop.f32.mrb[0].mxu0
  %v629 = vadd.f32 0.0, %v628
  %v630 = vpop.f32.mrb[0].mxu0
  %631 = vmatprep.mubr.bf16.mxu0 0
  %632 = vmatmul.mubr.bf16.gmra.mrb[0].mxu0 %v364
  %v633 = vpop.f32.mrb[0].mxu0
  %v634 = vadd.f32 0.0, %v633
  %v635 = vpop.f32.mrb[0].mxu0
  %v636 = vpop.f32.mrb[0].mxu0
  %v637 = vadd.f32 0.0, %v636
  %v638 = vpop.f32.mrb[0].mxu0
  %639 = vmatprep.mubr.bf16.mxu0 0
  %640 = vmatmul.mubr.bf16.gmra.mrb[0].mxu0 %v367
  %v641 = vpop.f32.mrb[0].mxu0
  %v642 = vadd.f32 0.0, %v641
  %v643 = vpop.f32.mrb[0].mxu0
  %v644 = vpop.f32.mrb[0].mxu0
  %v645 = vadd.f32 0.0, %v644
  %v646 = vpop.f32.mrb[0].mxu0
  %647 = vmatprep.mubr.bf16.mxu0 0
  %648 = vmatmul.mubr.bf16.gmra.mrb[0].mxu0 %v370
  %v649 = vpop.f32.mrb[0].mxu0
  %v650 = vadd.f32 0.0, %v649
  %v651 = vpop.f32.mrb[0].mxu0
  %v652 = vpop.f32.mrb[0].mxu0
  %v653 = vadd.f32 0.0, %v652
  %v654 = vpop.f32.mrb[0].mxu0
  %655 = vmatprep.mubr.bf16.mxu0 0
  %656 = vmatmul.mubr.bf16.gmra.mrb[0].mxu0 %v373
  %v657 = vpop.f32.mrb[0].mxu0
  %v658 = vadd.f32 0.0, %v657
  %v659 = vpop.f32.mrb[0].mxu0
  %v660 = vpop.f32.mrb[0].mxu0
  %v661 = vadd.f32 0.0, %v660
  %v662 = vpop.f32.mrb[0].mxu0
  %663 = vdwg.mxu0
  %v664 = vadd.f32 %v410, %v426
  %v665 = vadd.f32 %v664, %v442
  %v666 = vadd.f32 %v665, %v458
  %v667 = vadd.f32 %v666, %v474
  %v668 = vadd.f32 %v667, %v490
  %v669 = vadd.f32 %v668, %v506
  %v670 = vadd.f32 %v669, %v522
  %v671 = vadd.f32 %v670, %v538
  %v672 = vadd.f32 %v671, %v554
  %v673 = vadd.f32 %v672, %v570
  %v674 = vadd.f32 %v673, %v586
  %v675 = vadd.f32 %v674, %v602
  %v676 = vadd.f32 %v675, %v618
  %v677 = vadd.f32 %v676, %v634
  %v678 = vadd.f32 %v677, %v650
  %v679 = vadd.f32 %v413, %v429
  %v680 = vadd.f32 %v679, %v445
  %v681 = vadd.f32 %v680, %v461
  %v682 = vadd.f32 %v681, %v477
  %v683 = vadd.f32 %v682, %v493
  %v684 = vadd.f32 %v683, %v509
  %v685 = vadd.f32 %v684, %v525
  %v686 = vadd.f32 %v685, %v541
  %v687 = vadd.f32 %v686, %v557
  %v688 = vadd.f32 %v687, %v573
  %v689 = vadd.f32 %v688, %v589
  %v690 = vadd.f32 %v689, %v605
  %v691 = vadd.f32 %v690, %v621
  %v692 = vadd.f32 %v691, %v637
  %v693 = vadd.f32 %v692, %v653
  %v694 = vadd.f32 %v418, %v434
  %v695 = vadd.f32 %v694, %v450
  %v696 = vadd.f32 %v695, %v466
  %v697 = vadd.f32 %v696, %v482
  %v698 = vadd.f32 %v697, %v498
  %v699 = vadd.f32 %v698, %v514
  %v700 = vadd.f32 %v699, %v530
  %v701 = vadd.f32 %v700, %v546
  %v702 = vadd.f32 %v701, %v562
  %v703 = vadd.f32 %v702, %v578
  %v704 = vadd.f32 %v703, %v594
  %v705 = vadd.f32 %v704, %v610
  %v706 = vadd.f32 %v705, %v626
  %v707 = vadd.f32 %v706, %v642
  %v708 = vadd.f32 %v707, %v658
  %v709 = vadd.f32 %v421, %v437
  %v710 = vadd.f32 %v709, %v453
  %v711 = vadd.f32 %v710, %v469
  %v712 = vadd.f32 %v711, %v485
  %v713 = vadd.f32 %v712, %v501
  %v714 = vadd.f32 %v713, %v517
  %v715 = vadd.f32 %v714, %v533
  %v716 = vadd.f32 %v715, %v549
  %v717 = vadd.f32 %v716, %v565
  %v718 = vadd.f32 %v717, %v581
  %v719 = vadd.f32 %v718, %v597
  %v720 = vadd.f32 %v719, %v613
  %v721 = vadd.f32 %v720, %v629
  %v722 = vadd.f32 %v721, %v645
  %v723 = vadd.f32 %v722, %v661
  %v724 = vmul.f32 %v410, %v410
  %v725 = vmul.f32 %v413, %v413
  %v726 = vmul.f32 %v418, %v418
  %v727 = vmul.f32 %v421, %v421
  %v728 = vmul.f32 %v426, %v426
  %v729 = vmul.f32 %v429, %v429
  %v730 = vmul.f32 %v434, %v434
  %v731 = vmul.f32 %v437, %v437
  %v732 = vmul.f32 %v442, %v442
  %v733 = vmul.f32 %v445, %v445
  %v734 = vmul.f32 %v450, %v450
  %v735 = vmul.f32 %v453, %v453
  %v736 = vmul.f32 %v458, %v458
  %v737 = vmul.f32 %v461, %v461
  %v738 = vmul.f32 %v466, %v466
  %v739 = vmul.f32 %v469, %v469
  %v740 = vmul.f32 %v474, %v474
  %v741 = vmul.f32 %v477, %v477
  %v742 = vmul.f32 %v482, %v482
  %v743 = vmul.f32 %v485, %v485
  %v744 = vmul.f32 %v490, %v490
  %v745 = vmul.f32 %v493, %v493
  %v746 = vmul.f32 %v498, %v498
  %v747 = vmul.f32 %v501, %v501
  %v748 = vmul.f32 %v506, %v506
  %v749 = vmul.f32 %v509, %v509
  %v750 = vmul.f32 %v514, %v514
  %v751 = vmul.f32 %v517, %v517
  %v752 = vmul.f32 %v522, %v522
  %v753 = vmul.f32 %v525, %v525
  %v754 = vmul.f32 %v530, %v530
  %v755 = vmul.f32 %v533, %v533
  %v756 = vmul.f32 %v538, %v538
  %v757 = vmul.f32 %v541, %v541
  %v758 = vmul.f32 %v546, %v546
  %v759 = vmul.f32 %v549, %v549
  %v760 = vmul.f32 %v554, %v554
  %v761 = vmul.f32 %v557, %v557
  %v762 = vmul.f32 %v562, %v562
  %v763 = vmul.f32 %v565, %v565
  %v764 = vmul.f32 %v570, %v570
  %v765 = vmul.f32 %v573, %v573
  %v766 = vmul.f32 %v578, %v578
  %v767 = vmul.f32 %v581, %v581
  %v768 = vmul.f32 %v586, %v586
  %v769 = vmul.f32 %v589, %v589
  %v770 = vmul.f32 %v594, %v594
  %v771 = vmul.f32 %v597, %v597
  %v772 = vmul.f32 %v602, %v602
  %v773 = vmul.f32 %v605, %v605
  %v774 = vmul.f32 %v610, %v610
  %v775 = vmul.f32 %v613, %v613
  %v776 = vmul.f32 %v618, %v618
  %v777 = vmul.f32 %v621, %v621
  %v778 = vmul.f32 %v626, %v626
  %v779 = vmul.f32 %v629, %v629
  %v780 = vmul.f32 %v634, %v634
  %v781 = vmul.f32 %v637, %v637
  %v782 = vmul.f32 %v642, %v642
  %v783 = vmul.f32 %v645, %v645
  %v784 = vmul.f32 %v650, %v650
  %v785 = vmul.f32 %v653, %v653
  %v786 = vmul.f32 %v658, %v658
  %v787 = vmul.f32 %v661, %v661
  %v788 = vadd.f32 %v724, %v728
  %v789 = vadd.f32 %v788, %v732
  %v790 = vadd.f32 %v789, %v736
  %v791 = vadd.f32 %v790, %v740
  %v792 = vadd.f32 %v791, %v744
  %v793 = vadd.f32 %v792, %v748
  %v794 = vadd.f32 %v793, %v752
  %v795 = vadd.f32 %v794, %v756
  %v796 = vadd.f32 %v795, %v760
  %v797 = vadd.f32 %v796, %v764
  %v798 = vadd.f32 %v797, %v768
  %v799 = vadd.f32 %v798, %v772
  %v800 = vadd.f32 %v799, %v776
  %v801 = vadd.f32 %v800, %v780
  %v802 = vadd.f32 %v801, %v784
  %v803 = vadd.f32 %v725, %v729
  %v804 = vadd.f32 %v803, %v733
  %v805 = vadd.f32 %v804, %v737
  %v806 = vadd.f32 %v805, %v741
  %v807 = vadd.f32 %v806, %v745
  %v808 = vadd.f32 %v807, %v749
  %v809 = vadd.f32 %v808, %v753
  %v810 = vadd.f32 %v809, %v757
  %v811 = vadd.f32 %v810, %v761
  %v812 = vadd.f32 %v811, %v765
  %v813 = vadd.f32 %v812, %v769
  %v814 = vadd.f32 %v813, %v773
  %v815 = vadd.f32 %v814, %v777
  %v816 = vadd.f32 %v815, %v781
  %v817 = vadd.f32 %v816, %v785
  %v818 = vadd.f32 %v726, %v730
  %v819 = vadd.f32 %v818, %v734
  %v820 = vadd.f32 %v819, %v738
  %v821 = vadd.f32 %v820, %v742
  %v822 = vadd.f32 %v821, %v746
  %v823 = vadd.f32 %v822, %v750
  %v824 = vadd.f32 %v823, %v754
  %v825 = vadd.f32 %v824, %v758
  %v826 = vadd.f32 %v825, %v762
  %v827 = vadd.f32 %v826, %v766
  %v828 = vadd.f32 %v827, %v770
  %v829 = vadd.f32 %v828, %v774
  %v830 = vadd.f32 %v829, %v778
  %v831 = vadd.f32 %v830, %v782
  %v832 = vadd.f32 %v831, %v786
  %v833 = vadd.f32 %v727, %v731
  %v834 = vadd.f32 %v833, %v735
  %v835 = vadd.f32 %v834, %v739
  %v836 = vadd.f32 %v835, %v743
  %v837 = vadd.f32 %v836, %v747
  %v838 = vadd.f32 %v837, %v751
  %v839 = vadd.f32 %v838, %v755
  %v840 = vadd.f32 %v839, %v759
  %v841 = vadd.f32 %v840, %v763
  %v842 = vadd.f32 %v841, %v767
  %v843 = vadd.f32 %v842, %v771
  %v844 = vadd.f32 %v843, %v775
  %v845 = vadd.f32 %v844, %v779
  %v846 = vadd.f32 %v845, %v783
  %v847 = vadd.f32 %v846, %v787
  %v848 = vld [vmem:[%s4] sm:$0xff]
  %v849 = vadd.f32 %v678, %v693
  %v850 = vadd.f32 %v849, %v708
  %v851 = vadd.f32 %v850, %v723
  %v852 = vadd.f32 %v848, %v851
  %853 = vst [vmem:[%s4] sm:$0xff] %v852
  %s854 = scalar_lea.vmem %s4, 8
  %v855 = vld [vmem:[%s854] sm:$0xff]
  %v856 = vadd.f32 %v802, %v817
  %v857 = vadd.f32 %v856, %v832
  %v858 = vadd.f32 %v857, %v847
  %v859 = vadd.f32 %v855, %v858
  %860 = vst [vmem:[%s854] sm:$0xff] %v859
  // Predicated region
  $region22: #{pointnet_sa_msg_forward.6} parent=0 // pred_check
    _
  $region23: #{pointnet_sa_msg_forward.6} parent=0 // pred_check_branch
    %862 = sbr.rel (0) target = $region25
  $region24: #{pointnet_sa_msg_forward.6} parent=0 // pred_region
    _
  $region25: #{pointnet_sa_msg_forward.6} parent=0 // pred_fallthru
    _
  // Predicated region
  $region26: #{pointnet_sa_msg_forward.6} parent=0 // pred_check
    _
  $region27: #{pointnet_sa_msg_forward.6} parent=0 // pred_check_branch
    %864 = sbr.rel (0) target = $region29
  $region28: #{pointnet_sa_msg_forward.6} parent=0 // pred_region
    _
  $region29: #{pointnet_sa_msg_forward.6} parent=0 // pred_fallthru
    _

// kernel: pointnet_sa_msg_forward.7
$region0: #{pointnet_sa_msg_forward.7}
  #allocation0 [shape = 'u32[]', space=smem, size = 0x4, offset = 0x4, fixed_abs, tag = 'smem constant byte address 0x4 - core index']
  #allocation1 [shape = 'u32[144,128]{1,0:T(1,128)}', space=vmem, size = 0x12000, scoped, tag = 'internal scratch']
  %s0 = inlined_call_operand.vmem [shape: bf16[16,32,16], index: 0, kind: input, shape index: {}]
  %s1 = inlined_call_operand.vmem [shape: bf16[16,128], index: 1, kind: input, shape index: {}]
  %s2 = inlined_call_operand.vmem [shape: bf16[2,128,128], index: 2, kind: input, shape index: {}]
  %s3 = inlined_call_operand.vmem [shape: f32[2,2,128], index: 3, kind: input, shape index: {}]
  %s4 = inlined_call_operand.vmem [shape: f32[2,8,128], index: 4, kind: output, shape index: {0}]
  %s5 = inlined_call_operand.vmem [shape: f32[2,32,128], index: 5, kind: output, shape index: {1}]
  %6 = xla_tuple %s4, %s5
  %s7 = sld [smem:[#allocation0]]
  $region38: #{pointnet_sa_msg_forward.7} parent=0
    _
  %s9 = ssub.s32 1, %s7
  %s10 = scalar_select 0, %s9, %s7
  // Predicated region
  $region2: #{pointnet_sa_msg_forward.7} parent=0 // pred_check
    _
  $region3: #{pointnet_sa_msg_forward.7} parent=0 // pred_check_branch
    %12 = sbr.rel (0) target = $region5
  $region4: #{pointnet_sa_msg_forward.7} parent=0 // pred_region
    %s13 = sadd.s32 0, 0
    %s14 = smul.u32 4, %s13
    %p15 = scmp.lt.s32.totalorder %s14, 3
    %s16 = scalar_select %p15, %s14, 3
    %s17 = smul.addr %s16, 4
    %s18 = scalar_lea.vmem %s0, %s17
    %s19 = sadd.s32 0, 0
    %s20 = smul.u32 4, %s19
  $region5: #{pointnet_sa_msg_forward.7} parent=0 // pred_fallthru
    _
  // Predicated region
  $region6: #{pointnet_sa_msg_forward.7} parent=0 // pred_check
    _
  $region7: #{pointnet_sa_msg_forward.7} parent=0 // pred_check_branch
    %22 = sbr.rel (0) target = $region9
  $region8: #{pointnet_sa_msg_forward.7} parent=0 // pred_region
    _
  $region9: #{pointnet_sa_msg_forward.7} parent=0 // pred_fallthru
    _
  // Predicated region
  $region10: #{pointnet_sa_msg_forward.7} parent=0 // pred_check
    _
  $region11: #{pointnet_sa_msg_forward.7} parent=0 // pred_check_branch
    %24 = sbr.rel (0) target = $region13
  $region12: #{pointnet_sa_msg_forward.7} parent=0 // pred_region
    _
  $region13: #{pointnet_sa_msg_forward.7} parent=0 // pred_fallthru
    _
  // Predicated region
  $region14: #{pointnet_sa_msg_forward.7} parent=0 // pred_check
    _
  $region15: #{pointnet_sa_msg_forward.7} parent=0 // pred_check_branch
    %26 = sbr.rel (0) target = $region17
  $region16: #{pointnet_sa_msg_forward.7} parent=0 // pred_region
    _
  $region17: #{pointnet_sa_msg_forward.7} parent=0 // pred_fallthru
    _
  %s27 = sadd.s32 0, 0
  %s28 = smul.u32 4, %s27
  %p29 = scmp.lt.s32.totalorder %s28, 3
  %s30 = scalar_select %p29, %s28, 3
  %s31 = smul.addr %s30, 4
  %s32 = scalar_lea.vmem %s0, %s31
  %s33 = sadd.s32 0, 0
  %s34 = smul.u32 4, %s33
  %p35 = scmp.lt.s32.totalorder %s34, 3
  %s36 = scalar_select %p35, %s34, 3
  %s37 = smul.addr %s36, 8
  %s38 = scalar_lea.vmem %s5, %s37
  %s39 = sadd.s32 0, 0
  %s40 = smul.u32 4, %s39
  %p41 = scmp.lt.s32.totalorder %s40, 3
  %s42 = scalar_select %p41, %s40, 3
  %s43 = smul.addr %s42, 4
  %s44 = scalar_lea.vmem %s0, %s43
  %s45 = sadd.s32 0, 0
  %s46 = smul.u32 4, %s45
  %s47 = sadd.s32 0, 0
  %s48 = smul.u32 4, %s47
  %p49 = scmp.lt.s32.totalorder %s48, 3
  %s50 = scalar_select %p49, %s48, 3
  %s51 = smul.addr %s50, 8
  %s52 = scalar_lea.vmem %s5, %s51
  %s53 = sadd.s32 0, 0
  %s54 = smul.u32 4, %s53
  %p56 = scmp.eq.s32.totalorder 0, 0
  // Predicated region
  $region18: #{pointnet_sa_msg_forward.7} parent=0 // pred_check
    %p57 = pneg %p56
  $region19: #{pointnet_sa_msg_forward.7} parent=0 // pred_check_branch
    %59 = sbr.rel (%p57) target = $region21
  $region20: #{pointnet_sa_msg_forward.7} parent=0 // pred_region
    %60 = vst [vmem:[%s4] sm:$0xff] 0.0
    %61 = vst [vmem:[%s4 + $0x8] sm:$0xff] 0.0
  $region21: #{pointnet_sa_msg_forward.7} parent=0 // pred_fallthru
    _
  %v62 = vld [vmem:[%s44] sm:$0xf]
  %v63 = vld [vmem:[%s44 + $0x4] sm:$0xf]
  %v64 = vld [vmem:[%s44 + $0x8] sm:$0xf]
  %v65 = vld [vmem:[%s44 + $0xc] sm:$0xf]
  %v66 = vld [vmem:[%s44 + $0x10] sm:$0xf]
  %v67 = vld [vmem:[%s44 + $0x14] sm:$0xf]
  %v68 = vld [vmem:[%s44 + $0x18] sm:$0xf]
  %v69 = vld [vmem:[%s44 + $0x1c] sm:$0xf]
  %v70 = vld [vmem:[%s44 + $0x20] sm:$0xf]
  %v71 = vld [vmem:[%s44 + $0x24] sm:$0xf]
  %v72 = vld [vmem:[%s44 + $0x28] sm:$0xf]
  %v73 = vld [vmem:[%s44 + $0x2c] sm:$0xf]
  %v74 = vld [vmem:[%s44 + $0x30] sm:$0xf]
  %v75 = vld [vmem:[%s44 + $0x34] sm:$0xf]
  %v76 = vld [vmem:[%s44 + $0x38] sm:$0xf]
  %v77 = vld [vmem:[%s44 + $0x3c] sm:$0xf]
  %v78 = vld [vmem:[%s44 + $0x40] sm:$0xf]
  %v79 = vld [vmem:[%s44 + $0x44] sm:$0xf]
  %v80 = vld [vmem:[%s44 + $0x48] sm:$0xf]
  %v81 = vld [vmem:[%s44 + $0x4c] sm:$0xf]
  %v82 = vld [vmem:[%s44 + $0x50] sm:$0xf]
  %v83 = vld [vmem:[%s44 + $0x54] sm:$0xf]
  %v84 = vld [vmem:[%s44 + $0x58] sm:$0xf]
  %v85 = vld [vmem:[%s44 + $0x5c] sm:$0xf]
  %v86 = vld [vmem:[%s44 + $0x60] sm:$0xf]
  %v87 = vld [vmem:[%s44 + $0x64] sm:$0xf]
  %v88 = vld [vmem:[%s44 + $0x68] sm:$0xf]
  %v89 = vld [vmem:[%s44 + $0x6c] sm:$0xf]
  %v90 = vld [vmem:[%s44 + $0x70] sm:$0xf]
  %v91 = vld [vmem:[%s44 + $0x74] sm:$0xf]
  %v92 = vld [vmem:[%s44 + $0x78] sm:$0xf]
  %v93 = vld [vmem:[%s44 + $0x7c] sm:$0xf]
  %v94 = vld [vmem:[%s44 + $0x80] sm:$0xf]
  %v95 = vld [vmem:[%s44 + $0x84] sm:$0xf]
  %v96 = vld [vmem:[%s44 + $0x88] sm:$0xf]
  %v97 = vld [vmem:[%s44 + $0x8c] sm:$0xf]
  %v98 = vld [vmem:[%s44 + $0x90] sm:$0xf]
  %v99 = vld [vmem:[%s44 + $0x94] sm:$0xf]
  %v100 = vld [vmem:[%s44 + $0x98] sm:$0xf]
  %v101 = vld [vmem:[%s44 + $0x9c] sm:$0xf]
  %v102 = vld [vmem:[%s44 + $0xa0] sm:$0xf]
  %v103 = vld [vmem:[%s44 + $0xa4] sm:$0xf]
  %v104 = vld [vmem:[%s44 + $0xa8] sm:$0xf]
  %v105 = vld [vmem:[%s44 + $0xac] sm:$0xf]
  %v106 = vld [vmem:[%s44 + $0xb0] sm:$0xf]
  %v107 = vld [vmem:[%s44 + $0xb4] sm:$0xf]
  %v108 = vld [vmem:[%s44 + $0xb8] sm:$0xf]
  %v109 = vld [vmem:[%s44 + $0xbc] sm:$0xf]
  %v110 = vld [vmem:[%s44 + $0xc0] sm:$0xf]
  %v111 = vld [vmem:[%s44 + $0xc4] sm:$0xf]
  %v112 = vld [vmem:[%s44 + $0xc8] sm:$0xf]
  %v113 = vld [vmem:[%s44 + $0xcc] sm:$0xf]
  %v114 = vld [vmem:[%s44 + $0xd0] sm:$0xf]
  %v115 = vld [vmem:[%s44 + $0xd4] sm:$0xf]
  %v116 = vld [vmem:[%s44 + $0xd8] sm:$0xf]
  %v117 = vld [vmem:[%s44 + $0xdc] sm:$0xf]
  %v118 = vld [vmem:[%s44 + $0xe0] sm:$0xf]
  %v119 = vld [vmem:[%s44 + $0xe4] sm:$0xf]
  %v120 = vld [vmem:[%s44 + $0xe8] sm:$0xf]
  %v121 = vld [vmem:[%s44 + $0xec] sm:$0xf]
  %v122 = vld [vmem:[%s44 + $0xf0] sm:$0xf]
  %v123 = vld [vmem:[%s44 + $0xf4] sm:$0xf]
  %v124 = vld [vmem:[%s44 + $0xf8] sm:$0xf]
  %v125 = vld [vmem:[%s44 + $0xfc] sm:$0xf]
  %v126 = vld [vmem:[%s1] sm:$0xf]
  %v127 = vld [vmem:[%s1 + $0x4] sm:$0xf]
  %v192 = vunpack.c.l.b16 %v62
  %v193 = vunpack.c.l.b16 %v63
  %v194 = vunpack.c.l.b16 %v64
  %v195 = vunpack.c.l.b16 %v65
  %v196 = vunpack.c.l.b16 %v66
  %v197 = vunpack.c.l.b16 %v67
  %v198 = vunpack.c.l.b16 %v68
  %v199 = vunpack.c.l.b16 %v69
  %v200 = vunpack.c.l.b16 %v70
  %v201 = vunpack.c.l.b16 %v71
  %v202 = vunpack.c.l.b16 %v72
  %v203 = vunpack.c.l.b16 %v73
  %v204 = vunpack.c.l.b16 %v74
  %v205 = vunpack.c.l.b16 %v75
  %v206 = vunpack.c.l.b16 %v76
  %v207 = vunpack.c.l.b16 %v77
  %v208 = vunpack.c.l.b16 %v78
  %v209 = vunpack.c.l.b16 %v79
  %v210 = vunpack.c.l.b16 %v80
  %v211 = vunpack.c.l.b16 %v81
  %v212 = vunpack.c.l.b16 %v82
  %v213 = vunpack.c.l.b16 %v83
  %v214 = vunpack.c.l.b16 %v84
  %v215 = vunpack.c.l.b16 %v85
  %v216 = vunpack.c.l.b16 %v86
  %v217 = vunpack.c.l.b16 %v87
  %v218 = vunpack.c.l.b16 %v88
  %v219 = vunpack.c.l.b16 %v89
  %v220 = vunpack.c.l.b16 %v90
  %v221 = vunpack.c.l.b16 %v91
  %v222 = vunpack.c.l.b16 %v92
  %v223 = vunpack.c.l.b16 %v93
  %v224 = vunpack.c.l.b16 %v94
  %v225 = vunpack.c.l.b16 %v95
  %v226 = vunpack.c.l.b16 %v96
  %v227 = vunpack.c.l.b16 %v97
  %v228 = vunpack.c.l.b16 %v98
  %v229 = vunpack.c.l.b16 %v99
  %v230 = vunpack.c.l.b16 %v100
  %v231 = vunpack.c.l.b16 %v101
  %v232 = vunpack.c.l.b16 %v102
  %v233 = vunpack.c.l.b16 %v103
  %v234 = vunpack.c.l.b16 %v104
  %v235 = vunpack.c.l.b16 %v105
  %v236 = vunpack.c.l.b16 %v106
  %v237 = vunpack.c.l.b16 %v107
  %v238 = vunpack.c.l.b16 %v108
  %v239 = vunpack.c.l.b16 %v109
  %v240 = vunpack.c.l.b16 %v110
  %v241 = vunpack.c.l.b16 %v111
  %v242 = vunpack.c.l.b16 %v112
  %v243 = vunpack.c.l.b16 %v113
  %v244 = vunpack.c.l.b16 %v114
  %v245 = vunpack.c.l.b16 %v115
  %v246 = vunpack.c.l.b16 %v116
  %v247 = vunpack.c.l.b16 %v117
  %v248 = vunpack.c.l.b16 %v118
  %v249 = vunpack.c.l.b16 %v119
  %v250 = vunpack.c.l.b16 %v120
  %v251 = vunpack.c.l.b16 %v121
  %v252 = vunpack.c.l.b16 %v122
  %v253 = vunpack.c.l.b16 %v123
  %v254 = vunpack.c.l.b16 %v124
  %v255 = vunpack.c.l.b16 %v125
  %v256 = vpack.c.b16 %v193, %v192
  %v257 = vpack.c.b16 %v195, %v194
  %v258 = vpack.c.b16 %v197, %v196
  %v259 = vpack.c.b16 %v199, %v198
  %v260 = vpack.c.b16 %v201, %v200
  %v261 = vpack.c.b16 %v203, %v202
  %v262 = vpack.c.b16 %v205, %v204
  %v263 = vpack.c.b16 %v207, %v206
  %v264 = vpack.c.b16 %v209, %v208
  %v265 = vpack.c.b16 %v211, %v210
  %v266 = vpack.c.b16 %v213, %v212
  %v267 = vpack.c.b16 %v215, %v214
  %v268 = vpack.c.b16 %v217, %v216
  %v269 = vpack.c.b16 %v219, %v218
  %v270 = vpack.c.b16 %v221, %v220
  %v271 = vpack.c.b16 %v223, %v222
  %v272 = vpack.c.b16 %v225, %v224
  %v273 = vpack.c.b16 %v227, %v226
  %v274 = vpack.c.b16 %v229, %v228
  %v275 = vpack.c.b16 %v231, %v230
  %v276 = vpack.c.b16 %v233, %v232
  %v277 = vpack.c.b16 %v235, %v234
  %v278 = vpack.c.b16 %v237, %v236
  %v279 = vpack.c.b16 %v239, %v238
  %v280 = vpack.c.b16 %v241, %v240
  %v281 = vpack.c.b16 %v243, %v242
  %v282 = vpack.c.b16 %v245, %v244
  %v283 = vpack.c.b16 %v247, %v246
  %v284 = vpack.c.b16 %v249, %v248
  %v285 = vpack.c.b16 %v251, %v250
  %v286 = vpack.c.b16 %v253, %v252
  %v287 = vpack.c.b16 %v255, %v254
  %v290 = vunpack.c.l.b16 %v126
  %v291 = vunpack.c.l.b16 %v127
  %v292 = vpack.c.b16 %v291, %v290
  %vm294 = vcmask 130048
  %v296 = vsel %vm294, %v256, 0
  %v299 = vsel %vm294, %v257, 0
  %v302 = vsel %vm294, %v258, 0
  %v305 = vsel %vm294, %v259, 0
  %v308 = vsel %vm294, %v260, 0
  %v311 = vsel %vm294, %v261, 0
  %v314 = vsel %vm294, %v262, 0
  %v317 = vsel %vm294, %v263, 0
  %v320 = vsel %vm294, %v264, 0
  %v323 = vsel %vm294, %v265, 0
  %v326 = vsel %vm294, %v266, 0
  %v329 = vsel %vm294, %v267, 0
  %v332 = vsel %vm294, %v268, 0
  %v335 = vsel %vm294, %v269, 0
  %v338 = vsel %vm294, %v270, 0
  %v341 = vsel %vm294, %v271, 0
  %v344 = vsel %vm294, %v272, 0
  %v347 = vsel %vm294, %v273, 0
  %v350 = vsel %vm294, %v274, 0
  %v353 = vsel %vm294, %v275, 0
  %v356 = vsel %vm294, %v276, 0
  %v359 = vsel %vm294, %v277, 0
  %v362 = vsel %vm294, %v278, 0
  %v365 = vsel %vm294, %v279, 0
  %v368 = vsel %vm294, %v280, 0
  %v371 = vsel %vm294, %v281, 0
  %v374 = vsel %vm294, %v282, 0
  %v377 = vsel %vm294, %v283, 0
  %v380 = vsel %vm294, %v284, 0
  %v383 = vsel %vm294, %v285, 0
  %v386 = vsel %vm294, %v286, 0
  %v389 = vsel %vm294, %v287, 0
  %391 = vmatprep.subr.bf16.mxu0 0
  %392 = vmatpush1.bf16.msra.mxu0 %v292
  %393 = vmatprep.subr.bf16.mxu0 0
  %394 = vmatpush1.bf16.msra.mxu0 0
  %395 = vmatprep.subr.bf16.mxu0 0
  %396 = vmatpush1.bf16.msra.mxu0 0
  %397 = vmatprep.subr.bf16.mxu0 0
  %398 = vmatpush1.bf16.msra.mxu0 0
  %399 = vmatprep.subr.bf16.mxu0 0
  %400 = vmatpush1.bf16.msra.mxu0 0
  %401 = vmatprep.subr.bf16.mxu0 0
  %402 = vmatpush1.bf16.msra.mxu0 0
  %403 = vmatprep.subr.bf16.mxu0 0
  %404 = vmatpush1.bf16.msra.mxu0 0
  %405 = vmatprep.subr.bf16.mxu0 0
  %406 = vmatpush1.bf16.msra.mxu0 0
  %407 = vmatprep.subr.bf16.mxu0 0
  %408 = vmatpush1.bf16.msra.mxu0 0
  %409 = vmatprep.subr.bf16.mxu0 0
  %410 = vmatpush1.bf16.msra.mxu0 0
  %411 = vmatprep.subr.bf16.mxu0 0
  %412 = vmatpush1.bf16.msra.mxu0 0
  %413 = vmatprep.subr.bf16.mxu0 0
  %414 = vmatpush1.bf16.msra.mxu0 0
  %415 = vmatprep.subr.bf16.mxu0 0
  %416 = vmatpush1.bf16.msra.mxu0 0
  %417 = vmatprep.subr.bf16.mxu0 0
  %418 = vmatpush1.bf16.msra.mxu0 0
  %419 = vmatprep.subr.bf16.mxu0 0
  %420 = vmatpush1.bf16.msra.mxu0 0
  %421 = vmatprep.subr.bf16.mxu0 0
  %422 = vmatpush1.bf16.msra.mxu0 0
  %423 = vmatprep.mubr.bf16.mxu0 0
  %424 = vmatmul.mubr.bf16.gmra.mrb[0].mxu0 %v296
  %v425 = vpop.f32.mrb[0].mxu0
  %v426 = vadd.f32 0.0, %v425
  %v427 = vpop.f32.mrb[0].mxu0
  %v428 = vpop.f32.mrb[0].mxu0
  %v429 = vadd.f32 0.0, %v428
  %v430 = vpop.f32.mrb[0].mxu0
  %431 = vmatprep.mubr.bf16.mxu0 0
  %432 = vmatmul.mubr.bf16.gmra.mrb[0].mxu0 %v299
  %v433 = vpop.f32.mrb[0].mxu0
  %v434 = vadd.f32 0.0, %v433
  %v435 = vpop.f32.mrb[0].mxu0
  %v436 = vpop.f32.mrb[0].mxu0
  %v437 = vadd.f32 0.0, %v436
  %v438 = vpop.f32.mrb[0].mxu0
  %439 = vmatprep.mubr.bf16.mxu0 0
  %440 = vmatmul.mubr.bf16.gmra.mrb[0].mxu0 %v302
  %v441 = vpop.f32.mrb[0].mxu0
  %v442 = vadd.f32 0.0, %v441
  %v443 = vpop.f32.mrb[0].mxu0
  %v444 = vpop.f32.mrb[0].mxu0
  %v445 = vadd.f32 0.0, %v444
  %v446 = vpop.f32.mrb[0].mxu0
  %447 = vmatprep.mubr.bf16.mxu0 0
  %448 = vmatmul.mubr.bf16.gmra.mrb[0].mxu0 %v305
  %v449 = vpop.f32.mrb[0].mxu0
  %v450 = vadd.f32 0.0, %v449
  %v451 = vpop.f32.mrb[0].mxu0
  %v452 = vpop.f32.mrb[0].mxu0
  %v453 = vadd.f32 0.0, %v452
  %v454 = vpop.f32.mrb[0].mxu0
  %455 = vmatprep.mubr.bf16.mxu0 0
  %456 = vmatmul.mubr.bf16.gmra.mrb[0].mxu0 %v308
  %v457 = vpop.f32.mrb[0].mxu0
  %v458 = vadd.f32 0.0, %v457
  %v459 = vpop.f32.mrb[0].mxu0
  %v460 = vpop.f32.mrb[0].mxu0
  %v461 = vadd.f32 0.0, %v460
  %v462 = vpop.f32.mrb[0].mxu0
  %463 = vmatprep.mubr.bf16.mxu0 0
  %464 = vmatmul.mubr.bf16.gmra.mrb[0].mxu0 %v311
  %v465 = vpop.f32.mrb[0].mxu0
  %v466 = vadd.f32 0.0, %v465
  %v467 = vpop.f32.mrb[0].mxu0
  %v468 = vpop.f32.mrb[0].mxu0
  %v469 = vadd.f32 0.0, %v468
  %v470 = vpop.f32.mrb[0].mxu0
  %471 = vmatprep.mubr.bf16.mxu0 0
  %472 = vmatmul.mubr.bf16.gmra.mrb[0].mxu0 %v314
  %v473 = vpop.f32.mrb[0].mxu0
  %v474 = vadd.f32 0.0, %v473
  %v475 = vpop.f32.mrb[0].mxu0
  %v476 = vpop.f32.mrb[0].mxu0
  %v477 = vadd.f32 0.0, %v476
  %v478 = vpop.f32.mrb[0].mxu0
  %479 = vmatprep.mubr.bf16.mxu0 0
  %480 = vmatmul.mubr.bf16.gmra.mrb[0].mxu0 %v317
  %v481 = vpop.f32.mrb[0].mxu0
  %v482 = vadd.f32 0.0, %v481
  %v483 = vpop.f32.mrb[0].mxu0
  %v484 = vpop.f32.mrb[0].mxu0
  %v485 = vadd.f32 0.0, %v484
  %v486 = vpop.f32.mrb[0].mxu0
  %487 = vmatprep.mubr.bf16.mxu0 0
  %488 = vmatmul.mubr.bf16.gmra.mrb[0].mxu0 %v320
  %v489 = vpop.f32.mrb[0].mxu0
  %v490 = vadd.f32 0.0, %v489
  %v491 = vpop.f32.mrb[0].mxu0
  %v492 = vpop.f32.mrb[0].mxu0
  %v493 = vadd.f32 0.0, %v492
  %v494 = vpop.f32.mrb[0].mxu0
  %495 = vmatprep.mubr.bf16.mxu0 0
  %496 = vmatmul.mubr.bf16.gmra.mrb[0].mxu0 %v323
  %v497 = vpop.f32.mrb[0].mxu0
  %v498 = vadd.f32 0.0, %v497
  %v499 = vpop.f32.mrb[0].mxu0
  %v500 = vpop.f32.mrb[0].mxu0
  %v501 = vadd.f32 0.0, %v500
  %v502 = vpop.f32.mrb[0].mxu0
  %503 = vmatprep.mubr.bf16.mxu0 0
  %504 = vmatmul.mubr.bf16.gmra.mrb[0].mxu0 %v326
  %v505 = vpop.f32.mrb[0].mxu0
  %v506 = vadd.f32 0.0, %v505
  %v507 = vpop.f32.mrb[0].mxu0
  %v508 = vpop.f32.mrb[0].mxu0
  %v509 = vadd.f32 0.0, %v508
  %v510 = vpop.f32.mrb[0].mxu0
  %511 = vmatprep.mubr.bf16.mxu0 0
  %512 = vmatmul.mubr.bf16.gmra.mrb[0].mxu0 %v329
  %v513 = vpop.f32.mrb[0].mxu0
  %v514 = vadd.f32 0.0, %v513
  %v515 = vpop.f32.mrb[0].mxu0
  %v516 = vpop.f32.mrb[0].mxu0
  %v517 = vadd.f32 0.0, %v516
  %v518 = vpop.f32.mrb[0].mxu0
  %519 = vmatprep.mubr.bf16.mxu0 0
  %520 = vmatmul.mubr.bf16.gmra.mrb[0].mxu0 %v332
  %v521 = vpop.f32.mrb[0].mxu0
  %v522 = vadd.f32 0.0, %v521
  %v523 = vpop.f32.mrb[0].mxu0
  %v524 = vpop.f32.mrb[0].mxu0
  %v525 = vadd.f32 0.0, %v524
  %v526 = vpop.f32.mrb[0].mxu0
  %527 = vmatprep.mubr.bf16.mxu0 0
  %528 = vmatmul.mubr.bf16.gmra.mrb[0].mxu0 %v335
  %v529 = vpop.f32.mrb[0].mxu0
  %v530 = vadd.f32 0.0, %v529
  %v531 = vpop.f32.mrb[0].mxu0
  %v532 = vpop.f32.mrb[0].mxu0
  %v533 = vadd.f32 0.0, %v532
  %v534 = vpop.f32.mrb[0].mxu0
  %535 = vmatprep.mubr.bf16.mxu0 0
  %536 = vmatmul.mubr.bf16.gmra.mrb[0].mxu0 %v338
  %v537 = vpop.f32.mrb[0].mxu0
  %v538 = vadd.f32 0.0, %v537
  %v539 = vpop.f32.mrb[0].mxu0
  %v540 = vpop.f32.mrb[0].mxu0
  %v541 = vadd.f32 0.0, %v540
  %v542 = vpop.f32.mrb[0].mxu0
  %543 = vmatprep.mubr.bf16.mxu0 0
  %544 = vmatmul.mubr.bf16.gmra.mrb[0].mxu0 %v341
  %v545 = vpop.f32.mrb[0].mxu0
  %v546 = vadd.f32 0.0, %v545
  %v547 = vpop.f32.mrb[0].mxu0
  %v548 = vpop.f32.mrb[0].mxu0
  %v549 = vadd.f32 0.0, %v548
  %v550 = vpop.f32.mrb[0].mxu0
  %551 = vmatprep.mubr.bf16.mxu0 0
  %552 = vmatmul.mubr.bf16.gmra.mrb[0].mxu0 %v344
  %v553 = vpop.f32.mrb[0].mxu0
  %v554 = vadd.f32 0.0, %v553
  %v555 = vpop.f32.mrb[0].mxu0
  %v556 = vpop.f32.mrb[0].mxu0
  %v557 = vadd.f32 0.0, %v556
  %v558 = vpop.f32.mrb[0].mxu0
  %559 = vmatprep.mubr.bf16.mxu0 0
  %560 = vmatmul.mubr.bf16.gmra.mrb[0].mxu0 %v347
  %v561 = vpop.f32.mrb[0].mxu0
  %v562 = vadd.f32 0.0, %v561
  %v563 = vpop.f32.mrb[0].mxu0
  %v564 = vpop.f32.mrb[0].mxu0
  %v565 = vadd.f32 0.0, %v564
  %v566 = vpop.f32.mrb[0].mxu0
  %567 = vmatprep.mubr.bf16.mxu0 0
  %568 = vmatmul.mubr.bf16.gmra.mrb[0].mxu0 %v350
  %v569 = vpop.f32.mrb[0].mxu0
  %v570 = vadd.f32 0.0, %v569
  %v571 = vpop.f32.mrb[0].mxu0
  %v572 = vpop.f32.mrb[0].mxu0
  %v573 = vadd.f32 0.0, %v572
  %v574 = vpop.f32.mrb[0].mxu0
  %575 = vmatprep.mubr.bf16.mxu0 0
  %576 = vmatmul.mubr.bf16.gmra.mrb[0].mxu0 %v353
  %v577 = vpop.f32.mrb[0].mxu0
  %v578 = vadd.f32 0.0, %v577
  %v579 = vpop.f32.mrb[0].mxu0
  %v580 = vpop.f32.mrb[0].mxu0
  %v581 = vadd.f32 0.0, %v580
  %v582 = vpop.f32.mrb[0].mxu0
  %583 = vmatprep.mubr.bf16.mxu0 0
  %584 = vmatmul.mubr.bf16.gmra.mrb[0].mxu0 %v356
  %v585 = vpop.f32.mrb[0].mxu0
  %v586 = vadd.f32 0.0, %v585
  %v587 = vpop.f32.mrb[0].mxu0
  %v588 = vpop.f32.mrb[0].mxu0
  %v589 = vadd.f32 0.0, %v588
  %v590 = vpop.f32.mrb[0].mxu0
  %591 = vmatprep.mubr.bf16.mxu0 0
  %592 = vmatmul.mubr.bf16.gmra.mrb[0].mxu0 %v359
  %v593 = vpop.f32.mrb[0].mxu0
  %v594 = vadd.f32 0.0, %v593
  %v595 = vpop.f32.mrb[0].mxu0
  %v596 = vpop.f32.mrb[0].mxu0
  %v597 = vadd.f32 0.0, %v596
  %v598 = vpop.f32.mrb[0].mxu0
  %599 = vmatprep.mubr.bf16.mxu0 0
  %600 = vmatmul.mubr.bf16.gmra.mrb[0].mxu0 %v362
  %v601 = vpop.f32.mrb[0].mxu0
  %v602 = vadd.f32 0.0, %v601
  %v603 = vpop.f32.mrb[0].mxu0
  %v604 = vpop.f32.mrb[0].mxu0
  %v605 = vadd.f32 0.0, %v604
  %v606 = vpop.f32.mrb[0].mxu0
  %607 = vmatprep.mubr.bf16.mxu0 0
  %608 = vmatmul.mubr.bf16.gmra.mrb[0].mxu0 %v365
  %v609 = vpop.f32.mrb[0].mxu0
  %v610 = vadd.f32 0.0, %v609
  %v611 = vpop.f32.mrb[0].mxu0
  %v612 = vpop.f32.mrb[0].mxu0
  %v613 = vadd.f32 0.0, %v612
  %v614 = vpop.f32.mrb[0].mxu0
  %615 = vmatprep.mubr.bf16.mxu0 0
  %616 = vmatmul.mubr.bf16.gmra.mrb[0].mxu0 %v368
  %v617 = vpop.f32.mrb[0].mxu0
  %v618 = vadd.f32 0.0, %v617
  %v619 = vpop.f32.mrb[0].mxu0
  %v620 = vpop.f32.mrb[0].mxu0
  %v621 = vadd.f32 0.0, %v620
  %v622 = vpop.f32.mrb[0].mxu0
  %623 = vmatprep.mubr.bf16.mxu0 0
  %624 = vmatmul.mubr.bf16.gmra.mrb[0].mxu0 %v371
  %v625 = vpop.f32.mrb[0].mxu0
  %v626 = vadd.f32 0.0, %v625
  %v627 = vpop.f32.mrb[0].mxu0
  %v628 = vpop.f32.mrb[0].mxu0
  %v629 = vadd.f32 0.0, %v628
  %v630 = vpop.f32.mrb[0].mxu0
  %631 = vmatprep.mubr.bf16.mxu0 0
  %632 = vmatmul.mubr.bf16.gmra.mrb[0].mxu0 %v374
  %v633 = vpop.f32.mrb[0].mxu0
  %v634 = vadd.f32 0.0, %v633
  %v635 = vpop.f32.mrb[0].mxu0
  %v636 = vpop.f32.mrb[0].mxu0
  %v637 = vadd.f32 0.0, %v636
  %v638 = vpop.f32.mrb[0].mxu0
  %639 = vmatprep.mubr.bf16.mxu0 0
  %640 = vmatmul.mubr.bf16.gmra.mrb[0].mxu0 %v377
  %v641 = vpop.f32.mrb[0].mxu0
  %v642 = vadd.f32 0.0, %v641
  %v643 = vpop.f32.mrb[0].mxu0
  %v644 = vpop.f32.mrb[0].mxu0
  %v645 = vadd.f32 0.0, %v644
  %v646 = vpop.f32.mrb[0].mxu0
  %647 = vmatprep.mubr.bf16.mxu0 0
  %648 = vmatmul.mubr.bf16.gmra.mrb[0].mxu0 %v380
  %v649 = vpop.f32.mrb[0].mxu0
  %v650 = vadd.f32 0.0, %v649
  %v651 = vpop.f32.mrb[0].mxu0
  %v652 = vpop.f32.mrb[0].mxu0
  %v653 = vadd.f32 0.0, %v652
  %v654 = vpop.f32.mrb[0].mxu0
  %655 = vmatprep.mubr.bf16.mxu0 0
  %656 = vmatmul.mubr.bf16.gmra.mrb[0].mxu0 %v383
  %v657 = vpop.f32.mrb[0].mxu0
  %v658 = vadd.f32 0.0, %v657
  %v659 = vpop.f32.mrb[0].mxu0
  %v660 = vpop.f32.mrb[0].mxu0
  %v661 = vadd.f32 0.0, %v660
  %v662 = vpop.f32.mrb[0].mxu0
  %663 = vmatprep.mubr.bf16.mxu0 0
  %664 = vmatmul.mubr.bf16.gmra.mrb[0].mxu0 %v386
  %v665 = vpop.f32.mrb[0].mxu0
  %v666 = vadd.f32 0.0, %v665
  %v667 = vpop.f32.mrb[0].mxu0
  %v668 = vpop.f32.mrb[0].mxu0
  %v669 = vadd.f32 0.0, %v668
  %v670 = vpop.f32.mrb[0].mxu0
  %671 = vmatprep.mubr.bf16.mxu0 0
  %672 = vmatmul.mubr.bf16.gmra.mrb[0].mxu0 %v389
  %v673 = vpop.f32.mrb[0].mxu0
  %v674 = vadd.f32 0.0, %v673
  %v675 = vpop.f32.mrb[0].mxu0
  %v676 = vpop.f32.mrb[0].mxu0
  %v677 = vadd.f32 0.0, %v676
  %v678 = vpop.f32.mrb[0].mxu0
  %679 = vdwg.mxu0
  %v680 = vld [vmem:[%s3] sm:$0x3]
  %v681 = vlaneseq
  %v682 = vshrl.u32 %v681, 7
  %v683 = vsub.s32 0, %v682
  %v684 = vrot.slane %v680, %v683
  %v685 = vmul.f32 %v426, %v684
  %v686 = vmul.f32 %v429, %v684
  %v687 = vmul.f32 %v434, %v684
  %v688 = vmul.f32 %v437, %v684
  %v689 = vmul.f32 %v442, %v684
  %v690 = vmul.f32 %v445, %v684
  %v691 = vmul.f32 %v450, %v684
  %v692 = vmul.f32 %v453, %v684
  %v693 = vmul.f32 %v458, %v684
  %v694 = vmul.f32 %v461, %v684
  %v695 = vmul.f32 %v466, %v684
  %v696 = vmul.f32 %v469, %v684
  %v697 = vmul.f32 %v474, %v684
  %v698 = vmul.f32 %v477, %v684
  %v699 = vmul.f32 %v482, %v684
  %v700 = vmul.f32 %v485, %v684
  %v701 = vmul.f32 %v490, %v684
  %v702 = vmul.f32 %v493, %v684
  %v703 = vmul.f32 %v498, %v684
  %v704 = vmul.f32 %v501, %v684
  %v705 = vmul.f32 %v506, %v684
  %v706 = vmul.f32 %v509, %v684
  %v707 = vmul.f32 %v514, %v684
  %v708 = vmul.f32 %v517, %v684
  %v709 = vmul.f32 %v522, %v684
  %v710 = vmul.f32 %v525, %v684
  %v711 = vmul.f32 %v530, %v684
  %v712 = vmul.f32 %v533, %v684
  %v713 = vmul.f32 %v538, %v684
  %v714 = vmul.f32 %v541, %v684
  %v715 = vmul.f32 %v546, %v684
  %v716 = vmul.f32 %v549, %v684
  %v717 = vmul.f32 %v554, %v684
  %v718 = vmul.f32 %v557, %v684
  %v719 = vmul.f32 %v562, %v684
  %v720 = vmul.f32 %v565, %v684
  %v721 = vmul.f32 %v570, %v684
  %v722 = vmul.f32 %v573, %v684
  %v723 = vmul.f32 %v578, %v684
  %v724 = vmul.f32 %v581, %v684
  %v725 = vmul.f32 %v586, %v684
  %v726 = vmul.f32 %v589, %v684
  %v727 = vmul.f32 %v594, %v684
  %v728 = vmul.f32 %v597, %v684
  %v729 = vmul.f32 %v602, %v684
  %v730 = vmul.f32 %v605, %v684
  %v731 = vmul.f32 %v610, %v684
  %v732 = vmul.f32 %v613, %v684
  %v733 = vmul.f32 %v618, %v684
  %v734 = vmul.f32 %v621, %v684
  %v735 = vmul.f32 %v626, %v684
  %v736 = vmul.f32 %v629, %v684
  %v737 = vmul.f32 %v634, %v684
  %v738 = vmul.f32 %v637, %v684
  %v739 = vmul.f32 %v642, %v684
  %v740 = vmul.f32 %v645, %v684
  %v741 = vmul.f32 %v650, %v684
  %v742 = vmul.f32 %v653, %v684
  %v743 = vmul.f32 %v658, %v684
  %v744 = vmul.f32 %v661, %v684
  %v745 = vmul.f32 %v666, %v684
  %v746 = vmul.f32 %v669, %v684
  %v747 = vmul.f32 %v674, %v684
  %v748 = vmul.f32 %v677, %v684
  %v749 = vlaneseq
  %v750 = vshrl.u32 %v749, 7
  %v751 = vsub.s32 1, %v750
  %v752 = vrot.slane %v680, %v751
  %v753 = vadd.f32 %v685, %v752
  %v754 = vadd.f32 %v686, %v752
  %v755 = vadd.f32 %v687, %v752
  %v756 = vadd.f32 %v688, %v752
  %v757 = vadd.f32 %v689, %v752
  %v758 = vadd.f32 %v690, %v752
  %v759 = vadd.f32 %v691, %v752
  %v760 = vadd.f32 %v692, %v752
  %v761 = vadd.f32 %v693, %v752
  %v762 = vadd.f32 %v694, %v752
  %v763 = vadd.f32 %v695, %v752
  %v764 = vadd.f32 %v696, %v752
  %v765 = vadd.f32 %v697, %v752
  %v766 = vadd.f32 %v698, %v752
  %v767 = vadd.f32 %v699, %v752
  %v768 = vadd.f32 %v700, %v752
  %v769 = vadd.f32 %v701, %v752
  %v770 = vadd.f32 %v702, %v752
  %v771 = vadd.f32 %v703, %v752
  %v772 = vadd.f32 %v704, %v752
  %v773 = vadd.f32 %v705, %v752
  %v774 = vadd.f32 %v706, %v752
  %v775 = vadd.f32 %v707, %v752
  %v776 = vadd.f32 %v708, %v752
  %v777 = vadd.f32 %v709, %v752
  %v778 = vadd.f32 %v710, %v752
  %v779 = vadd.f32 %v711, %v752
  %v780 = vadd.f32 %v712, %v752
  %v781 = vadd.f32 %v713, %v752
  %v782 = vadd.f32 %v714, %v752
  %v783 = vadd.f32 %v715, %v752
  %v784 = vadd.f32 %v716, %v752
  %v785 = vadd.f32 %v717, %v752
  %v786 = vadd.f32 %v718, %v752
  %v787 = vadd.f32 %v719, %v752
  %v788 = vadd.f32 %v720, %v752
  %v789 = vadd.f32 %v721, %v752
  %v790 = vadd.f32 %v722, %v752
  %v791 = vadd.f32 %v723, %v752
  %v792 = vadd.f32 %v724, %v752
  %v793 = vadd.f32 %v725, %v752
  %v794 = vadd.f32 %v726, %v752
  %v795 = vadd.f32 %v727, %v752
  %v796 = vadd.f32 %v728, %v752
  %v797 = vadd.f32 %v729, %v752
  %v798 = vadd.f32 %v730, %v752
  %v799 = vadd.f32 %v731, %v752
  %v800 = vadd.f32 %v732, %v752
  %v801 = vadd.f32 %v733, %v752
  %v802 = vadd.f32 %v734, %v752
  %v803 = vadd.f32 %v735, %v752
  %v804 = vadd.f32 %v736, %v752
  %v805 = vadd.f32 %v737, %v752
  %v806 = vadd.f32 %v738, %v752
  %v807 = vadd.f32 %v739, %v752
  %v808 = vadd.f32 %v740, %v752
  %v809 = vadd.f32 %v741, %v752
  %v810 = vadd.f32 %v742, %v752
  %v811 = vadd.f32 %v743, %v752
  %v812 = vadd.f32 %v744, %v752
  %v813 = vadd.f32 %v745, %v752
  %v814 = vadd.f32 %v746, %v752
  %v815 = vadd.f32 %v747, %v752
  %v816 = vadd.f32 %v748, %v752
  %v817 = vmax.f32 %v753, 0.0
  %v818 = vmax.f32 %v754, 0.0
  %v819 = vmax.f32 %v755, 0.0
  %v820 = vmax.f32 %v756, 0.0
  %v821 = vmax.f32 %v757, 0.0
  %v822 = vmax.f32 %v758, 0.0
  %v823 = vmax.f32 %v759, 0.0
  %v824 = vmax.f32 %v760, 0.0
  %v825 = vmax.f32 %v761, 0.0
  %v826 = vmax.f32 %v762, 0.0
  %v827 = vmax.f32 %v763, 0.0
  %v828 = vmax.f32 %v764, 0.0
  %v829 = vmax.f32 %v765, 0.0
  %v830 = vmax.f32 %v766, 0.0
  %v831 = vmax.f32 %v767, 0.0
  %v832 = vmax.f32 %v768, 0.0
  %v833 = vmax.f32 %v769, 0.0
  %v834 = vmax.f32 %v770, 0.0
  %v835 = vmax.f32 %v771, 0.0
  %v836 = vmax.f32 %v772, 0.0
  %v837 = vmax.f32 %v773, 0.0
  %v838 = vmax.f32 %v774, 0.0
  %v839 = vmax.f32 %v775, 0.0
  %v840 = vmax.f32 %v776, 0.0
  %v841 = vmax.f32 %v777, 0.0
  %v842 = vmax.f32 %v778, 0.0
  %v843 = vmax.f32 %v779, 0.0
  %v844 = vmax.f32 %v780, 0.0
  %v845 = vmax.f32 %v781, 0.0
  %v846 = vmax.f32 %v782, 0.0
  %v847 = vmax.f32 %v783, 0.0
  %v848 = vmax.f32 %v784, 0.0
  %v849 = vmax.f32 %v785, 0.0
  %v850 = vmax.f32 %v786, 0.0
  %v851 = vmax.f32 %v787, 0.0
  %v852 = vmax.f32 %v788, 0.0
  %v853 = vmax.f32 %v789, 0.0
  %v854 = vmax.f32 %v790, 0.0
  %v855 = vmax.f32 %v791, 0.0
  %v856 = vmax.f32 %v792, 0.0
  %v857 = vmax.f32 %v793, 0.0
  %v858 = vmax.f32 %v794, 0.0
  %v859 = vmax.f32 %v795, 0.0
  %v860 = vmax.f32 %v796, 0.0
  %v861 = vmax.f32 %v797, 0.0
  %v862 = vmax.f32 %v798, 0.0
  %v863 = vmax.f32 %v799, 0.0
  %v864 = vmax.f32 %v800, 0.0
  %v865 = vmax.f32 %v801, 0.0
  %v866 = vmax.f32 %v802, 0.0
  %v867 = vmax.f32 %v803, 0.0
  %v868 = vmax.f32 %v804, 0.0
  %v869 = vmax.f32 %v805, 0.0
  %v870 = vmax.f32 %v806, 0.0
  %v871 = vmax.f32 %v807, 0.0
  %v872 = vmax.f32 %v808, 0.0
  %v873 = vmax.f32 %v809, 0.0
  %v874 = vmax.f32 %v810, 0.0
  %v875 = vmax.f32 %v811, 0.0
  %v876 = vmax.f32 %v812, 0.0
  %v877 = vmax.f32 %v813, 0.0
  %v878 = vmax.f32 %v814, 0.0
  %v879 = vmax.f32 %v815, 0.0
  %v880 = vmax.f32 %v816, 0.0
  %v881 = vpack.c.bf16 %v818, %v817
  %v882 = vpack.c.bf16 %v820, %v819
  %v883 = vpack.c.bf16 %v822, %v821
  %v884 = vpack.c.bf16 %v824, %v823
  %v885 = vpack.c.bf16 %v826, %v825
  %v886 = vpack.c.bf16 %v828, %v827
  %v887 = vpack.c.bf16 %v830, %v829
  %v888 = vpack.c.bf16 %v832, %v831
  %v889 = vpack.c.bf16 %v834, %v833
  %v890 = vpack.c.bf16 %v836, %v835
  %v891 = vpack.c.bf16 %v838, %v837
  %v892 = vpack.c.bf16 %v840, %v839
  %v893 = vpack.c.bf16 %v842, %v841
  %v894 = vpack.c.bf16 %v844, %v843
  %v895 = vpack.c.bf16 %v846, %v845
  %v896 = vpack.c.bf16 %v848, %v847
  %v897 = vpack.c.bf16 %v850, %v849
  %v898 = vpack.c.bf16 %v852, %v851
  %v899 = vpack.c.bf16 %v854, %v853
  %v900 = vpack.c.bf16 %v856, %v855
  %v901 = vpack.c.bf16 %v858, %v857
  %v902 = vpack.c.bf16 %v860, %v859
  %v903 = vpack.c.bf16 %v862, %v861
  %v904 = vpack.c.bf16 %v864, %v863
  %v905 = vpack.c.bf16 %v866, %v865
  %v906 = vpack.c.bf16 %v868, %v867
  %v907 = vpack.c.bf16 %v870, %v869
  %v908 = vpack.c.bf16 %v872, %v871
  %v909 = vpack.c.bf16 %v874, %v873
  %v910 = vpack.c.bf16 %v876, %v875
  %v911 = vpack.c.bf16 %v878, %v877
  %v912 = vpack.c.bf16 %v880, %v879
  %s913 = scalar_lea.vmem %s2, 64
  %v914 = vld [vmem:[%s913] sm:$0xf]
  %v915 = vld [vmem:[%s913 + $0x4] sm:$0xf]
  %v916 = vld [vmem:[%s913 + $0x8] sm:$0xf]
  %v917 = vld [vmem:[%s913 + $0xc] sm:$0xf]
  %v918 = vld [vmem:[%s913 + $0x10] sm:$0xf]
  %v919 = vld [vmem:[%s913 + $0x14] sm:$0xf]
  %v920 = vld [vmem:[%s913 + $0x18] sm:$0xf]
  %v921 = vld [vmem:[%s913 + $0x1c] sm:$0xf]
  %v922 = vld [vmem:[%s913 + $0x20] sm:$0xf]
  %v923 = vld [vmem:[%s913 + $0x24] sm:$0xf]
  %v924 = vld [vmem:[%s913 + $0x28] sm:$0xf]
  %v925 = vld [vmem:[%s913 + $0x2c] sm:$0xf]
  %v926 = vld [vmem:[%s913 + $0x30] sm:$0xf]
  %v927 = vld [vmem:[%s913 + $0x34] sm:$0xf]
  %v928 = vld [vmem:[%s913 + $0x38] sm:$0xf]
  %v929 = vld [vmem:[%s913 + $0x3c] sm:$0xf]
  %v946 = vunpack.c.l.b16 %v914
  %v947 = vunpack.c.l.b16 %v915
  %v948 = vunpack.c.l.b16 %v916
  %v949 = vunpack.c.l.b16 %v917
  %v950 = vunpack.c.l.b16 %v918
  %v951 = vunpack.c.l.b16 %v919
  %v952 = vunpack.c.l.b16 %v920
  %v953 = vunpack.c.l.b16 %v921
  %v954 = vunpack.c.l.b16 %v922
  %v955 = vunpack.c.l.b16 %v923
  %v956 = vunpack.c.l.b16 %v924
  %v957 = vunpack.c.l.b16 %v925
  %v958 = vunpack.c.l.b16 %v926
  %v959 = vunpack.c.l.b16 %v927
  %v960 = vunpack.c.l.b16 %v928
  %v961 = vunpack.c.l.b16 %v929
  %v962 = vpack.c.b16 %v947, %v946
  %v963 = vpack.c.b16 %v949, %v948
  %v964 = vpack.c.b16 %v951, %v950
  %v965 = vpack.c.b16 %v953, %v952
  %v966 = vpack.c.b16 %v955, %v954
  %v967 = vpack.c.b16 %v957, %v956
  %v968 = vpack.c.b16 %v959, %v958
  %v969 = vpack.c.b16 %v961, %v960
  %978 = vmatprep.subr.bf16.mxu0 0
  %979 = vmatpush1.bf16.msra.mxu0 %v962
  %980 = vmatprep.subr.bf16.mxu0 0
  %981 = vmatpush1.bf16.msra.mxu0 %v963
  %982 = vmatprep.subr.bf16.mxu0 0
  %983 = vmatpush1.bf16.msra.mxu0 %v964
  %984 = vmatprep.subr.bf16.mxu0 0
  %985 = vmatpush1.bf16.msra.mxu0 %v965
  %986 = vmatprep.subr.bf16.mxu0 0
  %987 = vmatpush1.bf16.msra.mxu0 %v966
  %988 = vmatprep.subr.bf16.mxu0 0
  %989 = vmatpush1.bf16.msra.mxu0 %v967
  %990 = vmatprep.subr.bf16.mxu0 0
  %991 = vmatpush1.bf16.msra.mxu0 %v968
  %992 = vmatprep.subr.bf16.mxu0 0
  %993 = vmatpush1.bf16.msra.mxu0 %v969
  %994 = vmatprep.subr.bf16.mxu0 0
  %995 = vmatpush1.bf16.msra.mxu0 0
  %996 = vmatprep.subr.bf16.mxu0 0
  %997 = vmatpush1.bf16.msra.mxu0 0
  %998 = vmatprep.subr.bf16.mxu0 0
  %999 = vmatpush1.bf16.msra.mxu0 0
  %1000 = vmatprep.subr.bf16.mxu0 0
  %1001 = vmatpush1.bf16.msra.mxu0 0
  %1002 = vmatprep.subr.bf16.mxu0 0
  %1003 = vmatpush1.bf16.msra.mxu0 0
  %1004 = vmatprep.subr.bf16.mxu0 0
  %1005 = vmatpush1.bf16.msra.mxu0 0
  %1006 = vmatprep.subr.bf16.mxu0 0
  %1007 = vmatpush1.bf16.msra.mxu0 0
  %1008 = vmatprep.subr.bf16.mxu0 0
  %1009 = vmatpush1.bf16.msra.mxu0 0
  %1010 = vmatprep.mubr.bf16.mxu0 0
  %1011 = vmatmul.mubr.bf16.gmra.mrb[0].mxu0 %v881
  %v1012 = vpop.f32.mrb[0].mxu0
  %v1013 = vadd.f32 0.0, %v1012
  %v1014 = vpop.f32.mrb[0].mxu0
  %v1015 = vpop.f32.mrb[0].mxu0
  %v1016 = vadd.f32 0.0, %v1015
  %v1017 = vpop.f32.mrb[0].mxu0
  %1018 = vmatprep.mubr.bf16.mxu0 0
  %1019 = vmatmul.mubr.bf16.gmra.mrb[0].mxu0 %v882
  %v1020 = vpop.f32.mrb[0].mxu0
  %v1021 = vadd.f32 0.0, %v1020
  %v1022 = vpop.f32.mrb[0].mxu0
  %v1023 = vpop.f32.mrb[0].mxu0
  %v1024 = vadd.f32 0.0, %v1023
  %v1025 = vpop.f32.mrb[0].mxu0
  %1026 = vmatprep.mubr.bf16.mxu0 0
  %1027 = vmatmul.mubr.bf16.gmra.mrb[0].mxu0 %v883
  %v1028 = vpop.f32.mrb[0].mxu0
  %v1029 = vadd.f32 0.0, %v1028
  %v1030 = vpop.f32.mrb[0].mxu0
  %v1031 = vpop.f32.mrb[0].mxu0
  %v1032 = vadd.f32 0.0, %v1031
  %v1033 = vpop.f32.mrb[0].mxu0
  %1034 = vmatprep.mubr.bf16.mxu0 0
  %1035 = vmatmul.mubr.bf16.gmra.mrb[0].mxu0 %v884
  %v1036 = vpop.f32.mrb[0].mxu0
  %v1037 = vadd.f32 0.0, %v1036
  %v1038 = vpop.f32.mrb[0].mxu0
  %v1039 = vpop.f32.mrb[0].mxu0
  %v1040 = vadd.f32 0.0, %v1039
  %v1041 = vpop.f32.mrb[0].mxu0
  %1042 = vmatprep.mubr.bf16.mxu0 0
  %1043 = vmatmul.mubr.bf16.gmra.mrb[0].mxu0 %v885
  %v1044 = vpop.f32.mrb[0].mxu0
  %v1045 = vadd.f32 0.0, %v1044
  %v1046 = vpop.f32.mrb[0].mxu0
  %v1047 = vpop.f32.mrb[0].mxu0
  %v1048 = vadd.f32 0.0, %v1047
  %v1049 = vpop.f32.mrb[0].mxu0
  %1050 = vmatprep.mubr.bf16.mxu0 0
  %1051 = vmatmul.mubr.bf16.gmra.mrb[0].mxu0 %v886
  %v1052 = vpop.f32.mrb[0].mxu0
  %v1053 = vadd.f32 0.0, %v1052
  %v1054 = vpop.f32.mrb[0].mxu0
  %v1055 = vpop.f32.mrb[0].mxu0
  %v1056 = vadd.f32 0.0, %v1055
  %v1057 = vpop.f32.mrb[0].mxu0
  %1058 = vmatprep.mubr.bf16.mxu0 0
  %1059 = vmatmul.mubr.bf16.gmra.mrb[0].mxu0 %v887
  %v1060 = vpop.f32.mrb[0].mxu0
  %v1061 = vadd.f32 0.0, %v1060
  %v1062 = vpop.f32.mrb[0].mxu0
  %v1063 = vpop.f32.mrb[0].mxu0
  %v1064 = vadd.f32 0.0, %v1063
  %v1065 = vpop.f32.mrb[0].mxu0
  %1066 = vmatprep.mubr.bf16.mxu0 0
  %1067 = vmatmul.mubr.bf16.gmra.mrb[0].mxu0 %v888
  %v1068 = vpop.f32.mrb[0].mxu0
  %v1069 = vadd.f32 0.0, %v1068
  %v1070 = vpop.f32.mrb[0].mxu0
  %v1071 = vpop.f32.mrb[0].mxu0
  %v1072 = vadd.f32 0.0, %v1071
  %v1073 = vpop.f32.mrb[0].mxu0
  %1074 = vmatprep.mubr.bf16.mxu0 0
  %1075 = vmatmul.mubr.bf16.gmra.mrb[0].mxu0 %v889
  %v1076 = vpop.f32.mrb[0].mxu0
  %v1077 = vadd.f32 0.0, %v1076
  %v1078 = vpop.f32.mrb[0].mxu0
  %v1079 = vpop.f32.mrb[0].mxu0
  %v1080 = vadd.f32 0.0, %v1079
  %v1081 = vpop.f32.mrb[0].mxu0
  %1082 = vmatprep.mubr.bf16.mxu0 0
  %1083 = vmatmul.mubr.bf16.gmra.mrb[0].mxu0 %v890
  %v1084 = vpop.f32.mrb[0].mxu0
  %v1085 = vadd.f32 0.0, %v1084
  %v1086 = vpop.f32.mrb[0].mxu0
  %v1087 = vpop.f32.mrb[0].mxu0
  %v1088 = vadd.f32 0.0, %v1087
  %v1089 = vpop.f32.mrb[0].mxu0
  %1090 = vmatprep.mubr.bf16.mxu0 0
  %1091 = vmatmul.mubr.bf16.gmra.mrb[0].mxu0 %v891
  %v1092 = vpop.f32.mrb[0].mxu0
  %v1093 = vadd.f32 0.0, %v1092
  %v1094 = vpop.f32.mrb[0].mxu0
  %v1095 = vpop.f32.mrb[0].mxu0
  %v1096 = vadd.f32 0.0, %v1095
  %v1097 = vpop.f32.mrb[0].mxu0
  %1098 = vmatprep.mubr.bf16.mxu0 0
  %1099 = vmatmul.mubr.bf16.gmra.mrb[0].mxu0 %v892
  %v1100 = vpop.f32.mrb[0].mxu0
  %v1101 = vadd.f32 0.0, %v1100
  %v1102 = vpop.f32.mrb[0].mxu0
  %v1103 = vpop.f32.mrb[0].mxu0
  %v1104 = vadd.f32 0.0, %v1103
  %v1105 = vpop.f32.mrb[0].mxu0
  %1106 = vmatprep.mubr.bf16.mxu0 0
  %1107 = vmatmul.mubr.bf16.gmra.mrb[0].mxu0 %v893
  %v1108 = vpop.f32.mrb[0].mxu0
  %v1109 = vadd.f32 0.0, %v1108
  %v1110 = vpop.f32.mrb[0].mxu0
  %v1111 = vpop.f32.mrb[0].mxu0
  %v1112 = vadd.f32 0.0, %v1111
  %v1113 = vpop.f32.mrb[0].mxu0
  %1114 = vmatprep.mubr.bf16.mxu0 0
  %1115 = vmatmul.mubr.bf16.gmra.mrb[0].mxu0 %v894
  %v1116 = vpop.f32.mrb[0].mxu0
  %v1117 = vadd.f32 0.0, %v1116
  %v1118 = vpop.f32.mrb[0].mxu0
  %v1119 = vpop.f32.mrb[0].mxu0
  %v1120 = vadd.f32 0.0, %v1119
  %v1121 = vpop.f32.mrb[0].mxu0
  %1122 = vmatprep.mubr.bf16.mxu0 0
  %1123 = vmatmul.mubr.bf16.gmra.mrb[0].mxu0 %v895
  %v1124 = vpop.f32.mrb[0].mxu0
  %v1125 = vadd.f32 0.0, %v1124
  %v1126 = vpop.f32.mrb[0].mxu0
  %v1127 = vpop.f32.mrb[0].mxu0
  %v1128 = vadd.f32 0.0, %v1127
  %v1129 = vpop.f32.mrb[0].mxu0
  %1130 = vmatprep.mubr.bf16.mxu0 0
  %1131 = vmatmul.mubr.bf16.gmra.mrb[0].mxu0 %v896
  %v1132 = vpop.f32.mrb[0].mxu0
  %v1133 = vadd.f32 0.0, %v1132
  %v1134 = vpop.f32.mrb[0].mxu0
  %v1135 = vpop.f32.mrb[0].mxu0
  %v1136 = vadd.f32 0.0, %v1135
  %v1137 = vpop.f32.mrb[0].mxu0
  %1138 = vmatprep.mubr.bf16.mxu0 0
  %1139 = vmatmul.mubr.bf16.gmra.mrb[0].mxu0 %v897
  %v1140 = vpop.f32.mrb[0].mxu0
  %v1141 = vadd.f32 0.0, %v1140
  %v1142 = vpop.f32.mrb[0].mxu0
  %v1143 = vpop.f32.mrb[0].mxu0
  %v1144 = vadd.f32 0.0, %v1143
  %v1145 = vpop.f32.mrb[0].mxu0
  %1146 = vmatprep.mubr.bf16.mxu0 0
  %1147 = vmatmul.mubr.bf16.gmra.mrb[0].mxu0 %v898
  %v1148 = vpop.f32.mrb[0].mxu0
  %v1149 = vadd.f32 0.0, %v1148
  %v1150 = vpop.f32.mrb[0].mxu0
  %v1151 = vpop.f32.mrb[0].mxu0
  %v1152 = vadd.f32 0.0, %v1151
  %v1153 = vpop.f32.mrb[0].mxu0
  %1154 = vmatprep.mubr.bf16.mxu0 0
  %1155 = vmatmul.mubr.bf16.gmra.mrb[0].mxu0 %v899
  %v1156 = vpop.f32.mrb[0].mxu0
  %v1157 = vadd.f32 0.0, %v1156
  %v1158 = vpop.f32.mrb[0].mxu0
  %v1159 = vpop.f32.mrb[0].mxu0
  %v1160 = vadd.f32 0.0, %v1159
  %v1161 = vpop.f32.mrb[0].mxu0
  %1162 = vmatprep.mubr.bf16.mxu0 0
  %1163 = vmatmul.mubr.bf16.gmra.mrb[0].mxu0 %v900
  %v1164 = vpop.f32.mrb[0].mxu0
  %v1165 = vadd.f32 0.0, %v1164
  %v1166 = vpop.f32.mrb[0].mxu0
  %v1167 = vpop.f32.mrb[0].mxu0
  %v1168 = vadd.f32 0.0, %v1167
  %v1169 = vpop.f32.mrb[0].mxu0
  %1170 = vmatprep.mubr.bf16.mxu0 0
  %1171 = vmatmul.mubr.bf16.gmra.mrb[0].mxu0 %v901
  %v1172 = vpop.f32.mrb[0].mxu0
  %v1173 = vadd.f32 0.0, %v1172
  %v1174 = vpop.f32.mrb[0].mxu0
  %v1175 = vpop.f32.mrb[0].mxu0
  %v1176 = vadd.f32 0.0, %v1175
  %v1177 = vpop.f32.mrb[0].mxu0
  %1178 = vmatprep.mubr.bf16.mxu0 0
  %1179 = vmatmul.mubr.bf16.gmra.mrb[0].mxu0 %v902
  %v1180 = vpop.f32.mrb[0].mxu0
  %v1181 = vadd.f32 0.0, %v1180
  %v1182 = vpop.f32.mrb[0].mxu0
  %v1183 = vpop.f32.mrb[0].mxu0
  %v1184 = vadd.f32 0.0, %v1183
  %v1185 = vpop.f32.mrb[0].mxu0
  %1186 = vmatprep.mubr.bf16.mxu0 0
  %1187 = vmatmul.mubr.bf16.gmra.mrb[0].mxu0 %v903
  %v1188 = vpop.f32.mrb[0].mxu0
  %v1189 = vadd.f32 0.0, %v1188
  %v1190 = vpop.f32.mrb[0].mxu0
  %v1191 = vpop.f32.mrb[0].mxu0
  %v1192 = vadd.f32 0.0, %v1191
  %v1193 = vpop.f32.mrb[0].mxu0
  %1194 = vmatprep.mubr.bf16.mxu0 0
  %1195 = vmatmul.mubr.bf16.gmra.mrb[0].mxu0 %v904
  %v1196 = vpop.f32.mrb[0].mxu0
  %v1197 = vadd.f32 0.0, %v1196
  %v1198 = vpop.f32.mrb[0].mxu0
  %v1199 = vpop.f32.mrb[0].mxu0
  %v1200 = vadd.f32 0.0, %v1199
  %v1201 = vpop.f32.mrb[0].mxu0
  %1202 = vmatprep.mubr.bf16.mxu0 0
  %1203 = vmatmul.mubr.bf16.gmra.mrb[0].mxu0 %v905
  %v1204 = vpop.f32.mrb[0].mxu0
  %v1205 = vadd.f32 0.0, %v1204
  %v1206 = vpop.f32.mrb[0].mxu0
  %v1207 = vpop.f32.mrb[0].mxu0
  %v1208 = vadd.f32 0.0, %v1207
  %v1209 = vpop.f32.mrb[0].mxu0
  %1210 = vmatprep.mubr.bf16.mxu0 0
  %1211 = vmatmul.mubr.bf16.gmra.mrb[0].mxu0 %v906
  %v1212 = vpop.f32.mrb[0].mxu0
  %v1213 = vadd.f32 0.0, %v1212
  %v1214 = vpop.f32.mrb[0].mxu0
  %v1215 = vpop.f32.mrb[0].mxu0
  %v1216 = vadd.f32 0.0, %v1215
  %v1217 = vpop.f32.mrb[0].mxu0
  %1218 = vmatprep.mubr.bf16.mxu0 0
  %1219 = vmatmul.mubr.bf16.gmra.mrb[0].mxu0 %v907
  %v1220 = vpop.f32.mrb[0].mxu0
  %v1221 = vadd.f32 0.0, %v1220
  %v1222 = vpop.f32.mrb[0].mxu0
  %v1223 = vpop.f32.mrb[0].mxu0
  %v1224 = vadd.f32 0.0, %v1223
  %v1225 = vpop.f32.mrb[0].mxu0
  %1226 = vmatprep.mubr.bf16.mxu0 0
  %1227 = vmatmul.mubr.bf16.gmra.mrb[0].mxu0 %v908
  %v1228 = vpop.f32.mrb[0].mxu0
  %v1229 = vadd.f32 0.0, %v1228
  %v1230 = vpop.f32.mrb[0].mxu0
  %v1231 = vpop.f32.mrb[0].mxu0
  %v1232 = vadd.f32 0.0, %v1231
  %v1233 = vpop.f32.mrb[0].mxu0
  %1234 = vmatprep.mubr.bf16.mxu0 0
  %1235 = vmatmul.mubr.bf16.gmra.mrb[0].mxu0 %v909
  %v1236 = vpop.f32.mrb[0].mxu0
  %v1237 = vadd.f32 0.0, %v1236
  %v1238 = vpop.f32.mrb[0].mxu0
  %v1239 = vpop.f32.mrb[0].mxu0
  %v1240 = vadd.f32 0.0, %v1239
  %v1241 = vpop.f32.mrb[0].mxu0
  %1242 = vmatprep.mubr.bf16.mxu0 0
  %1243 = vmatmul.mubr.bf16.gmra.mrb[0].mxu0 %v910
  %v1244 = vpop.f32.mrb[0].mxu0
  %v1245 = vadd.f32 0.0, %v1244
  %v1246 = vpop.f32.mrb[0].mxu0
  %v1247 = vpop.f32.mrb[0].mxu0
  %v1248 = vadd.f32 0.0, %v1247
  %v1249 = vpop.f32.mrb[0].mxu0
  %1250 = vmatprep.mubr.bf16.mxu0 0
  %1251 = vmatmul.mubr.bf16.gmra.mrb[0].mxu0 %v911
  %v1252 = vpop.f32.mrb[0].mxu0
  %v1253 = vadd.f32 0.0, %v1252
  %v1254 = vpop.f32.mrb[0].mxu0
  %v1255 = vpop.f32.mrb[0].mxu0
  %v1256 = vadd.f32 0.0, %v1255
  %v1257 = vpop.f32.mrb[0].mxu0
  %1258 = vmatprep.mubr.bf16.mxu0 0
  %1259 = vmatmul.mubr.bf16.gmra.mrb[0].mxu0 %v912
  %v1260 = vpop.f32.mrb[0].mxu0
  %v1261 = vadd.f32 0.0, %v1260
  %v1262 = vpop.f32.mrb[0].mxu0
  %v1263 = vpop.f32.mrb[0].mxu0
  %v1264 = vadd.f32 0.0, %v1263
  %v1265 = vpop.f32.mrb[0].mxu0
  %1266 = vdwg.mxu0
  %v1267 = vadd.f32 %v1013, %v1029
  %v1268 = vadd.f32 %v1267, %v1045
  %v1269 = vadd.f32 %v1268, %v1061
  %v1270 = vadd.f32 %v1269, %v1077
  %v1271 = vadd.f32 %v1270, %v1093
  %v1272 = vadd.f32 %v1271, %v1109
  %v1273 = vadd.f32 %v1272, %v1125
  %v1274 = vadd.f32 %v1273, %v1141
  %v1275 = vadd.f32 %v1274, %v1157
  %v1276 = vadd.f32 %v1275, %v1173
  %v1277 = vadd.f32 %v1276, %v1189
  %v1278 = vadd.f32 %v1277, %v1205
  %v1279 = vadd.f32 %v1278, %v1221
  %v1280 = vadd.f32 %v1279, %v1237
  %v1281 = vadd.f32 %v1280, %v1253
  %v1282 = vadd.f32 %v1016, %v1032
  %v1283 = vadd.f32 %v1282, %v1048
  %v1284 = vadd.f32 %v1283, %v1064
  %v1285 = vadd.f32 %v1284, %v1080
  %v1286 = vadd.f32 %v1285, %v1096
  %v1287 = vadd.f32 %v1286, %v1112
  %v1288 = vadd.f32 %v1287, %v1128
  %v1289 = vadd.f32 %v1288, %v1144
  %v1290 = vadd.f32 %v1289, %v1160
  %v1291 = vadd.f32 %v1290, %v1176
  %v1292 = vadd.f32 %v1291, %v1192
  %v1293 = vadd.f32 %v1292, %v1208
  %v1294 = vadd.f32 %v1293, %v1224
  %v1295 = vadd.f32 %v1294, %v1240
  %v1296 = vadd.f32 %v1295, %v1256
  %v1297 = vadd.f32 %v1021, %v1037
  %v1298 = vadd.f32 %v1297, %v1053
  %v1299 = vadd.f32 %v1298, %v1069
  %v1300 = vadd.f32 %v1299, %v1085
  %v1301 = vadd.f32 %v1300, %v1101
  %v1302 = vadd.f32 %v1301, %v1117
  %v1303 = vadd.f32 %v1302, %v1133
  %v1304 = vadd.f32 %v1303, %v1149
  %v1305 = vadd.f32 %v1304, %v1165
  %v1306 = vadd.f32 %v1305, %v1181
  %v1307 = vadd.f32 %v1306, %v1197
  %v1308 = vadd.f32 %v1307, %v1213
  %v1309 = vadd.f32 %v1308, %v1229
  %v1310 = vadd.f32 %v1309, %v1245
  %v1311 = vadd.f32 %v1310, %v1261
  %v1312 = vadd.f32 %v1024, %v1040
  %v1313 = vadd.f32 %v1312, %v1056
  %v1314 = vadd.f32 %v1313, %v1072
  %v1315 = vadd.f32 %v1314, %v1088
  %v1316 = vadd.f32 %v1315, %v1104
  %v1317 = vadd.f32 %v1316, %v1120
  %v1318 = vadd.f32 %v1317, %v1136
  %v1319 = vadd.f32 %v1318, %v1152
  %v1320 = vadd.f32 %v1319, %v1168
  %v1321 = vadd.f32 %v1320, %v1184
  %v1322 = vadd.f32 %v1321, %v1200
  %v1323 = vadd.f32 %v1322, %v1216
  %v1324 = vadd.f32 %v1323, %v1232
  %v1325 = vadd.f32 %v1324, %v1248
  %v1326 = vadd.f32 %v1325, %v1264
  %v1327 = vmul.f32 %v1013, %v1013
  %v1328 = vmul.f32 %v1016, %v1016
  %v1329 = vmul.f32 %v1021, %v1021
  %v1330 = vmul.f32 %v1024, %v1024
  %v1331 = vmul.f32 %v1029, %v1029
  %v1332 = vmul.f32 %v1032, %v1032
  %v1333 = vmul.f32 %v1037, %v1037
  %v1334 = vmul.f32 %v1040, %v1040
  %v1335 = vmul.f32 %v1045, %v1045
  %v1336 = vmul.f32 %v1048, %v1048
  %v1337 = vmul.f32 %v1053, %v1053
  %v1338 = vmul.f32 %v1056, %v1056
  %v1339 = vmul.f32 %v1061, %v1061
  %v1340 = vmul.f32 %v1064, %v1064
  %v1341 = vmul.f32 %v1069, %v1069
  %v1342 = vmul.f32 %v1072, %v1072
  %v1343 = vmul.f32 %v1077, %v1077
  %v1344 = vmul.f32 %v1080, %v1080
  %v1345 = vmul.f32 %v1085, %v1085
  %v1346 = vmul.f32 %v1088, %v1088
  %v1347 = vmul.f32 %v1093, %v1093
  %v1348 = vmul.f32 %v1096, %v1096
  %v1349 = vmul.f32 %v1101, %v1101
  %v1350 = vmul.f32 %v1104, %v1104
  %v1351 = vmul.f32 %v1109, %v1109
  %v1352 = vmul.f32 %v1112, %v1112
  %v1353 = vmul.f32 %v1117, %v1117
  %v1354 = vmul.f32 %v1120, %v1120
  %v1355 = vmul.f32 %v1125, %v1125
  %v1356 = vmul.f32 %v1128, %v1128
  %v1357 = vmul.f32 %v1133, %v1133
  %v1358 = vmul.f32 %v1136, %v1136
  %v1359 = vmul.f32 %v1141, %v1141
  %v1360 = vmul.f32 %v1144, %v1144
  %v1361 = vmul.f32 %v1149, %v1149
  %v1362 = vmul.f32 %v1152, %v1152
  %v1363 = vmul.f32 %v1157, %v1157
  %v1364 = vmul.f32 %v1160, %v1160
  %v1365 = vmul.f32 %v1165, %v1165
  %v1366 = vmul.f32 %v1168, %v1168
  %v1367 = vmul.f32 %v1173, %v1173
  %v1368 = vmul.f32 %v1176, %v1176
  %v1369 = vmul.f32 %v1181, %v1181
  %v1370 = vmul.f32 %v1184, %v1184
  %v1371 = vmul.f32 %v1189, %v1189
  %v1372 = vmul.f32 %v1192, %v1192
  %v1373 = vmul.f32 %v1197, %v1197
  %v1374 = vmul.f32 %v1200, %v1200
  %v1375 = vmul.f32 %v1205, %v1205
  %v1376 = vmul.f32 %v1208, %v1208
  %v1377 = vmul.f32 %v1213, %v1213
  %v1378 = vmul.f32 %v1216, %v1216
  %v1379 = vmul.f32 %v1221, %v1221
  %v1380 = vmul.f32 %v1224, %v1224
  %v1381 = vmul.f32 %v1229, %v1229
  %v1382 = vmul.f32 %v1232, %v1232
  %v1383 = vmul.f32 %v1237, %v1237
  %v1384 = vmul.f32 %v1240, %v1240
  %v1385 = vmul.f32 %v1245, %v1245
  %v1386 = vmul.f32 %v1248, %v1248
  %v1387 = vmul.f32 %v1253, %v1253
  %v1388 = vmul.f32 %v1256, %v1256
  %v1389 = vmul.f32 %v1261, %v1261
  %v1390 = vmul.f32 %v1264, %v1264
  %v1391 = vadd.f32 %v1327, %v1331
  %v1392 = vadd.f32 %v1391, %v1335
  %v1393 = vadd.f32 %v1392, %v1339
  %v1394 = vadd.f32 %v1393, %v1343
  %v1395 = vadd.f32 %v1394, %v1347
  %v1396 = vadd.f32 %v1395, %v1351
  %v1397 = vadd.f32 %v1396, %v1355
  %v1398 = vadd.f32 %v1397, %v1359
  %v1399 = vadd.f32 %v1398, %v1363
  %v1400 = vadd.f32 %v1399, %v1367
  %v1401 = vadd.f32 %v1400, %v1371
  %v1402 = vadd.f32 %v1401, %v1375
  %v1403 = vadd.f32 %v1402, %v1379
  %v1404 = vadd.f32 %v1403, %v1383
  %v1405 = vadd.f32 %v1404, %v1387
  %v1406 = vadd.f32 %v1328, %v1332
  %v1407 = vadd.f32 %v1406, %v1336
  %v1408 = vadd.f32 %v1407, %v1340
  %v1409 = vadd.f32 %v1408, %v1344
  %v1410 = vadd.f32 %v1409, %v1348
  %v1411 = vadd.f32 %v1410, %v1352
  %v1412 = vadd.f32 %v1411, %v1356
  %v1413 = vadd.f32 %v1412, %v1360
  %v1414 = vadd.f32 %v1413, %v1364
  %v1415 = vadd.f32 %v1414, %v1368
  %v1416 = vadd.f32 %v1415, %v1372
  %v1417 = vadd.f32 %v1416, %v1376
  %v1418 = vadd.f32 %v1417, %v1380
  %v1419 = vadd.f32 %v1418, %v1384
  %v1420 = vadd.f32 %v1419, %v1388
  %v1421 = vadd.f32 %v1329, %v1333
  %v1422 = vadd.f32 %v1421, %v1337
  %v1423 = vadd.f32 %v1422, %v1341
  %v1424 = vadd.f32 %v1423, %v1345
  %v1425 = vadd.f32 %v1424, %v1349
  %v1426 = vadd.f32 %v1425, %v1353
  %v1427 = vadd.f32 %v1426, %v1357
  %v1428 = vadd.f32 %v1427, %v1361
  %v1429 = vadd.f32 %v1428, %v1365
  %v1430 = vadd.f32 %v1429, %v1369
  %v1431 = vadd.f32 %v1430, %v1373
  %v1432 = vadd.f32 %v1431, %v1377
  %v1433 = vadd.f32 %v1432, %v1381
  %v1434 = vadd.f32 %v1433, %v1385
  %v1435 = vadd.f32 %v1434, %v1389
  %v1436 = vadd.f32 %v1330, %v1334
  %v1437 = vadd.f32 %v1436, %v1338
  %v1438 = vadd.f32 %v1437, %v1342
  %v1439 = vadd.f32 %v1438, %v1346
  %v1440 = vadd.f32 %v1439, %v1350
  %v1441 = vadd.f32 %v1440, %v1354
  %v1442 = vadd.f32 %v1441, %v1358
  %v1443 = vadd.f32 %v1442, %v1362
  %v1444 = vadd.f32 %v1443, %v1366
  %v1445 = vadd.f32 %v1444, %v1370
  %v1446 = vadd.f32 %v1445, %v1374
  %v1447 = vadd.f32 %v1446, %v1378
  %v1448 = vadd.f32 %v1447, %v1382
  %v1449 = vadd.f32 %v1448, %v1386
  %v1450 = vadd.f32 %v1449, %v1390
  %v1451 = vld [vmem:[%s4] sm:$0xff]
  %v1452 = vadd.f32 %v1281, %v1296
  %v1453 = vadd.f32 %v1452, %v1311
  %v1454 = vadd.f32 %v1453, %v1326
  %v1455 = vadd.f32 %v1451, %v1454
  %1456 = vst [vmem:[%s4] sm:$0xff] %v1455
  %s1457 = scalar_lea.vmem %s4, 8
  %v1458 = vld [vmem:[%s1457] sm:$0xff]
  %v1459 = vadd.f32 %v1405, %v1420
  %v1460 = vadd.f32 %v1459, %v1435
  %v1461 = vadd.f32 %v1460, %v1450
  %v1462 = vadd.f32 %v1458, %v1461
  %1463 = vst [vmem:[%s1457] sm:$0xff] %v1462
  %v1464 = vmax.f32 %v1013, %v1029
  %v1465 = vmax.f32 %v1464, %v1045
  %v1466 = vmax.f32 %v1465, %v1061
  %v1467 = vmax.f32 %v1466, %v1077
  %v1468 = vmax.f32 %v1467, %v1093
  %v1469 = vmax.f32 %v1468, %v1109
  %v1470 = vmax.f32 %v1469, %v1125
  %v1471 = vmax.f32 %v1470, %v1141
  %v1472 = vmax.f32 %v1471, %v1157
  %v1473 = vmax.f32 %v1472, %v1173
  %v1474 = vmax.f32 %v1473, %v1189
  %v1475 = vmax.f32 %v1474, %v1205
  %v1476 = vmax.f32 %v1475, %v1221
  %v1477 = vmax.f32 %v1476, %v1237
  %v1478 = vmax.f32 %v1477, %v1253
  %v1479 = vmax.f32 %v1016, %v1032
  %v1480 = vmax.f32 %v1479, %v1048
  %v1481 = vmax.f32 %v1480, %v1064
  %v1482 = vmax.f32 %v1481, %v1080
  %v1483 = vmax.f32 %v1482, %v1096
  %v1484 = vmax.f32 %v1483, %v1112
  %v1485 = vmax.f32 %v1484, %v1128
  %v1486 = vmax.f32 %v1485, %v1144
  %v1487 = vmax.f32 %v1486, %v1160
  %v1488 = vmax.f32 %v1487, %v1176
  %v1489 = vmax.f32 %v1488, %v1192
  %v1490 = vmax.f32 %v1489, %v1208
  %v1491 = vmax.f32 %v1490, %v1224
  %v1492 = vmax.f32 %v1491, %v1240
  %v1493 = vmax.f32 %v1492, %v1256
  %v1494 = vmax.f32 %v1021, %v1037
  %v1495 = vmax.f32 %v1494, %v1053
  %v1496 = vmax.f32 %v1495, %v1069
  %v1497 = vmax.f32 %v1496, %v1085
  %v1498 = vmax.f32 %v1497, %v1101
  %v1499 = vmax.f32 %v1498, %v1117
  %v1500 = vmax.f32 %v1499, %v1133
  %v1501 = vmax.f32 %v1500, %v1149
  %v1502 = vmax.f32 %v1501, %v1165
  %v1503 = vmax.f32 %v1502, %v1181
  %v1504 = vmax.f32 %v1503, %v1197
  %v1505 = vmax.f32 %v1504, %v1213
  %v1506 = vmax.f32 %v1505, %v1229
  %v1507 = vmax.f32 %v1506, %v1245
  %v1508 = vmax.f32 %v1507, %v1261
  %v1509 = vmax.f32 %v1024, %v1040
  %v1510 = vmax.f32 %v1509, %v1056
  %v1511 = vmax.f32 %v1510, %v1072
  %v1512 = vmax.f32 %v1511, %v1088
  %v1513 = vmax.f32 %v1512, %v1104
  %v1514 = vmax.f32 %v1513, %v1120
  %v1515 = vmax.f32 %v1514, %v1136
  %v1516 = vmax.f32 %v1515, %v1152
  %v1517 = vmax.f32 %v1516, %v1168
  %v1518 = vmax.f32 %v1517, %v1184
  %v1519 = vmax.f32 %v1518, %v1200
  %v1520 = vmax.f32 %v1519, %v1216
  %v1521 = vmax.f32 %v1520, %v1232
  %v1522 = vmax.f32 %v1521, %v1248
  %v1523 = vmax.f32 %v1522, %v1264
  %1524 = vst [vmem:[%s52] sm:$0xff] %v1478
  %1525 = vst [vmem:[%s52 + $0x8] sm:$0xff] %v1493
  %1526 = vst [vmem:[%s52 + $0x10] sm:$0xff] %v1508
  %1527 = vst [vmem:[%s52 + $0x18] sm:$0xff] %v1523
  %v1528 = vmin.f32 %v1013, %v1029
  %v1529 = vmin.f32 %v1528, %v1045
  %v1530 = vmin.f32 %v1529, %v1061
  %v1531 = vmin.f32 %v1530, %v1077
  %v1532 = vmin.f32 %v1531, %v1093
  %v1533 = vmin.f32 %v1532, %v1109
  %v1534 = vmin.f32 %v1533, %v1125
  %v1535 = vmin.f32 %v1534, %v1141
  %v1536 = vmin.f32 %v1535, %v1157
  %v1537 = vmin.f32 %v1536, %v1173
  %v1538 = vmin.f32 %v1537, %v1189
  %v1539 = vmin.f32 %v1538, %v1205
  %v1540 = vmin.f32 %v1539, %v1221
  %v1541 = vmin.f32 %v1540, %v1237
  %v1542 = vmin.f32 %v1541, %v1253
  %v1543 = vmin.f32 %v1016, %v1032
  %v1544 = vmin.f32 %v1543, %v1048
  %v1545 = vmin.f32 %v1544, %v1064
  %v1546 = vmin.f32 %v1545, %v1080
  %v1547 = vmin.f32 %v1546, %v1096
  %v1548 = vmin.f32 %v1547, %v1112
  %v1549 = vmin.f32 %v1548, %v1128
  %v1550 = vmin.f32 %v1549, %v1144
  %v1551 = vmin.f32 %v1550, %v1160
  %v1552 = vmin.f32 %v1551, %v1176
  %v1553 = vmin.f32 %v1552, %v1192
  %v1554 = vmin.f32 %v1553, %v1208
  %v1555 = vmin.f32 %v1554, %v1224
  %v1556 = vmin.f32 %v1555, %v1240
  %v1557 = vmin.f32 %v1556, %v1256
  %v1558 = vmin.f32 %v1021, %v1037
  %v1559 = vmin.f32 %v1558, %v1053
  %v1560 = vmin.f32 %v1559, %v1069
  %v1561 = vmin.f32 %v1560, %v1085
  %v1562 = vmin.f32 %v1561, %v1101
  %v1563 = vmin.f32 %v1562, %v1117
  %v1564 = vmin.f32 %v1563, %v1133
  %v1565 = vmin.f32 %v1564, %v1149
  %v1566 = vmin.f32 %v1565, %v1165
  %v1567 = vmin.f32 %v1566, %v1181
  %v1568 = vmin.f32 %v1567, %v1197
  %v1569 = vmin.f32 %v1568, %v1213
  %v1570 = vmin.f32 %v1569, %v1229
  %v1571 = vmin.f32 %v1570, %v1245
  %v1572 = vmin.f32 %v1571, %v1261
  %v1573 = vmin.f32 %v1024, %v1040
  %v1574 = vmin.f32 %v1573, %v1056
  %v1575 = vmin.f32 %v1574, %v1072
  %v1576 = vmin.f32 %v1575, %v1088
  %v1577 = vmin.f32 %v1576, %v1104
  %v1578 = vmin.f32 %v1577, %v1120
  %v1579 = vmin.f32 %v1578, %v1136
  %v1580 = vmin.f32 %v1579, %v1152
  %v1581 = vmin.f32 %v1580, %v1168
  %v1582 = vmin.f32 %v1581, %v1184
  %v1583 = vmin.f32 %v1582, %v1200
  %v1584 = vmin.f32 %v1583, %v1216
  %v1585 = vmin.f32 %v1584, %v1232
  %v1586 = vmin.f32 %v1585, %v1248
  %v1587 = vmin.f32 %v1586, %v1264
  %s1588 = scalar_lea.vmem %s52, 32
  %1589 = vst [vmem:[%s1588] sm:$0xff] %v1542
  %1590 = vst [vmem:[%s1588 + $0x8] sm:$0xff] %v1557
  %1591 = vst [vmem:[%s1588 + $0x10] sm:$0xff] %v1572
  %1592 = vst [vmem:[%s1588 + $0x18] sm:$0xff] %v1587
  %s1593 = sadd.s32 0, 0
  %s1594 = smul.u32 4, %s1593
  %p1595 = scmp.lt.s32.totalorder %s1594, 3
  %s1596 = scalar_select %p1595, %s1594, 3
  %s1597 = smul.addr %s1596, 8
  %s1598 = scalar_lea.vmem %s5, %s1597
  // Predicated region
  $region22: #{pointnet_sa_msg_forward.7} parent=0 // pred_check
    _
  $region23: #{pointnet_sa_msg_forward.7} parent=0 // pred_check_branch
    %1600 = sbr.rel (0) target = $region25
  $region24: #{pointnet_sa_msg_forward.7} parent=0 // pred_region
    _
  $region25: #{pointnet_sa_msg_forward.7} parent=0 // pred_fallthru
    _
  // Predicated region
  $region26: #{pointnet_sa_msg_forward.7} parent=0 // pred_check
    _
  $region27: #{pointnet_sa_msg_forward.7} parent=0 // pred_check_branch
    %1602 = sbr.rel (0) target = $region29
  $region28: #{pointnet_sa_msg_forward.7} parent=0 // pred_region
    %s1603 = sadd.s32 0, 0
    %s1604 = smul.u32 4, %s1603
  $region29: #{pointnet_sa_msg_forward.7} parent=0 // pred_fallthru
    _
  // Predicated region
  $region30: #{pointnet_sa_msg_forward.7} parent=0 // pred_check
    _
  $region31: #{pointnet_sa_msg_forward.7} parent=0 // pred_check_branch
    %1606 = sbr.rel (0) target = $region33
  $region32: #{pointnet_sa_msg_forward.7} parent=0 // pred_region
    _
  $region33: #{pointnet_sa_msg_forward.7} parent=0 // pred_fallthru
    _
  // Predicated region
  $region34: #{pointnet_sa_msg_forward.7} parent=0 // pred_check
    _
  $region35: #{pointnet_sa_msg_forward.7} parent=0 // pred_check_branch
    %1608 = sbr.rel (0) target = $region37
  $region36: #{pointnet_sa_msg_forward.7} parent=0 // pred_region
    %s1609 = sadd.s32 0, 0
    %s1610 = smul.u32 4, %s1609
    %p1611 = scmp.lt.s32.totalorder %s1610, 3
    %s1612 = scalar_select %p1611, %s1610, 3
    %s1613 = smul.addr %s1612, 8
    %s1614 = scalar_lea.vmem %s5, %s1613
  $region37: #{pointnet_sa_msg_forward.7} parent=0 // pred_fallthru
    _

</llo_original>
